<compile_context>
chip_gen: v6e
topology: v6e:2x2x1
jax: 0.10.0
libtpu: 0.0.40
codegen_flags: <defaults>
</compile_context>

<pallas_src>
import jax
import jax.numpy as jnp
from jax.experimental import pallas as pl
from jax.experimental.pallas import tpu as pltpu

EPS = 1e-5
DIM = 8                 # embedding dim
MLP_RATIO = 4
HID = DIM * MLP_RATIO   # 32
SIDE_Z = 8
SIDE_X = 16
N_Z = SIDE_Z * SIDE_Z   # 64 z tokens (8x8 grid)
N_X = SIDE_X * SIDE_X   # 256 x tokens (16x16 grid)
N_TOT = N_Z + N_X       # 320


# ---------------------------------------------------------------------------
# in-kernel math helpers (all operate on channels-first (C, N) data)
# ---------------------------------------------------------------------------
def _erf(x):
    # Abramowitz & Stegun 7.1.26 (max abs err ~1.5e-7) -> matches exact-erf
    # GELU to f32 precision without relying on a lax.erf lowering in Mosaic.
    a1, a2, a3, a4, a5 = 0.254829592, -0.284496736, 1.421413741, -1.453152027, 1.061405429
    p = 0.3275911
    ax = jnp.abs(x)
    t = 1.0 / (1.0 + p * ax)
    poly = ((((a5 * t + a4) * t + a3) * t + a2) * t + a1) * t
    y = 1.0 - poly * jnp.exp(-ax * ax)
    return jnp.where(x >= 0, y, -y)


def _gelu(x):
    # torch.nn.GELU default (exact erf form)
    return 0.5 * x * (1.0 + _erf(x * 0.7071067811865476))


def _ln_cf(x, g, b):
    # LayerNorm over channels; x: (C, N) channels-first, g/b: (C, 1).
    # Single pass: E[x] and E[x^2] are independent reductions.
    mu = jnp.mean(x, axis=0, keepdims=True)
    ms = jnp.mean(x * x, axis=0, keepdims=True)
    var = ms - mu * mu
    return (x - mu) * jax.lax.rsqrt(var + EPS) * g + b


def _mlp_cf(x, w1t, b1, w2t, b2):
    # Linear -> GELU -> Linear (dropout rates are 0 => identity), channels-first.
    # Weights are bf16; activations cast to bf16 at the dot, accumulate in f32.
    h = jnp.dot(w1t, x.astype(jnp.bfloat16), preferred_element_type=jnp.float32) + b1
    h = _gelu(h)
    return jnp.dot(w2t, h.astype(jnp.bfloat16), preferred_element_type=jnp.float32) + b2


def _spectral_cf(x, op):
    # Per-channel token-space spectral filter:  out[c, :] = x[c, :] @ op[c].
    # op holds the per-channel operators stacked along rows: (C*n, n), bf16.
    # Realized as ONE matmul with a block-masked LHS built from a lane-tiled
    # bf16 copy and a single iota-compare select:
    #   lhs[r, c*n + m] = x[r, m] * (r == c)
    C, n = x.shape
    shift = n.bit_length() - 1                                  # log2(n); n is 64 or 256
    xb = x.astype(jnp.bfloat16)
    tiled = jnp.concatenate([xb] * C, axis=1)                   # (C, C*n)
    row = jax.lax.broadcasted_iota(jnp.int32, (C, C * n), 0)
    blk = jax.lax.broadcasted_iota(jnp.int32, (C, C * n), 1) >> shift
    lhs = jnp.where(row == blk, tiled, 0.0)                     # bf16
    return jnp.dot(lhs, op, preferred_element_type=jnp.float32)


def _shift_lanes(x, off):
    # sh[:, m] = x[:, (m + off) mod n]; wrapped lanes are masked by the caller.
    if off == 0:
        return x
    n = x.shape[1]
    if n % 128 == 0:
        return pltpu.roll(x, (-off) % n, axis=1)                # single XLU vrot
    o = off % n                                                 # 64-lane z stream: wrapped-slice concat
    return jnp.concatenate([x[:, o:], x[:, :o]], axis=1)


def _conv3x3_cf(x, w72, bias, side):
    # 3x3 conv, stride 1, zero padding 1, on a channels-first flattened patch.
    # x: (C, side*side) f32 with flat token index t = h*side + w.
    # w72: (C_out, 9*C_in) bf16 with columns ordered (tap, C_in); bias: (C_out, 1).
    # The 9 shifted+masked taps are stacked along rows and contracted in ONE matmul.
    C, n = x.shape
    shift_h = side.bit_length() - 1                             # log2(side)
    lane = jax.lax.broadcasted_iota(jnp.int32, (C, n), 1)
    hh = lane >> shift_h
    ww = lane & (side - 1)
    pieces = []
    for k in range(9):
        oy, ox = k // 3 - 1, k % 3 - 1
        off = oy * side + ox
        sh = _shift_lanes(x, off)
        conds = []
        if oy == -1:
            conds.append(hh >= 1)
        if oy == 1:
            conds.append(hh <= side - 2)
        if ox == -1:
            conds.append(ww >= 1)
        if ox == 1:
            conds.append(ww <= side - 2)
        if conds:
            valid = conds[0]
            for cnd in conds[1:]:
                valid = jnp.logical_and(valid, cnd)
            sh = jnp.where(valid, sh, 0.0)
        pieces.append(sh)
    lhs = jnp.concatenate(pieces, axis=0).astype(jnp.bfloat16)  # (9*C, n)
    return jnp.dot(w72, lhs, preferred_element_type=jnp.float32) + bias


def _sg_stream(tok, side, op, w72, cbias, w1t, b1, w2t, b2,
               n1g, n1b, n2g, n2b, nog, nob):
    # One SGBlock stream (z: 8x8 or x: 16x16), channels-first (C, side*side).
    xa = _ln_cf(tok, n1g, n1b)                          # SGBlock norm1
    xf = _spectral_cf(xa, op)                           # rfft2 * W -> irfft2 (folded op)
    xf = _ln_cf(xf, n2g, n2b)                           # SGBlock norm2
    xm = _mlp_cf(xf, w1t, b1, w2t, b2)                  # SGBlock mlp / mlp2
    x1 = _conv3x3_cf(xa, w72, cbias, side) + xm         # conv3x3 + token2patch(mlp out)
    x1 = _ln_cf(x1, nog, nob)                           # norm3 / norm4
    return jnp.maximum(x1, 0.0)                         # ReLU


# ---------------------------------------------------------------------------
# the single fused Pallas kernel (one grid step = one batch element)
# ---------------------------------------------------------------------------
def block_kernel(x_ref, ln_ref, opx_ref, opz_ref,
                 c1w_ref, c1b_ref, c2w_ref, c2b_ref,
                 m1w1_ref, m1b1_ref, m1w2_ref, m1b2_ref,
                 m2w1_ref, m2b1_ref, m2w2_ref, m2b2_ref,
                 bw1_ref, bb1_ref, bw2_ref, bb2_ref, o_ref):
    x = x_ref[...]                                      # (C, 320) f32, internal order [x(256), z(64)]
    ln = lambda j: ln_ref[:, j:j + 1]                   # (C, 1) LayerNorm param column

    xn = _ln_cf(x, ln(0), ln(1))                        # Block norm1
    x_tok = xn[:, :N_X]                                 # lanes [0, 256)   -- vreg aligned
    z_tok = xn[:, N_X:]                                 # lanes [256, 320) -- aligned start

    x1 = _sg_stream(x_tok, SIDE_X, opx_ref[...], c1w_ref[...], c1b_ref[...],
                    m1w1_ref[...], m1b1_ref[...], m1w2_ref[...], m1b2_ref[...],
                    ln(4), ln(5), ln(6), ln(7), ln(8), ln(9))
    z1 = _sg_stream(z_tok, SIDE_Z, opz_ref[...], c2w_ref[...], c2b_ref[...],
                    m2w1_ref[...], m2b1_ref[...], m2w2_ref[...], m2b2_ref[...],
                    ln(4), ln(5), ln(6), ln(7), ln(10), ln(11))

    s = jnp.concatenate([x1, z1], axis=1)               # concat at lane 256 (aligned)
    y = _ln_cf(s, ln(2), ln(3))                         # Block norm2
    y = _mlp_cf(y, bw1_ref[...], bb1_ref[...], bw2_ref[...], bb2_ref[...])
    o_ref[...] = y + x                                  # + residual (original tokens)


# ---------------------------------------------------------------------------
# one-time parameter setup glue (NOT executed per forward call)
# ---------------------------------------------------------------------------
def build_token_spectral_op(weight_ri, side):
    """weight_ri: (side, side//2+1, C, 2) real params (== torch complex_weight).

    Folds rfft2 -> complex-weight multiply -> irfft2 ('ortho') into a dense
    per-channel token-space operator (C, N, N) with out_tok = in_tok @ op[c].
    Exact: the composite is R-linear per channel, so probing the token basis
    captures it exactly.
    """
    # TODO(synk): the FFT itself has no Pallas equivalent; it is folded into this
    #             dense operator (built once with jnp.fft) and applied in-kernel.
    C = weight_ri.shape[2]
    wc = weight_ri[..., 0] + 1j * weight_ri[..., 1]                 # (side, side//2+1, C)
    N = side * side
    basis = jnp.eye(N, dtype=jnp.float32).reshape(N, side, side)    # token n -> patch[h, w]
    grid = jnp.transpose(basis, (0, 2, 1))                          # permute(0,3,2,1): [w, h]
    gf = jnp.fft.rfft2(grid, axes=(1, 2), norm='ortho')
    gf = gf[:, :, :, None] * wc[None, :, :, :]
    y = jnp.fft.irfft2(gf, s=(side, side), axes=(1, 2), norm='ortho')
    y = jnp.transpose(y, (0, 2, 1, 3)).reshape(N, N, C)             # [h, w] -> token m
    return jnp.transpose(y, (2, 0, 1)).astype(jnp.float32)          # (C, N, N)


def prepare_kernel_params(p):
    """One-time glue: fold FFT filters into dense ops, cast matmul operands to
    bf16 and transpose weights to the channels-first layout used in the kernel."""
    C, H = DIM, HID
    bf = jnp.bfloat16
    f32 = jnp.float32

    def conv_w72(w):
        # conv weight stored as (ky, kx, C_in, C_out) -> (C_out, 9*C_in),
        # columns ordered (tap, C_in) to match the stacked shifted-input LHS.
        taps = jnp.transpose(w, (0, 1, 3, 2)).reshape(9, C, C)       # (k, C_out, C_in)
        return jnp.transpose(taps, (1, 0, 2)).reshape(C, 9 * C).astype(bf)

    ln_pack = jnp.stack([p['b_n1_g'], p['b_n1_b'], p['b_n2_g'], p['b_n2_b'],
                         p['sg_n1_g'], p['sg_n1_b'], p['sg_n2_g'], p['sg_n2_b'],
                         p['sg_n3_g'], p['sg_n3_b'], p['sg_n4_g'], p['sg_n4_b']],
                        axis=1).astype(f32)                          # (C, 12)
    return {
        'ln_pack': ln_pack,
        'op_x': build_token_spectral_op(p['cw_x'], SIDE_X).reshape(C * N_X, N_X).astype(bf),
        'op_z': build_token_spectral_op(p['cw_z'], SIDE_Z).reshape(C * N_Z, N_Z).astype(bf),
        'conv1_w': conv_w72(p['conv1_w']), 'conv1_b': p['conv1_b'].reshape(C, 1).astype(f32),
        'conv2_w': conv_w72(p['conv2_w']), 'conv2_b': p['conv2_b'].reshape(C, 1).astype(f32),
        'sg_m1_w1t': p['sg_m1_w1'].T.astype(bf), 'sg_m1_b1': p['sg_m1_b1'].reshape(H, 1).astype(f32),
        'sg_m1_w2t': p['sg_m1_w2'].T.astype(bf), 'sg_m1_b2': p['sg_m1_b2'].reshape(C, 1).astype(f32),
        'sg_m2_w1t': p['sg_m2_w1'].T.astype(bf), 'sg_m2_b1': p['sg_m2_b1'].reshape(H, 1).astype(f32),
        'sg_m2_w2t': p['sg_m2_w2'].T.astype(bf), 'sg_m2_b2': p['sg_m2_b2'].reshape(C, 1).astype(f32),
        'b_mlp_w1t': p['b_mlp_w1'].T.astype(bf), 'b_mlp_b1': p['b_mlp_b1'].reshape(H, 1).astype(f32),
        'b_mlp_w2t': p['b_mlp_w2'].T.astype(bf), 'b_mlp_b2': p['b_mlp_b2'].reshape(C, 1).astype(f32),
    }


# ---------------------------------------------------------------------------
# forward wrapper: one fused pallas_call over a batch-parallel grid
# ---------------------------------------------------------------------------
_PARAM_ORDER = ('ln_pack', 'op_x', 'op_z',
                'conv1_w', 'conv1_b', 'conv2_w', 'conv2_b',
                'sg_m1_w1t', 'sg_m1_b1', 'sg_m1_w2t', 'sg_m1_b2',
                'sg_m2_w1t', 'sg_m2_b1', 'sg_m2_w2t', 'sg_m2_b2',
                'b_mlp_w1t', 'b_mlp_b1', 'b_mlp_w2t', 'b_mlp_b2')


def _const_spec(a):
    nd = a.ndim
    return pl.BlockSpec(a.shape, lambda b, _nd=nd: (0,) * _nd)


def block_forward(kp, x, lens_x=None):
    # x: (B, 320, C) tokens in the module's [z(64), x(256)] order.  lens_x is
    # accepted for API parity (unused, as in the reference SGBlock.forward).
    B, Ntot, C = x.shape
    assert Ntot == N_TOT and C == DIM
    params = [kp[name] for name in _PARAM_ORDER]
    # Layout plumbing (one fused copy each way): channels -> sublanes, tokens
    # -> lanes, tokens reordered to the lane-aligned internal order [x, z].
    # (Keeping the surrounding model channels-first would remove these copies.)
    x_int = jnp.concatenate([x[:, N_Z:], x[:, :N_Z]], axis=1)       # [x(256), z(64)]
    xt = jnp.transpose(x_int, (0, 2, 1))                            # (B, C, 320)
    out = pl.pallas_call(
        block_kernel,
        out_shape=jax.ShapeDtypeStruct((B, C, Ntot), jnp.float32),
        grid=(B,),
        in_specs=[pl.BlockSpec((None, C, Ntot), lambda b: (b, 0, 0))]
                 + [_const_spec(a) for a in params],
        out_specs=pl.BlockSpec((None, C, Ntot), lambda b: (b, 0, 0)),
        compiler_params=pltpu.CompilerParams(dimension_semantics=("parallel",)),
    )(xt, *params)
    out = jnp.transpose(out, (0, 2, 1))                             # (B, 320, C) internal order
    return jnp.concatenate([out[:, N_X:], out[:, :N_X]], axis=1)    # back to [z, x] order


# ---------------------------------------------------------------------------
# deterministic parameter init (synthetic; shapes follow the module __init__)
# ---------------------------------------------------------------------------
def init_params(key, dim=DIM, hid=HID):
    ks = jax.random.split(key, 18)

    def nrm(k, shape, scale=0.02):
        return jax.random.normal(k, shape, jnp.float32) * scale

    ones = lambda s: jnp.ones(s, jnp.float32)
    zeros = lambda s: jnp.zeros(s, jnp.float32)
    C, H = dim, hid
    return {
        # ----- Block level (norm1 / norm2 / mlp used by forward) -----
        'b_n1_g': ones((C,)), 'b_n1_b': zeros((C,)),
        'b_n2_g': ones((C,)), 'b_n2_b': zeros((C,)),
        'b_mlp_w1': nrm(ks[0], (C, H)), 'b_mlp_b1': nrm(ks[1], (H,)),
        'b_mlp_w2': nrm(ks[2], (H, C)), 'b_mlp_b2': nrm(ks[3], (C,)),
        # ----- SGBlock (stb_x) -----
        'sg_n1_g': ones((C,)), 'sg_n1_b': zeros((C,)),
        'sg_n2_g': ones((C,)), 'sg_n2_b': zeros((C,)),
        'sg_n3_g': ones((C,)), 'sg_n3_b': zeros((C,)),
        'sg_n4_g': ones((C,)), 'sg_n4_b': zeros((C,)),
        # conv weights stored as (ky, kx, C_in, C_out)
        'conv1_w': nrm(ks[4], (3, 3, C, C)), 'conv1_b': nrm(ks[5], (C,)),
        'conv2_w': nrm(ks[6], (3, 3, C, C)), 'conv2_b': nrm(ks[7], (C,)),
        'sg_m1_w1': nrm(ks[8], (C, H)), 'sg_m1_b1': nrm(ks[9], (H,)),
        'sg_m1_w2': nrm(ks[10], (H, C)), 'sg_m1_b2': nrm(ks[11], (C,)),
        'sg_m2_w1': nrm(ks[12], (C, H)), 'sg_m2_b1': nrm(ks[13], (H,)),
        'sg_m2_w2': nrm(ks[14], (H, C)), 'sg_m2_b2': nrm(ks[15], (C,)),
        # complex spectral weights (torch: randn(...) * 0.02, real/imag pairs)
        'cw_x': nrm(ks[16], (SIDE_X, SIDE_X // 2 + 1, C, 2)),
        'cw_z': nrm(ks[17], (SIDE_Z, SIDE_Z // 2 + 1, C, 2)),
    }


if __name__ == "__main__":
    key = jax.random.PRNGKey(0)
    pkey, xkey = jax.random.split(key)
    params = init_params(pkey)
    # One-time setup: FFT folding + bf16 cast + weight-layout prep hoisted OUT
    # of the jitted forward.
    kparams = prepare_kernel_params(params)
    # input tokens: (B=2, N=64+256=320, C=8) -- N fixed by the 8x8 / 16x16 spectral weights
    x = jax.random.normal(xkey, (2, N_TOT, DIM), jnp.float32)

    fwd = jax.jit(block_forward)
    out = fwd(kparams, x)
    jax.block_until_ready(out)
    assert out.shape == (2, N_TOT, DIM)
    assert bool(jnp.all(jnp.isfinite(out)))
    print("KERNEL_OK")
</pallas_src>

<mosaic_0001>
module attributes {stable_mosaic.version = 11 : i64} {
  func.func @block_kernel(%arg0: i32, %arg1: memref<1x8x320xf32, #tpu.memory_space<vmem>>, %arg2: memref<8x12xf32, #tpu.memory_space<vmem>>, %arg3: memref<2048x256xbf16, #tpu.memory_space<vmem>>, %arg4: memref<512x64xbf16, #tpu.memory_space<vmem>>, %arg5: memref<8x72xbf16, #tpu.memory_space<vmem>>, %arg6: memref<8x1xf32, #tpu.memory_space<vmem>>, %arg7: memref<8x72xbf16, #tpu.memory_space<vmem>>, %arg8: memref<8x1xf32, #tpu.memory_space<vmem>>, %arg9: memref<32x8xbf16, #tpu.memory_space<vmem>>, %arg10: memref<32x1xf32, #tpu.memory_space<vmem>>, %arg11: memref<8x32xbf16, #tpu.memory_space<vmem>>, %arg12: memref<8x1xf32, #tpu.memory_space<vmem>>, %arg13: memref<32x8xbf16, #tpu.memory_space<vmem>>, %arg14: memref<32x1xf32, #tpu.memory_space<vmem>>, %arg15: memref<8x32xbf16, #tpu.memory_space<vmem>>, %arg16: memref<8x1xf32, #tpu.memory_space<vmem>>, %arg17: memref<32x8xbf16, #tpu.memory_space<vmem>>, %arg18: memref<32x1xf32, #tpu.memory_space<vmem>>, %arg19: memref<8x32xbf16, #tpu.memory_space<vmem>>, %arg20: memref<8x1xf32, #tpu.memory_space<vmem>>, %arg21: memref<1x8x320xf32, #tpu.memory_space<vmem>>) attributes {dimension_semantics = [#tpu.dimension_semantics<parallel>], iteration_bounds = array<i64: 2>, scalar_prefetch = 0 : i64, scratch_operands = 0 : i64, tpu.core_type = #tpu.core_type<tc>, window_params = [{transform_indices = @transform_0, window_bounds = array<i64: 1, 8, 320>}, {pipeline_mode = #tpu.pipeline_mode<synchronous>, transform_indices = @transform_1, window_bounds = array<i64: 8, 12>}, {pipeline_mode = #tpu.pipeline_mode<synchronous>, transform_indices = @transform_2, window_bounds = array<i64: 2048, 256>}, {pipeline_mode = #tpu.pipeline_mode<synchronous>, transform_indices = @transform_3, window_bounds = array<i64: 512, 64>}, {pipeline_mode = #tpu.pipeline_mode<synchronous>, transform_indices = @transform_4, window_bounds = array<i64: 8, 72>}, {pipeline_mode = #tpu.pipeline_mode<synchronous>, transform_indices = @transform_5, window_bounds = array<i64: 8, 1>}, {pipeline_mode = #tpu.pipeline_mode<synchronous>, transform_indices = @transform_6, window_bounds = array<i64: 8, 72>}, {pipeline_mode = #tpu.pipeline_mode<synchronous>, transform_indices = @transform_7, window_bounds = array<i64: 8, 1>}, {pipeline_mode = #tpu.pipeline_mode<synchronous>, transform_indices = @transform_8, window_bounds = array<i64: 32, 8>}, {pipeline_mode = #tpu.pipeline_mode<synchronous>, transform_indices = @transform_9, window_bounds = array<i64: 32, 1>}, {pipeline_mode = #tpu.pipeline_mode<synchronous>, transform_indices = @transform_10, window_bounds = array<i64: 8, 32>}, {pipeline_mode = #tpu.pipeline_mode<synchronous>, transform_indices = @transform_11, window_bounds = array<i64: 8, 1>}, {pipeline_mode = #tpu.pipeline_mode<synchronous>, transform_indices = @transform_12, window_bounds = array<i64: 32, 8>}, {pipeline_mode = #tpu.pipeline_mode<synchronous>, transform_indices = @transform_13, window_bounds = array<i64: 32, 1>}, {pipeline_mode = #tpu.pipeline_mode<synchronous>, transform_indices = @transform_14, window_bounds = array<i64: 8, 32>}, {pipeline_mode = #tpu.pipeline_mode<synchronous>, transform_indices = @transform_15, window_bounds = array<i64: 8, 1>}, {pipeline_mode = #tpu.pipeline_mode<synchronous>, transform_indices = @transform_16, window_bounds = array<i64: 32, 8>}, {pipeline_mode = #tpu.pipeline_mode<synchronous>, transform_indices = @transform_17, window_bounds = array<i64: 32, 1>}, {pipeline_mode = #tpu.pipeline_mode<synchronous>, transform_indices = @transform_18, window_bounds = array<i64: 8, 32>}, {pipeline_mode = #tpu.pipeline_mode<synchronous>, transform_indices = @transform_19, window_bounds = array<i64: 8, 1>}, {transform_indices = @transform_20, window_bounds = array<i64: 1, 8, 320>}]} {
    %c0 = arith.constant 0 : index
    %c0_0 = arith.constant 0 : index
    %c0_1 = arith.constant 0 : index
    %0 = vector.load %arg1[%c0, %c0_0, %c0_1] : memref<1x8x320xf32, #tpu.memory_space<vmem>>, vector<1x8x320xf32>
    %1 = vector.shape_cast %0 : vector<1x8x320xf32> to vector<8x320xf32>
    %c0_2 = arith.constant 0 : index
    %c0_3 = arith.constant 0 : index
    %2 = vector.load %arg2[%c0_2, %c0_3] : memref<8x12xf32, #tpu.memory_space<vmem>>, vector<8x1xf32>
    %c0_4 = arith.constant 0 : index
    %c1 = arith.constant 1 : index
    %3 = vector.load %arg2[%c0_4, %c1] : memref<8x12xf32, #tpu.memory_space<vmem>>, vector<8x1xf32>
    %cst = arith.constant dense<0.000000e+00> : vector<320xf32>
    %4 = vector.multi_reduction <add>, %1, %cst [0] : vector<8x320xf32> to vector<320xf32>
    %5 = vector.shape_cast %4 : vector<320xf32> to vector<1x320xf32>
    %cst_5 = arith.constant 8.000000e+00 : f32
    %6 = vector.broadcast %cst_5 : f32 to vector<1x320xf32>
    %7 = arith.divf %5, %6 : vector<1x320xf32>
    %8 = arith.mulf %1, %1 : vector<8x320xf32>
    %cst_6 = arith.constant dense<0.000000e+00> : vector<320xf32>
    %9 = vector.multi_reduction <add>, %8, %cst_6 [0] : vector<8x320xf32> to vector<320xf32>
    %10 = vector.shape_cast %9 : vector<320xf32> to vector<1x320xf32>
    %cst_7 = arith.constant 8.000000e+00 : f32
    %11 = vector.broadcast %cst_7 : f32 to vector<1x320xf32>
    %12 = arith.divf %10, %11 : vector<1x320xf32>
    %13 = arith.mulf %7, %7 : vector<1x320xf32>
    %14 = arith.subf %12, %13 : vector<1x320xf32>
    %15 = vector.broadcast %7 : vector<1x320xf32> to vector<8x320xf32>
    %16 = arith.subf %1, %15 : vector<8x320xf32>
    %cst_8 = arith.constant 9.99999974E-6 : f32
    %17 = vector.broadcast %cst_8 : f32 to vector<1x320xf32>
    %18 = arith.addf %14, %17 : vector<1x320xf32>
    %19 = math.rsqrt %18 : vector<1x320xf32>
    %20 = vector.broadcast %19 : vector<1x320xf32> to vector<8x320xf32>
    %21 = arith.mulf %16, %20 : vector<8x320xf32>
    %22 = vector.broadcast %2 : vector<8x1xf32> to vector<8x320xf32>
    %23 = arith.mulf %21, %22 : vector<8x320xf32>
    %24 = vector.broadcast %3 : vector<8x1xf32> to vector<8x320xf32>
    %25 = arith.addf %23, %24 : vector<8x320xf32>
    %26 = vector.extract_strided_slice %25 {offsets = [0, 0], sizes = [8, 256], strides = [1, 1]} : vector<8x320xf32> to vector<8x256xf32>
    %27 = vector.extract_strided_slice %25 {offsets = [0, 256], sizes = [8, 64], strides = [1, 1]} : vector<8x320xf32> to vector<8x64xf32>
    %c0_9 = arith.constant 0 : index
    %c0_10 = arith.constant 0 : index
    %28 = vector.load %arg3[%c0_9, %c0_10] : memref<2048x256xbf16, #tpu.memory_space<vmem>>, vector<2048x256xbf16>
    %c0_11 = arith.constant 0 : index
    %c0_12 = arith.constant 0 : index
    %29 = vector.load %arg5[%c0_11, %c0_12] : memref<8x72xbf16, #tpu.memory_space<vmem>>, vector<8x72xbf16>
    %c0_13 = arith.constant 0 : index
    %c0_14 = arith.constant 0 : index
    %30 = vector.load %arg6[%c0_13, %c0_14] : memref<8x1xf32, #tpu.memory_space<vmem>>, vector<8x1xf32>
    %c0_15 = arith.constant 0 : index
    %c0_16 = arith.constant 0 : index
    %31 = vector.load %arg9[%c0_15, %c0_16] : memref<32x8xbf16, #tpu.memory_space<vmem>>, vector<32x8xbf16>
    %c0_17 = arith.constant 0 : index
    %c0_18 = arith.constant 0 : index
    %32 = vector.load %arg10[%c0_17, %c0_18] : memref<32x1xf32, #tpu.memory_space<vmem>>, vector<32x1xf32>
    %c0_19 = arith.constant 0 : index
    %c0_20 = arith.constant 0 : index
    %33 = vector.load %arg11[%c0_19, %c0_20] : memref<8x32xbf16, #tpu.memory_space<vmem>>, vector<8x32xbf16>
    %c0_21 = arith.constant 0 : index
    %c0_22 = arith.constant 0 : index
    %34 = vector.load %arg12[%c0_21, %c0_22] : memref<8x1xf32, #tpu.memory_space<vmem>>, vector<8x1xf32>
    %c0_23 = arith.constant 0 : index
    %c4 = arith.constant 4 : index
    %35 = vector.load %arg2[%c0_23, %c4] : memref<8x12xf32, #tpu.memory_space<vmem>>, vector<8x1xf32>
    %c0_24 = arith.constant 0 : index
    %c5 = arith.constant 5 : index
    %36 = vector.load %arg2[%c0_24, %c5] : memref<8x12xf32, #tpu.memory_space<vmem>>, vector<8x1xf32>
    %c0_25 = arith.constant 0 : index
    %c6 = arith.constant 6 : index
    %37 = vector.load %arg2[%c0_25, %c6] : memref<8x12xf32, #tpu.memory_space<vmem>>, vector<8x1xf32>
    %c0_26 = arith.constant 0 : index
    %c7 = arith.constant 7 : index
    %38 = vector.load %arg2[%c0_26, %c7] : memref<8x12xf32, #tpu.memory_space<vmem>>, vector<8x1xf32>
    %c0_27 = arith.constant 0 : index
    %c8 = arith.constant 8 : index
    %39 = vector.load %arg2[%c0_27, %c8] : memref<8x12xf32, #tpu.memory_space<vmem>>, vector<8x1xf32>
    %c0_28 = arith.constant 0 : index
    %c9 = arith.constant 9 : index
    %40 = vector.load %arg2[%c0_28, %c9] : memref<8x12xf32, #tpu.memory_space<vmem>>, vector<8x1xf32>
    %cst_29 = arith.constant dense<0.000000e+00> : vector<256xf32>
    %41 = vector.multi_reduction <add>, %26, %cst_29 [0] : vector<8x256xf32> to vector<256xf32>
    %42 = vector.shape_cast %41 : vector<256xf32> to vector<1x256xf32>
    %cst_30 = arith.constant 8.000000e+00 : f32
    %43 = vector.broadcast %cst_30 : f32 to vector<1x256xf32>
    %44 = arith.divf %42, %43 : vector<1x256xf32>
    %45 = arith.mulf %26, %26 : vector<8x256xf32>
    %cst_31 = arith.constant dense<0.000000e+00> : vector<256xf32>
    %46 = vector.multi_reduction <add>, %45, %cst_31 [0] : vector<8x256xf32> to vector<256xf32>
    %47 = vector.shape_cast %46 : vector<256xf32> to vector<1x256xf32>
    %cst_32 = arith.constant 8.000000e+00 : f32
    %48 = vector.broadcast %cst_32 : f32 to vector<1x256xf32>
    %49 = arith.divf %47, %48 : vector<1x256xf32>
    %50 = arith.mulf %44, %44 : vector<1x256xf32>
    %51 = arith.subf %49, %50 : vector<1x256xf32>
    %52 = vector.broadcast %44 : vector<1x256xf32> to vector<8x256xf32>
    %53 = arith.subf %26, %52 : vector<8x256xf32>
    %cst_33 = arith.constant 9.99999974E-6 : f32
    %54 = vector.broadcast %cst_33 : f32 to vector<1x256xf32>
    %55 = arith.addf %51, %54 : vector<1x256xf32>
    %56 = math.rsqrt %55 : vector<1x256xf32>
    %57 = vector.broadcast %56 : vector<1x256xf32> to vector<8x256xf32>
    %58 = arith.mulf %53, %57 : vector<8x256xf32>
    %59 = vector.broadcast %35 : vector<8x1xf32> to vector<8x256xf32>
    %60 = arith.mulf %58, %59 : vector<8x256xf32>
    %61 = vector.broadcast %36 : vector<8x1xf32> to vector<8x256xf32>
    %62 = arith.addf %60, %61 : vector<8x256xf32>
    %63 = arith.truncf %62 : vector<8x256xf32> to vector<8x256xbf16>
    %64 = tpu.concatenate %63, %63, %63, %63, %63, %63, %63, %63 in 1 : vector<8x256xbf16>, vector<8x256xbf16>, vector<8x256xbf16>, vector<8x256xbf16>, vector<8x256xbf16>, vector<8x256xbf16>, vector<8x256xbf16>, vector<8x256xbf16> -> vector<8x2048xbf16>
    %65 = tpu.iota {dimensions = array<i32: 0>} : vector<8x2048xi32>
    %66 = tpu.iota {dimensions = array<i32: 1>} : vector<8x2048xi32>
    %c8_i32 = arith.constant 8 : i32
    %67 = vector.broadcast %c8_i32 : i32 to vector<8x2048xi32>
    %68 = arith.shrsi %66, %67 : vector<8x2048xi32>
    %69 = arith.cmpi eq, %65, %68 : vector<8x2048xi32>
    %cst_34 = arith.constant 0.000000e+00 : f32
    %70 = arith.truncf %cst_34 : f32 to bf16
    %71 = vector.broadcast %70 : bf16 to vector<8x2048xbf16>
    %72 = arith.select %69, %64, %71 : vector<8x2048xi1>, vector<8x2048xbf16>
    %cst_35 = arith.constant dense<0.000000e+00> : vector<8x256xf32>
    %73 = tpu.matmul %72, %28, %cst_35 {dimension_numbers = #tpu.dot_dimension_numbers<[1], [0], [0], [1], [0, 0, 1, 1], [], []>} : vector<8x2048xbf16>, vector<2048x256xbf16>, vector<8x256xf32> -> vector<8x256xf32>
    %cst_36 = arith.constant dense<0.000000e+00> : vector<256xf32>
    %74 = vector.multi_reduction <add>, %73, %cst_36 [0] : vector<8x256xf32> to vector<256xf32>
    %75 = vector.shape_cast %74 : vector<256xf32> to vector<1x256xf32>
    %cst_37 = arith.constant 8.000000e+00 : f32
    %76 = vector.broadcast %cst_37 : f32 to vector<1x256xf32>
    %77 = arith.divf %75, %76 : vector<1x256xf32>
    %78 = arith.mulf %73, %73 : vector<8x256xf32>
    %cst_38 = arith.constant dense<0.000000e+00> : vector<256xf32>
    %79 = vector.multi_reduction <add>, %78, %cst_38 [0] : vector<8x256xf32> to vector<256xf32>
    %80 = vector.shape_cast %79 : vector<256xf32> to vector<1x256xf32>
    %cst_39 = arith.constant 8.000000e+00 : f32
    %81 = vector.broadcast %cst_39 : f32 to vector<1x256xf32>
    %82 = arith.divf %80, %81 : vector<1x256xf32>
    %83 = arith.mulf %77, %77 : vector<1x256xf32>
    %84 = arith.subf %82, %83 : vector<1x256xf32>
    %85 = vector.broadcast %77 : vector<1x256xf32> to vector<8x256xf32>
    %86 = arith.subf %73, %85 : vector<8x256xf32>
    %cst_40 = arith.constant 9.99999974E-6 : f32
    %87 = vector.broadcast %cst_40 : f32 to vector<1x256xf32>
    %88 = arith.addf %84, %87 : vector<1x256xf32>
    %89 = math.rsqrt %88 : vector<1x256xf32>
    %90 = vector.broadcast %89 : vector<1x256xf32> to vector<8x256xf32>
    %91 = arith.mulf %86, %90 : vector<8x256xf32>
    %92 = vector.broadcast %37 : vector<8x1xf32> to vector<8x256xf32>
    %93 = arith.mulf %91, %92 : vector<8x256xf32>
    %94 = vector.broadcast %38 : vector<8x1xf32> to vector<8x256xf32>
    %95 = arith.addf %93, %94 : vector<8x256xf32>
    %96 = arith.truncf %95 : vector<8x256xf32> to vector<8x256xbf16>
    %cst_41 = arith.constant dense<0.000000e+00> : vector<32x256xf32>
    %97 = tpu.matmul %31, %96, %cst_41 {dimension_numbers = #tpu.dot_dimension_numbers<[1], [0], [0], [1], [0, 0, 1, 1], [], []>} : vector<32x8xbf16>, vector<8x256xbf16>, vector<32x256xf32> -> vector<32x256xf32>
    %98 = vector.broadcast %32 : vector<32x1xf32> to vector<32x256xf32>
    %99 = arith.addf %97, %98 : vector<32x256xf32>
    %cst_42 = arith.constant 5.000000e-01 : f32
    %100 = vector.broadcast %cst_42 : f32 to vector<32x256xf32>
    %101 = arith.mulf %100, %99 : vector<32x256xf32>
    %cst_43 = arith.constant 0.707106769 : f32
    %102 = vector.broadcast %cst_43 : f32 to vector<32x256xf32>
    %103 = arith.mulf %99, %102 : vector<32x256xf32>
    %104 = math.absf %103 : vector<32x256xf32>
    %cst_44 = arith.constant 0.327591091 : f32
    %105 = vector.broadcast %cst_44 : f32 to vector<32x256xf32>
    %106 = arith.mulf %105, %104 : vector<32x256xf32>
    %cst_45 = arith.constant 1.000000e+00 : f32
    %107 = vector.broadcast %cst_45 : f32 to vector<32x256xf32>
    %108 = arith.addf %107, %106 : vector<32x256xf32>
    %cst_46 = arith.constant 1.000000e+00 : f32
    %109 = vector.broadcast %cst_46 : f32 to vector<32x256xf32>
    %110 = arith.divf %109, %108 : vector<32x256xf32>
    %cst_47 = arith.constant 1.06140542 : f32
    %111 = vector.broadcast %cst_47 : f32 to vector<32x256xf32>
    %112 = arith.mulf %111, %110 : vector<32x256xf32>
    %cst_48 = arith.constant -1.45315206 : f32
    %113 = vector.broadcast %cst_48 : f32 to vector<32x256xf32>
    %114 = arith.addf %112, %113 : vector<32x256xf32>
    %115 = arith.mulf %114, %110 : vector<32x256xf32>
    %cst_49 = arith.constant 1.42141378 : f32
    %116 = vector.broadcast %cst_49 : f32 to vector<32x256xf32>
    %117 = arith.addf %115, %116 : vector<32x256xf32>
    %118 = arith.mulf %117, %110 : vector<32x256xf32>
    %cst_50 = arith.constant -0.284496725 : f32
    %119 = vector.broadcast %cst_50 : f32 to vector<32x256xf32>
    %120 = arith.addf %118, %119 : vector<32x256xf32>
    %121 = arith.mulf %120, %110 : vector<32x256xf32>
    %cst_51 = arith.constant 0.254829586 : f32
    %122 = vector.broadcast %cst_51 : f32 to vector<32x256xf32>
    %123 = arith.addf %121, %122 : vector<32x256xf32>
    %124 = arith.mulf %123, %110 : vector<32x256xf32>
    %cst_52 = arith.constant 0.000000e+00 : f32
    %125 = vector.broadcast %cst_52 : f32 to vector<32x256xf32>
    %126 = arith.subf %125, %104 : vector<32x256xf32>
    %127 = arith.mulf %126, %104 : vector<32x256xf32>
    %128 = math.exp %127 : vector<32x256xf32>
    %129 = arith.mulf %124, %128 : vector<32x256xf32>
    %cst_53 = arith.constant 1.000000e+00 : f32
    %130 = vector.broadcast %cst_53 : f32 to vector<32x256xf32>
    %131 = arith.subf %130, %129 : vector<32x256xf32>
    %cst_54 = arith.constant 0.000000e+00 : f32
    %132 = vector.broadcast %cst_54 : f32 to vector<32x256xf32>
    %133 = arith.cmpf oge, %103, %132 : vector<32x256xf32>
    %cst_55 = arith.constant 0.000000e+00 : f32
    %134 = vector.broadcast %cst_55 : f32 to vector<32x256xf32>
    %135 = arith.subf %134, %131 : vector<32x256xf32>
    %136 = arith.select %133, %131, %135 : vector<32x256xi1>, vector<32x256xf32>
    %cst_56 = arith.constant 1.000000e+00 : f32
    %137 = vector.broadcast %cst_56 : f32 to vector<32x256xf32>
    %138 = arith.addf %137, %136 : vector<32x256xf32>
    %139 = arith.mulf %101, %138 : vector<32x256xf32>
    %140 = arith.truncf %139 : vector<32x256xf32> to vector<32x256xbf16>
    %cst_57 = arith.constant dense<0.000000e+00> : vector<8x256xf32>
    %141 = tpu.matmul %33, %140, %cst_57 {dimension_numbers = #tpu.dot_dimension_numbers<[1], [0], [0], [1], [0, 0, 1, 1], [], []>} : vector<8x32xbf16>, vector<32x256xbf16>, vector<8x256xf32> -> vector<8x256xf32>
    %142 = vector.broadcast %34 : vector<8x1xf32> to vector<8x256xf32>
    %143 = arith.addf %141, %142 : vector<8x256xf32>
    %144 = tpu.iota {dimensions = array<i32: 1>} : vector<8x256xi32>
    %c4_i32 = arith.constant 4 : i32
    %145 = vector.broadcast %c4_i32 : i32 to vector<8x256xi32>
    %146 = arith.shrsi %144, %145 : vector<8x256xi32>
    %c15_i32 = arith.constant 15 : i32
    %147 = vector.broadcast %c15_i32 : i32 to vector<8x256xi32>
    %148 = arith.andi %144, %147 : vector<8x256xi32>
    %c17_i32 = arith.constant 17 : i32
    %149 = tpu.dynamic_rotate %62 by %c17_i32 dim 1 : vector<8x256xf32>, i32 -> vector<8x256xf32>
    %c1_i32 = arith.constant 1 : i32
    %150 = vector.broadcast %c1_i32 : i32 to vector<8x256xi32>
    %151 = arith.cmpi sge, %146, %150 : vector<8x256xi32>
    %c1_i32_58 = arith.constant 1 : i32
    %152 = vector.broadcast %c1_i32_58 : i32 to vector<8x256xi32>
    %153 = arith.cmpi sge, %148, %152 : vector<8x256xi32>
    %154 = arith.andi %151, %153 : vector<8x256xi1>
    %cst_59 = arith.constant 0.000000e+00 : f32
    %155 = vector.broadcast %cst_59 : f32 to vector<8x256xf32>
    %156 = arith.select %154, %149, %155 : vector<8x256xi1>, vector<8x256xf32>
    %c16_i32 = arith.constant 16 : i32
    %157 = tpu.dynamic_rotate %62 by %c16_i32 dim 1 : vector<8x256xf32>, i32 -> vector<8x256xf32>
    %c1_i32_60 = arith.constant 1 : i32
    %158 = vector.broadcast %c1_i32_60 : i32 to vector<8x256xi32>
    %159 = arith.cmpi sge, %146, %158 : vector<8x256xi32>
    %cst_61 = arith.constant 0.000000e+00 : f32
    %160 = vector.broadcast %cst_61 : f32 to vector<8x256xf32>
    %161 = arith.select %159, %157, %160 : vector<8x256xi1>, vector<8x256xf32>
    %c15_i32_62 = arith.constant 15 : i32
    %162 = tpu.dynamic_rotate %62 by %c15_i32_62 dim 1 : vector<8x256xf32>, i32 -> vector<8x256xf32>
    %c1_i32_63 = arith.constant 1 : i32
    %163 = vector.broadcast %c1_i32_63 : i32 to vector<8x256xi32>
    %164 = arith.cmpi sge, %146, %163 : vector<8x256xi32>
    %c14_i32 = arith.constant 14 : i32
    %165 = vector.broadcast %c14_i32 : i32 to vector<8x256xi32>
    %166 = arith.cmpi sle, %148, %165 : vector<8x256xi32>
    %167 = arith.andi %164, %166 : vector<8x256xi1>
    %cst_64 = arith.constant 0.000000e+00 : f32
    %168 = vector.broadcast %cst_64 : f32 to vector<8x256xf32>
    %169 = arith.select %167, %162, %168 : vector<8x256xi1>, vector<8x256xf32>
    %c1_i32_65 = arith.constant 1 : i32
    %170 = tpu.dynamic_rotate %62 by %c1_i32_65 dim 1 : vector<8x256xf32>, i32 -> vector<8x256xf32>
    %c1_i32_66 = arith.constant 1 : i32
    %171 = vector.broadcast %c1_i32_66 : i32 to vector<8x256xi32>
    %172 = arith.cmpi sge, %148, %171 : vector<8x256xi32>
    %cst_67 = arith.constant 0.000000e+00 : f32
    %173 = vector.broadcast %cst_67 : f32 to vector<8x256xf32>
    %174 = arith.select %172, %170, %173 : vector<8x256xi1>, vector<8x256xf32>
    %c255_i32 = arith.constant 255 : i32
    %175 = tpu.dynamic_rotate %62 by %c255_i32 dim 1 : vector<8x256xf32>, i32 -> vector<8x256xf32>
    %c14_i32_68 = arith.constant 14 : i32
    %176 = vector.broadcast %c14_i32_68 : i32 to vector<8x256xi32>
    %177 = arith.cmpi sle, %148, %176 : vector<8x256xi32>
    %cst_69 = arith.constant 0.000000e+00 : f32
    %178 = vector.broadcast %cst_69 : f32 to vector<8x256xf32>
    %179 = arith.select %177, %175, %178 : vector<8x256xi1>, vector<8x256xf32>
    %c241_i32 = arith.constant 241 : i32
    %180 = tpu.dynamic_rotate %62 by %c241_i32 dim 1 : vector<8x256xf32>, i32 -> vector<8x256xf32>
    %c14_i32_70 = arith.constant 14 : i32
    %181 = vector.broadcast %c14_i32_70 : i32 to vector<8x256xi32>
    %182 = arith.cmpi sle, %146, %181 : vector<8x256xi32>
    %c1_i32_71 = arith.constant 1 : i32
    %183 = vector.broadcast %c1_i32_71 : i32 to vector<8x256xi32>
    %184 = arith.cmpi sge, %148, %183 : vector<8x256xi32>
    %185 = arith.andi %182, %184 : vector<8x256xi1>
    %cst_72 = arith.constant 0.000000e+00 : f32
    %186 = vector.broadcast %cst_72 : f32 to vector<8x256xf32>
    %187 = arith.select %185, %180, %186 : vector<8x256xi1>, vector<8x256xf32>
    %c240_i32 = arith.constant 240 : i32
    %188 = tpu.dynamic_rotate %62 by %c240_i32 dim 1 : vector<8x256xf32>, i32 -> vector<8x256xf32>
    %c14_i32_73 = arith.constant 14 : i32
    %189 = vector.broadcast %c14_i32_73 : i32 to vector<8x256xi32>
    %190 = arith.cmpi sle, %146, %189 : vector<8x256xi32>
    %cst_74 = arith.constant 0.000000e+00 : f32
    %191 = vector.broadcast %cst_74 : f32 to vector<8x256xf32>
    %192 = arith.select %190, %188, %191 : vector<8x256xi1>, vector<8x256xf32>
    %c239_i32 = arith.constant 239 : i32
    %193 = tpu.dynamic_rotate %62 by %c239_i32 dim 1 : vector<8x256xf32>, i32 -> vector<8x256xf32>
    %c14_i32_75 = arith.constant 14 : i32
    %194 = vector.broadcast %c14_i32_75 : i32 to vector<8x256xi32>
    %195 = arith.cmpi sle, %146, %194 : vector<8x256xi32>
    %c14_i32_76 = arith.constant 14 : i32
    %196 = vector.broadcast %c14_i32_76 : i32 to vector<8x256xi32>
    %197 = arith.cmpi sle, %148, %196 : vector<8x256xi32>
    %198 = arith.andi %195, %197 : vector<8x256xi1>
    %cst_77 = arith.constant 0.000000e+00 : f32
    %199 = vector.broadcast %cst_77 : f32 to vector<8x256xf32>
    %200 = arith.select %198, %193, %199 : vector<8x256xi1>, vector<8x256xf32>
    %201 = tpu.concatenate %156, %161, %169, %174, %62, %179, %187, %192, %200 in 0 : vector<8x256xf32>, vector<8x256xf32>, vector<8x256xf32>, vector<8x256xf32>, vector<8x256xf32>, vector<8x256xf32>, vector<8x256xf32>, vector<8x256xf32>, vector<8x256xf32> -> vector<72x256xf32>
    %202 = arith.truncf %201 : vector<72x256xf32> to vector<72x256xbf16>
    %cst_78 = arith.constant dense<0.000000e+00> : vector<8x256xf32>
    %203 = tpu.matmul %29, %202, %cst_78 {dimension_numbers = #tpu.dot_dimension_numbers<[1], [0], [0], [1], [0, 0, 1, 1], [], []>} : vector<8x72xbf16>, vector<72x256xbf16>, vector<8x256xf32> -> vector<8x256xf32>
    %204 = vector.broadcast %30 : vector<8x1xf32> to vector<8x256xf32>
    %205 = arith.addf %203, %204 : vector<8x256xf32>
    %206 = arith.addf %205, %143 : vector<8x256xf32>
    %cst_79 = arith.constant dense<0.000000e+00> : vector<256xf32>
    %207 = vector.multi_reduction <add>, %206, %cst_79 [0] : vector<8x256xf32> to vector<256xf32>
    %208 = vector.shape_cast %207 : vector<256xf32> to vector<1x256xf32>
    %cst_80 = arith.constant 8.000000e+00 : f32
    %209 = vector.broadcast %cst_80 : f32 to vector<1x256xf32>
    %210 = arith.divf %208, %209 : vector<1x256xf32>
    %211 = arith.mulf %206, %206 : vector<8x256xf32>
    %cst_81 = arith.constant dense<0.000000e+00> : vector<256xf32>
    %212 = vector.multi_reduction <add>, %211, %cst_81 [0] : vector<8x256xf32> to vector<256xf32>
    %213 = vector.shape_cast %212 : vector<256xf32> to vector<1x256xf32>
    %cst_82 = arith.constant 8.000000e+00 : f32
    %214 = vector.broadcast %cst_82 : f32 to vector<1x256xf32>
    %215 = arith.divf %213, %214 : vector<1x256xf32>
    %216 = arith.mulf %210, %210 : vector<1x256xf32>
    %217 = arith.subf %215, %216 : vector<1x256xf32>
    %218 = vector.broadcast %210 : vector<1x256xf32> to vector<8x256xf32>
    %219 = arith.subf %206, %218 : vector<8x256xf32>
    %cst_83 = arith.constant 9.99999974E-6 : f32
    %220 = vector.broadcast %cst_83 : f32 to vector<1x256xf32>
    %221 = arith.addf %217, %220 : vector<1x256xf32>
    %222 = math.rsqrt %221 : vector<1x256xf32>
    %223 = vector.broadcast %222 : vector<1x256xf32> to vector<8x256xf32>
    %224 = arith.mulf %219, %223 : vector<8x256xf32>
    %225 = vector.broadcast %39 : vector<8x1xf32> to vector<8x256xf32>
    %226 = arith.mulf %224, %225 : vector<8x256xf32>
    %227 = vector.broadcast %40 : vector<8x1xf32> to vector<8x256xf32>
    %228 = arith.addf %226, %227 : vector<8x256xf32>
    %cst_84 = arith.constant 0.000000e+00 : f32
    %229 = vector.broadcast %cst_84 : f32 to vector<8x256xf32>
    %230 = arith.maximumf %228, %229 : vector<8x256xf32>
    %c0_85 = arith.constant 0 : index
    %c0_86 = arith.constant 0 : index
    %231 = vector.load %arg4[%c0_85, %c0_86] : memref<512x64xbf16, #tpu.memory_space<vmem>>, vector<512x64xbf16>
    %c0_87 = arith.constant 0 : index
    %c0_88 = arith.constant 0 : index
    %232 = vector.load %arg7[%c0_87, %c0_88] : memref<8x72xbf16, #tpu.memory_space<vmem>>, vector<8x72xbf16>
    %c0_89 = arith.constant 0 : index
    %c0_90 = arith.constant 0 : index
    %233 = vector.load %arg8[%c0_89, %c0_90] : memref<8x1xf32, #tpu.memory_space<vmem>>, vector<8x1xf32>
    %c0_91 = arith.constant 0 : index
    %c0_92 = arith.constant 0 : index
    %234 = vector.load %arg13[%c0_91, %c0_92] : memref<32x8xbf16, #tpu.memory_space<vmem>>, vector<32x8xbf16>
    %c0_93 = arith.constant 0 : index
    %c0_94 = arith.constant 0 : index
    %235 = vector.load %arg14[%c0_93, %c0_94] : memref<32x1xf32, #tpu.memory_space<vmem>>, vector<32x1xf32>
    %c0_95 = arith.constant 0 : index
    %c0_96 = arith.constant 0 : index
    %236 = vector.load %arg15[%c0_95, %c0_96] : memref<8x32xbf16, #tpu.memory_space<vmem>>, vector<8x32xbf16>
    %c0_97 = arith.constant 0 : index
    %c0_98 = arith.constant 0 : index
    %237 = vector.load %arg16[%c0_97, %c0_98] : memref<8x1xf32, #tpu.memory_space<vmem>>, vector<8x1xf32>
    %c0_99 = arith.constant 0 : index
    %c4_100 = arith.constant 4 : index
    %238 = vector.load %arg2[%c0_99, %c4_100] : memref<8x12xf32, #tpu.memory_space<vmem>>, vector<8x1xf32>
    %c0_101 = arith.constant 0 : index
    %c5_102 = arith.constant 5 : index
    %239 = vector.load %arg2[%c0_101, %c5_102] : memref<8x12xf32, #tpu.memory_space<vmem>>, vector<8x1xf32>
    %c0_103 = arith.constant 0 : index
    %c6_104 = arith.constant 6 : index
    %240 = vector.load %arg2[%c0_103, %c6_104] : memref<8x12xf32, #tpu.memory_space<vmem>>, vector<8x1xf32>
    %c0_105 = arith.constant 0 : index
    %c7_106 = arith.constant 7 : index
    %241 = vector.load %arg2[%c0_105, %c7_106] : memref<8x12xf32, #tpu.memory_space<vmem>>, vector<8x1xf32>
    %c0_107 = arith.constant 0 : index
    %c10 = arith.constant 10 : index
    %242 = vector.load %arg2[%c0_107, %c10] : memref<8x12xf32, #tpu.memory_space<vmem>>, vector<8x1xf32>
    %c0_108 = arith.constant 0 : index
    %c11 = arith.constant 11 : index
    %243 = vector.load %arg2[%c0_108, %c11] : memref<8x12xf32, #tpu.memory_space<vmem>>, vector<8x1xf32>
    %cst_109 = arith.constant dense<0.000000e+00> : vector<64xf32>
    %244 = vector.multi_reduction <add>, %27, %cst_109 [0] : vector<8x64xf32> to vector<64xf32>
    %245 = vector.shape_cast %244 : vector<64xf32> to vector<1x64xf32>
    %cst_110 = arith.constant 8.000000e+00 : f32
    %246 = vector.broadcast %cst_110 : f32 to vector<1x64xf32>
    %247 = arith.divf %245, %246 : vector<1x64xf32>
    %248 = arith.mulf %27, %27 : vector<8x64xf32>
    %cst_111 = arith.constant dense<0.000000e+00> : vector<64xf32>
    %249 = vector.multi_reduction <add>, %248, %cst_111 [0] : vector<8x64xf32> to vector<64xf32>
    %250 = vector.shape_cast %249 : vector<64xf32> to vector<1x64xf32>
    %cst_112 = arith.constant 8.000000e+00 : f32
    %251 = vector.broadcast %cst_112 : f32 to vector<1x64xf32>
    %252 = arith.divf %250, %251 : vector<1x64xf32>
    %253 = arith.mulf %247, %247 : vector<1x64xf32>
    %254 = arith.subf %252, %253 : vector<1x64xf32>
    %255 = vector.broadcast %247 : vector<1x64xf32> to vector<8x64xf32>
    %256 = arith.subf %27, %255 : vector<8x64xf32>
    %cst_113 = arith.constant 9.99999974E-6 : f32
    %257 = vector.broadcast %cst_113 : f32 to vector<1x64xf32>
    %258 = arith.addf %254, %257 : vector<1x64xf32>
    %259 = math.rsqrt %258 : vector<1x64xf32>
    %260 = vector.broadcast %259 : vector<1x64xf32> to vector<8x64xf32>
    %261 = arith.mulf %256, %260 : vector<8x64xf32>
    %262 = vector.broadcast %238 : vector<8x1xf32> to vector<8x64xf32>
    %263 = arith.mulf %261, %262 : vector<8x64xf32>
    %264 = vector.broadcast %239 : vector<8x1xf32> to vector<8x64xf32>
    %265 = arith.addf %263, %264 : vector<8x64xf32>
    %266 = arith.truncf %265 : vector<8x64xf32> to vector<8x64xbf16>
    %267 = tpu.concatenate %266, %266, %266, %266, %266, %266, %266, %266 in 1 : vector<8x64xbf16>, vector<8x64xbf16>, vector<8x64xbf16>, vector<8x64xbf16>, vector<8x64xbf16>, vector<8x64xbf16>, vector<8x64xbf16>, vector<8x64xbf16> -> vector<8x512xbf16>
    %268 = tpu.iota {dimensions = array<i32: 0>} : vector<8x512xi32>
    %269 = tpu.iota {dimensions = array<i32: 1>} : vector<8x512xi32>
    %c6_i32 = arith.constant 6 : i32
    %270 = vector.broadcast %c6_i32 : i32 to vector<8x512xi32>
    %271 = arith.shrsi %269, %270 : vector<8x512xi32>
    %272 = arith.cmpi eq, %268, %271 : vector<8x512xi32>
    %cst_114 = arith.constant 0.000000e+00 : f32
    %273 = arith.truncf %cst_114 : f32 to bf16
    %274 = vector.broadcast %273 : bf16 to vector<8x512xbf16>
    %275 = arith.select %272, %267, %274 : vector<8x512xi1>, vector<8x512xbf16>
    %cst_115 = arith.constant dense<0.000000e+00> : vector<8x64xf32>
    %276 = tpu.matmul %275, %231, %cst_115 {dimension_numbers = #tpu.dot_dimension_numbers<[1], [0], [0], [1], [0, 0, 1, 1], [], []>} : vector<8x512xbf16>, vector<512x64xbf16>, vector<8x64xf32> -> vector<8x64xf32>
    %cst_116 = arith.constant dense<0.000000e+00> : vector<64xf32>
    %277 = vector.multi_reduction <add>, %276, %cst_116 [0] : vector<8x64xf32> to vector<64xf32>
    %278 = vector.shape_cast %277 : vector<64xf32> to vector<1x64xf32>
    %cst_117 = arith.constant 8.000000e+00 : f32
    %279 = vector.broadcast %cst_117 : f32 to vector<1x64xf32>
    %280 = arith.divf %278, %279 : vector<1x64xf32>
    %281 = arith.mulf %276, %276 : vector<8x64xf32>
    %cst_118 = arith.constant dense<0.000000e+00> : vector<64xf32>
    %282 = vector.multi_reduction <add>, %281, %cst_118 [0] : vector<8x64xf32> to vector<64xf32>
    %283 = vector.shape_cast %282 : vector<64xf32> to vector<1x64xf32>
    %cst_119 = arith.constant 8.000000e+00 : f32
    %284 = vector.broadcast %cst_119 : f32 to vector<1x64xf32>
    %285 = arith.divf %283, %284 : vector<1x64xf32>
    %286 = arith.mulf %280, %280 : vector<1x64xf32>
    %287 = arith.subf %285, %286 : vector<1x64xf32>
    %288 = vector.broadcast %280 : vector<1x64xf32> to vector<8x64xf32>
    %289 = arith.subf %276, %288 : vector<8x64xf32>
    %cst_120 = arith.constant 9.99999974E-6 : f32
    %290 = vector.broadcast %cst_120 : f32 to vector<1x64xf32>
    %291 = arith.addf %287, %290 : vector<1x64xf32>
    %292 = math.rsqrt %291 : vector<1x64xf32>
    %293 = vector.broadcast %292 : vector<1x64xf32> to vector<8x64xf32>
    %294 = arith.mulf %289, %293 : vector<8x64xf32>
    %295 = vector.broadcast %240 : vector<8x1xf32> to vector<8x64xf32>
    %296 = arith.mulf %294, %295 : vector<8x64xf32>
    %297 = vector.broadcast %241 : vector<8x1xf32> to vector<8x64xf32>
    %298 = arith.addf %296, %297 : vector<8x64xf32>
    %299 = arith.truncf %298 : vector<8x64xf32> to vector<8x64xbf16>
    %cst_121 = arith.constant dense<0.000000e+00> : vector<32x64xf32>
    %300 = tpu.matmul %234, %299, %cst_121 {dimension_numbers = #tpu.dot_dimension_numbers<[1], [0], [0], [1], [0, 0, 1, 1], [], []>} : vector<32x8xbf16>, vector<8x64xbf16>, vector<32x64xf32> -> vector<32x64xf32>
    %301 = vector.broadcast %235 : vector<32x1xf32> to vector<32x64xf32>
    %302 = arith.addf %300, %301 : vector<32x64xf32>
    %cst_122 = arith.constant 5.000000e-01 : f32
    %303 = vector.broadcast %cst_122 : f32 to vector<32x64xf32>
    %304 = arith.mulf %303, %302 : vector<32x64xf32>
    %cst_123 = arith.constant 0.707106769 : f32
    %305 = vector.broadcast %cst_123 : f32 to vector<32x64xf32>
    %306 = arith.mulf %302, %305 : vector<32x64xf32>
    %307 = math.absf %306 : vector<32x64xf32>
    %cst_124 = arith.constant 0.327591091 : f32
    %308 = vector.broadcast %cst_124 : f32 to vector<32x64xf32>
    %309 = arith.mulf %308, %307 : vector<32x64xf32>
    %cst_125 = arith.constant 1.000000e+00 : f32
    %310 = vector.broadcast %cst_125 : f32 to vector<32x64xf32>
    %311 = arith.addf %310, %309 : vector<32x64xf32>
    %cst_126 = arith.constant 1.000000e+00 : f32
    %312 = vector.broadcast %cst_126 : f32 to vector<32x64xf32>
    %313 = arith.divf %312, %311 : vector<32x64xf32>
    %cst_127 = arith.constant 1.06140542 : f32
    %314 = vector.broadcast %cst_127 : f32 to vector<32x64xf32>
    %315 = arith.mulf %314, %313 : vector<32x64xf32>
    %cst_128 = arith.constant -1.45315206 : f32
    %316 = vector.broadcast %cst_128 : f32 to vector<32x64xf32>
    %317 = arith.addf %315, %316 : vector<32x64xf32>
    %318 = arith.mulf %317, %313 : vector<32x64xf32>
    %cst_129 = arith.constant 1.42141378 : f32
    %319 = vector.broadcast %cst_129 : f32 to vector<32x64xf32>
    %320 = arith.addf %318, %319 : vector<32x64xf32>
    %321 = arith.mulf %320, %313 : vector<32x64xf32>
    %cst_130 = arith.constant -0.284496725 : f32
    %322 = vector.broadcast %cst_130 : f32 to vector<32x64xf32>
    %323 = arith.addf %321, %322 : vector<32x64xf32>
    %324 = arith.mulf %323, %313 : vector<32x64xf32>
    %cst_131 = arith.constant 0.254829586 : f32
    %325 = vector.broadcast %cst_131 : f32 to vector<32x64xf32>
    %326 = arith.addf %324, %325 : vector<32x64xf32>
    %327 = arith.mulf %326, %313 : vector<32x64xf32>
    %cst_132 = arith.constant 0.000000e+00 : f32
    %328 = vector.broadcast %cst_132 : f32 to vector<32x64xf32>
    %329 = arith.subf %328, %307 : vector<32x64xf32>
    %330 = arith.mulf %329, %307 : vector<32x64xf32>
    %331 = math.exp %330 : vector<32x64xf32>
    %332 = arith.mulf %327, %331 : vector<32x64xf32>
    %cst_133 = arith.constant 1.000000e+00 : f32
    %333 = vector.broadcast %cst_133 : f32 to vector<32x64xf32>
    %334 = arith.subf %333, %332 : vector<32x64xf32>
    %cst_134 = arith.constant 0.000000e+00 : f32
    %335 = vector.broadcast %cst_134 : f32 to vector<32x64xf32>
    %336 = arith.cmpf oge, %306, %335 : vector<32x64xf32>
    %cst_135 = arith.constant 0.000000e+00 : f32
    %337 = vector.broadcast %cst_135 : f32 to vector<32x64xf32>
    %338 = arith.subf %337, %334 : vector<32x64xf32>
    %339 = arith.select %336, %334, %338 : vector<32x64xi1>, vector<32x64xf32>
    %cst_136 = arith.constant 1.000000e+00 : f32
    %340 = vector.broadcast %cst_136 : f32 to vector<32x64xf32>
    %341 = arith.addf %340, %339 : vector<32x64xf32>
    %342 = arith.mulf %304, %341 : vector<32x64xf32>
    %343 = arith.truncf %342 : vector<32x64xf32> to vector<32x64xbf16>
    %cst_137 = arith.constant dense<0.000000e+00> : vector<8x64xf32>
    %344 = tpu.matmul %236, %343, %cst_137 {dimension_numbers = #tpu.dot_dimension_numbers<[1], [0], [0], [1], [0, 0, 1, 1], [], []>} : vector<8x32xbf16>, vector<32x64xbf16>, vector<8x64xf32> -> vector<8x64xf32>
    %345 = vector.broadcast %237 : vector<8x1xf32> to vector<8x64xf32>
    %346 = arith.addf %344, %345 : vector<8x64xf32>
    %347 = tpu.iota {dimensions = array<i32: 1>} : vector<8x64xi32>
    %c3_i32 = arith.constant 3 : i32
    %348 = vector.broadcast %c3_i32 : i32 to vector<8x64xi32>
    %349 = arith.shrsi %347, %348 : vector<8x64xi32>
    %c7_i32 = arith.constant 7 : i32
    %350 = vector.broadcast %c7_i32 : i32 to vector<8x64xi32>
    %351 = arith.andi %347, %350 : vector<8x64xi32>
    %352 = vector.extract_strided_slice %265 {offsets = [0, 55], sizes = [8, 9], strides = [1, 1]} : vector<8x64xf32> to vector<8x9xf32>
    %353 = vector.extract_strided_slice %265 {offsets = [0, 0], sizes = [8, 55], strides = [1, 1]} : vector<8x64xf32> to vector<8x55xf32>
    %354 = tpu.concatenate %352, %353 in 1 : vector<8x9xf32>, vector<8x55xf32> -> vector<8x64xf32>
    %c1_i32_138 = arith.constant 1 : i32
    %355 = vector.broadcast %c1_i32_138 : i32 to vector<8x64xi32>
    %356 = arith.cmpi sge, %349, %355 : vector<8x64xi32>
    %c1_i32_139 = arith.constant 1 : i32
    %357 = vector.broadcast %c1_i32_139 : i32 to vector<8x64xi32>
    %358 = arith.cmpi sge, %351, %357 : vector<8x64xi32>
    %359 = arith.andi %356, %358 : vector<8x64xi1>
    %cst_140 = arith.constant 0.000000e+00 : f32
    %360 = vector.broadcast %cst_140 : f32 to vector<8x64xf32>
    %361 = arith.select %359, %354, %360 : vector<8x64xi1>, vector<8x64xf32>
    %362 = vector.extract_strided_slice %265 {offsets = [0, 56], sizes = [8, 8], strides = [1, 1]} : vector<8x64xf32> to vector<8x8xf32>
    %363 = vector.extract_strided_slice %265 {offsets = [0, 0], sizes = [8, 56], strides = [1, 1]} : vector<8x64xf32> to vector<8x56xf32>
    %364 = tpu.concatenate %362, %363 in 1 : vector<8x8xf32>, vector<8x56xf32> -> vector<8x64xf32>
    %c1_i32_141 = arith.constant 1 : i32
    %365 = vector.broadcast %c1_i32_141 : i32 to vector<8x64xi32>
    %366 = arith.cmpi sge, %349, %365 : vector<8x64xi32>
    %cst_142 = arith.constant 0.000000e+00 : f32
    %367 = vector.broadcast %cst_142 : f32 to vector<8x64xf32>
    %368 = arith.select %366, %364, %367 : vector<8x64xi1>, vector<8x64xf32>
    %369 = vector.extract_strided_slice %265 {offsets = [0, 57], sizes = [8, 7], strides = [1, 1]} : vector<8x64xf32> to vector<8x7xf32>
    %370 = vector.extract_strided_slice %265 {offsets = [0, 0], sizes = [8, 57], strides = [1, 1]} : vector<8x64xf32> to vector<8x57xf32>
    %371 = tpu.concatenate %369, %370 in 1 : vector<8x7xf32>, vector<8x57xf32> -> vector<8x64xf32>
    %c1_i32_143 = arith.constant 1 : i32
    %372 = vector.broadcast %c1_i32_143 : i32 to vector<8x64xi32>
    %373 = arith.cmpi sge, %349, %372 : vector<8x64xi32>
    %c6_i32_144 = arith.constant 6 : i32
    %374 = vector.broadcast %c6_i32_144 : i32 to vector<8x64xi32>
    %375 = arith.cmpi sle, %351, %374 : vector<8x64xi32>
    %376 = arith.andi %373, %375 : vector<8x64xi1>
    %cst_145 = arith.constant 0.000000e+00 : f32
    %377 = vector.broadcast %cst_145 : f32 to vector<8x64xf32>
    %378 = arith.select %376, %371, %377 : vector<8x64xi1>, vector<8x64xf32>
    %379 = vector.extract_strided_slice %265 {offsets = [0, 63], sizes = [8, 1], strides = [1, 1]} : vector<8x64xf32> to vector<8x1xf32>
    %380 = vector.extract_strided_slice %265 {offsets = [0, 0], sizes = [8, 63], strides = [1, 1]} : vector<8x64xf32> to vector<8x63xf32>
    %381 = tpu.concatenate %379, %380 in 1 : vector<8x1xf32>, vector<8x63xf32> -> vector<8x64xf32>
    %c1_i32_146 = arith.constant 1 : i32
    %382 = vector.broadcast %c1_i32_146 : i32 to vector<8x64xi32>
    %383 = arith.cmpi sge, %351, %382 : vector<8x64xi32>
    %cst_147 = arith.constant 0.000000e+00 : f32
    %384 = vector.broadcast %cst_147 : f32 to vector<8x64xf32>
    %385 = arith.select %383, %381, %384 : vector<8x64xi1>, vector<8x64xf32>
    %386 = vector.extract_strided_slice %265 {offsets = [0, 1], sizes = [8, 63], strides = [1, 1]} : vector<8x64xf32> to vector<8x63xf32>
    %387 = vector.extract_strided_slice %265 {offsets = [0, 0], sizes = [8, 1], strides = [1, 1]} : vector<8x64xf32> to vector<8x1xf32>
    %388 = tpu.concatenate %386, %387 in 1 : vector<8x63xf32>, vector<8x1xf32> -> vector<8x64xf32>
    %c6_i32_148 = arith.constant 6 : i32
    %389 = vector.broadcast %c6_i32_148 : i32 to vector<8x64xi32>
    %390 = arith.cmpi sle, %351, %389 : vector<8x64xi32>
    %cst_149 = arith.constant 0.000000e+00 : f32
    %391 = vector.broadcast %cst_149 : f32 to vector<8x64xf32>
    %392 = arith.select %390, %388, %391 : vector<8x64xi1>, vector<8x64xf32>
    %393 = vector.extract_strided_slice %265 {offsets = [0, 7], sizes = [8, 57], strides = [1, 1]} : vector<8x64xf32> to vector<8x57xf32>
    %394 = vector.extract_strided_slice %265 {offsets = [0, 0], sizes = [8, 7], strides = [1, 1]} : vector<8x64xf32> to vector<8x7xf32>
    %395 = tpu.concatenate %393, %394 in 1 : vector<8x57xf32>, vector<8x7xf32> -> vector<8x64xf32>
    %c6_i32_150 = arith.constant 6 : i32
    %396 = vector.broadcast %c6_i32_150 : i32 to vector<8x64xi32>
    %397 = arith.cmpi sle, %349, %396 : vector<8x64xi32>
    %c1_i32_151 = arith.constant 1 : i32
    %398 = vector.broadcast %c1_i32_151 : i32 to vector<8x64xi32>
    %399 = arith.cmpi sge, %351, %398 : vector<8x64xi32>
    %400 = arith.andi %397, %399 : vector<8x64xi1>
    %cst_152 = arith.constant 0.000000e+00 : f32
    %401 = vector.broadcast %cst_152 : f32 to vector<8x64xf32>
    %402 = arith.select %400, %395, %401 : vector<8x64xi1>, vector<8x64xf32>
    %403 = vector.extract_strided_slice %265 {offsets = [0, 8], sizes = [8, 56], strides = [1, 1]} : vector<8x64xf32> to vector<8x56xf32>
    %404 = vector.extract_strided_slice %265 {offsets = [0, 0], sizes = [8, 8], strides = [1, 1]} : vector<8x64xf32> to vector<8x8xf32>
    %405 = tpu.concatenate %403, %404 in 1 : vector<8x56xf32>, vector<8x8xf32> -> vector<8x64xf32>
    %c6_i32_153 = arith.constant 6 : i32
    %406 = vector.broadcast %c6_i32_153 : i32 to vector<8x64xi32>
    %407 = arith.cmpi sle, %349, %406 : vector<8x64xi32>
    %cst_154 = arith.constant 0.000000e+00 : f32
    %408 = vector.broadcast %cst_154 : f32 to vector<8x64xf32>
    %409 = arith.select %407, %405, %408 : vector<8x64xi1>, vector<8x64xf32>
    %410 = vector.extract_strided_slice %265 {offsets = [0, 9], sizes = [8, 55], strides = [1, 1]} : vector<8x64xf32> to vector<8x55xf32>
    %411 = vector.extract_strided_slice %265 {offsets = [0, 0], sizes = [8, 9], strides = [1, 1]} : vector<8x64xf32> to vector<8x9xf32>
    %412 = tpu.concatenate %410, %411 in 1 : vector<8x55xf32>, vector<8x9xf32> -> vector<8x64xf32>
    %c6_i32_155 = arith.constant 6 : i32
    %413 = vector.broadcast %c6_i32_155 : i32 to vector<8x64xi32>
    %414 = arith.cmpi sle, %349, %413 : vector<8x64xi32>
    %c6_i32_156 = arith.constant 6 : i32
    %415 = vector.broadcast %c6_i32_156 : i32 to vector<8x64xi32>
    %416 = arith.cmpi sle, %351, %415 : vector<8x64xi32>
    %417 = arith.andi %414, %416 : vector<8x64xi1>
    %cst_157 = arith.constant 0.000000e+00 : f32
    %418 = vector.broadcast %cst_157 : f32 to vector<8x64xf32>
    %419 = arith.select %417, %412, %418 : vector<8x64xi1>, vector<8x64xf32>
    %420 = tpu.concatenate %361, %368, %378, %385, %265, %392, %402, %409, %419 in 0 : vector<8x64xf32>, vector<8x64xf32>, vector<8x64xf32>, vector<8x64xf32>, vector<8x64xf32>, vector<8x64xf32>, vector<8x64xf32>, vector<8x64xf32>, vector<8x64xf32> -> vector<72x64xf32>
    %421 = arith.truncf %420 : vector<72x64xf32> to vector<72x64xbf16>
    %cst_158 = arith.constant dense<0.000000e+00> : vector<8x64xf32>
    %422 = tpu.matmul %232, %421, %cst_158 {dimension_numbers = #tpu.dot_dimension_numbers<[1], [0], [0], [1], [0, 0, 1, 1], [], []>} : vector<8x72xbf16>, vector<72x64xbf16>, vector<8x64xf32> -> vector<8x64xf32>
    %423 = vector.broadcast %233 : vector<8x1xf32> to vector<8x64xf32>
    %424 = arith.addf %422, %423 : vector<8x64xf32>
    %425 = arith.addf %424, %346 : vector<8x64xf32>
    %cst_159 = arith.constant dense<0.000000e+00> : vector<64xf32>
    %426 = vector.multi_reduction <add>, %425, %cst_159 [0] : vector<8x64xf32> to vector<64xf32>
    %427 = vector.shape_cast %426 : vector<64xf32> to vector<1x64xf32>
    %cst_160 = arith.constant 8.000000e+00 : f32
    %428 = vector.broadcast %cst_160 : f32 to vector<1x64xf32>
    %429 = arith.divf %427, %428 : vector<1x64xf32>
    %430 = arith.mulf %425, %425 : vector<8x64xf32>
    %cst_161 = arith.constant dense<0.000000e+00> : vector<64xf32>
    %431 = vector.multi_reduction <add>, %430, %cst_161 [0] : vector<8x64xf32> to vector<64xf32>
    %432 = vector.shape_cast %431 : vector<64xf32> to vector<1x64xf32>
    %cst_162 = arith.constant 8.000000e+00 : f32
    %433 = vector.broadcast %cst_162 : f32 to vector<1x64xf32>
    %434 = arith.divf %432, %433 : vector<1x64xf32>
    %435 = arith.mulf %429, %429 : vector<1x64xf32>
    %436 = arith.subf %434, %435 : vector<1x64xf32>
    %437 = vector.broadcast %429 : vector<1x64xf32> to vector<8x64xf32>
    %438 = arith.subf %425, %437 : vector<8x64xf32>
    %cst_163 = arith.constant 9.99999974E-6 : f32
    %439 = vector.broadcast %cst_163 : f32 to vector<1x64xf32>
    %440 = arith.addf %436, %439 : vector<1x64xf32>
    %441 = math.rsqrt %440 : vector<1x64xf32>
    %442 = vector.broadcast %441 : vector<1x64xf32> to vector<8x64xf32>
    %443 = arith.mulf %438, %442 : vector<8x64xf32>
    %444 = vector.broadcast %242 : vector<8x1xf32> to vector<8x64xf32>
    %445 = arith.mulf %443, %444 : vector<8x64xf32>
    %446 = vector.broadcast %243 : vector<8x1xf32> to vector<8x64xf32>
    %447 = arith.addf %445, %446 : vector<8x64xf32>
    %cst_164 = arith.constant 0.000000e+00 : f32
    %448 = vector.broadcast %cst_164 : f32 to vector<8x64xf32>
    %449 = arith.maximumf %447, %448 : vector<8x64xf32>
    %450 = tpu.concatenate %230, %449 in 1 : vector<8x256xf32>, vector<8x64xf32> -> vector<8x320xf32>
    %c0_165 = arith.constant 0 : index
    %c2 = arith.constant 2 : index
    %451 = vector.load %arg2[%c0_165, %c2] : memref<8x12xf32, #tpu.memory_space<vmem>>, vector<8x1xf32>
    %c0_166 = arith.constant 0 : index
    %c3 = arith.constant 3 : index
    %452 = vector.load %arg2[%c0_166, %c3] : memref<8x12xf32, #tpu.memory_space<vmem>>, vector<8x1xf32>
    %cst_167 = arith.constant dense<0.000000e+00> : vector<320xf32>
    %453 = vector.multi_reduction <add>, %450, %cst_167 [0] : vector<8x320xf32> to vector<320xf32>
    %454 = vector.shape_cast %453 : vector<320xf32> to vector<1x320xf32>
    %cst_168 = arith.constant 8.000000e+00 : f32
    %455 = vector.broadcast %cst_168 : f32 to vector<1x320xf32>
    %456 = arith.divf %454, %455 : vector<1x320xf32>
    %457 = arith.mulf %450, %450 : vector<8x320xf32>
    %cst_169 = arith.constant dense<0.000000e+00> : vector<320xf32>
    %458 = vector.multi_reduction <add>, %457, %cst_169 [0] : vector<8x320xf32> to vector<320xf32>
    %459 = vector.shape_cast %458 : vector<320xf32> to vector<1x320xf32>
    %cst_170 = arith.constant 8.000000e+00 : f32
    %460 = vector.broadcast %cst_170 : f32 to vector<1x320xf32>
    %461 = arith.divf %459, %460 : vector<1x320xf32>
    %462 = arith.mulf %456, %456 : vector<1x320xf32>
    %463 = arith.subf %461, %462 : vector<1x320xf32>
    %464 = vector.broadcast %456 : vector<1x320xf32> to vector<8x320xf32>
    %465 = arith.subf %450, %464 : vector<8x320xf32>
    %cst_171 = arith.constant 9.99999974E-6 : f32
    %466 = vector.broadcast %cst_171 : f32 to vector<1x320xf32>
    %467 = arith.addf %463, %466 : vector<1x320xf32>
    %468 = math.rsqrt %467 : vector<1x320xf32>
    %469 = vector.broadcast %468 : vector<1x320xf32> to vector<8x320xf32>
    %470 = arith.mulf %465, %469 : vector<8x320xf32>
    %471 = vector.broadcast %451 : vector<8x1xf32> to vector<8x320xf32>
    %472 = arith.mulf %470, %471 : vector<8x320xf32>
    %473 = vector.broadcast %452 : vector<8x1xf32> to vector<8x320xf32>
    %474 = arith.addf %472, %473 : vector<8x320xf32>
    %c0_172 = arith.constant 0 : index
    %c0_173 = arith.constant 0 : index
    %475 = vector.load %arg17[%c0_172, %c0_173] : memref<32x8xbf16, #tpu.memory_space<vmem>>, vector<32x8xbf16>
    %c0_174 = arith.constant 0 : index
    %c0_175 = arith.constant 0 : index
    %476 = vector.load %arg18[%c0_174, %c0_175] : memref<32x1xf32, #tpu.memory_space<vmem>>, vector<32x1xf32>
    %c0_176 = arith.constant 0 : index
    %c0_177 = arith.constant 0 : index
    %477 = vector.load %arg19[%c0_176, %c0_177] : memref<8x32xbf16, #tpu.memory_space<vmem>>, vector<8x32xbf16>
    %c0_178 = arith.constant 0 : index
    %c0_179 = arith.constant 0 : index
    %478 = vector.load %arg20[%c0_178, %c0_179] : memref<8x1xf32, #tpu.memory_space<vmem>>, vector<8x1xf32>
    %479 = arith.truncf %474 : vector<8x320xf32> to vector<8x320xbf16>
    %cst_180 = arith.constant dense<0.000000e+00> : vector<32x320xf32>
    %480 = tpu.matmul %475, %479, %cst_180 {dimension_numbers = #tpu.dot_dimension_numbers<[1], [0], [0], [1], [0, 0, 1, 1], [], []>} : vector<32x8xbf16>, vector<8x320xbf16>, vector<32x320xf32> -> vector<32x320xf32>
    %481 = vector.broadcast %476 : vector<32x1xf32> to vector<32x320xf32>
    %482 = arith.addf %480, %481 : vector<32x320xf32>
    %cst_181 = arith.constant 5.000000e-01 : f32
    %483 = vector.broadcast %cst_181 : f32 to vector<32x320xf32>
    %484 = arith.mulf %483, %482 : vector<32x320xf32>
    %cst_182 = arith.constant 0.707106769 : f32
    %485 = vector.broadcast %cst_182 : f32 to vector<32x320xf32>
    %486 = arith.mulf %482, %485 : vector<32x320xf32>
    %487 = math.absf %486 : vector<32x320xf32>
    %cst_183 = arith.constant 0.327591091 : f32
    %488 = vector.broadcast %cst_183 : f32 to vector<32x320xf32>
    %489 = arith.mulf %488, %487 : vector<32x320xf32>
    %cst_184 = arith.constant 1.000000e+00 : f32
    %490 = vector.broadcast %cst_184 : f32 to vector<32x320xf32>
    %491 = arith.addf %490, %489 : vector<32x320xf32>
    %cst_185 = arith.constant 1.000000e+00 : f32
    %492 = vector.broadcast %cst_185 : f32 to vector<32x320xf32>
    %493 = arith.divf %492, %491 : vector<32x320xf32>
    %cst_186 = arith.constant 1.06140542 : f32
    %494 = vector.broadcast %cst_186 : f32 to vector<32x320xf32>
    %495 = arith.mulf %494, %493 : vector<32x320xf32>
    %cst_187 = arith.constant -1.45315206 : f32
    %496 = vector.broadcast %cst_187 : f32 to vector<32x320xf32>
    %497 = arith.addf %495, %496 : vector<32x320xf32>
    %498 = arith.mulf %497, %493 : vector<32x320xf32>
    %cst_188 = arith.constant 1.42141378 : f32
    %499 = vector.broadcast %cst_188 : f32 to vector<32x320xf32>
    %500 = arith.addf %498, %499 : vector<32x320xf32>
    %501 = arith.mulf %500, %493 : vector<32x320xf32>
    %cst_189 = arith.constant -0.284496725 : f32
    %502 = vector.broadcast %cst_189 : f32 to vector<32x320xf32>
    %503 = arith.addf %501, %502 : vector<32x320xf32>
    %504 = arith.mulf %503, %493 : vector<32x320xf32>
    %cst_190 = arith.constant 0.254829586 : f32
    %505 = vector.broadcast %cst_190 : f32 to vector<32x320xf32>
    %506 = arith.addf %504, %505 : vector<32x320xf32>
    %507 = arith.mulf %506, %493 : vector<32x320xf32>
    %cst_191 = arith.constant 0.000000e+00 : f32
    %508 = vector.broadcast %cst_191 : f32 to vector<32x320xf32>
    %509 = arith.subf %508, %487 : vector<32x320xf32>
    %510 = arith.mulf %509, %487 : vector<32x320xf32>
    %511 = math.exp %510 : vector<32x320xf32>
    %512 = arith.mulf %507, %511 : vector<32x320xf32>
    %cst_192 = arith.constant 1.000000e+00 : f32
    %513 = vector.broadcast %cst_192 : f32 to vector<32x320xf32>
    %514 = arith.subf %513, %512 : vector<32x320xf32>
    %cst_193 = arith.constant 0.000000e+00 : f32
    %515 = vector.broadcast %cst_193 : f32 to vector<32x320xf32>
    %516 = arith.cmpf oge, %486, %515 : vector<32x320xf32>
    %cst_194 = arith.constant 0.000000e+00 : f32
    %517 = vector.broadcast %cst_194 : f32 to vector<32x320xf32>
    %518 = arith.subf %517, %514 : vector<32x320xf32>
    %519 = arith.select %516, %514, %518 : vector<32x320xi1>, vector<32x320xf32>
    %cst_195 = arith.constant 1.000000e+00 : f32
    %520 = vector.broadcast %cst_195 : f32 to vector<32x320xf32>
    %521 = arith.addf %520, %519 : vector<32x320xf32>
    %522 = arith.mulf %484, %521 : vector<32x320xf32>
    %523 = arith.truncf %522 : vector<32x320xf32> to vector<32x320xbf16>
    %cst_196 = arith.constant dense<0.000000e+00> : vector<8x320xf32>
    %524 = tpu.matmul %477, %523, %cst_196 {dimension_numbers = #tpu.dot_dimension_numbers<[1], [0], [0], [1], [0, 0, 1, 1], [], []>} : vector<8x32xbf16>, vector<32x320xbf16>, vector<8x320xf32> -> vector<8x320xf32>
    %525 = vector.broadcast %478 : vector<8x1xf32> to vector<8x320xf32>
    %526 = arith.addf %524, %525 : vector<8x320xf32>
    %527 = arith.addf %526, %1 : vector<8x320xf32>
    %c0_197 = arith.constant 0 : index
    %c0_198 = arith.constant 0 : index
    %c0_199 = arith.constant 0 : index
    %528 = vector.load %arg21[%c0_197, %c0_198, %c0_199] : memref<1x8x320xf32, #tpu.memory_space<vmem>>, vector<1x8x320xf32>
    %529 = vector.shape_cast %528 : vector<1x8x320xf32> to vector<8x320xf32>
    %530 = vector.shape_cast %527 : vector<8x320xf32> to vector<1x8x320xf32>
    tpu.vector_store %arg21[%c0_197, %c0_198, %c0_199], %530 {strides = array<i32>} : memref<1x8x320xf32, #tpu.memory_space<vmem>>, vector<1x8x320xf32>,
    return
  }
  func.func @transform_0(%arg0: i32) -> (i32, i32, i32) {
    %c0_i32 = arith.constant 0 : i32
    %c0_i32_0 = arith.constant 0 : i32
    %c0_i32_1 = arith.constant 0 : i32
    return %arg0, %c0_i32, %c0_i32_0 : i32, i32, i32
  }
  func.func @transform_1(%arg0: i32) -> (i32, i32) {
    %c0_i32 = arith.constant 0 : i32
    %c0_i32_0 = arith.constant 0 : i32
    %c0_i32_1 = arith.constant 0 : i32
    return %c0_i32, %c0_i32_0 : i32, i32
  }
  func.func @transform_2(%arg0: i32) -> (i32, i32) {
    %c0_i32 = arith.constant 0 : i32
    %c0_i32_0 = arith.constant 0 : i32
    %c0_i32_1 = arith.constant 0 : i32
    return %c0_i32, %c0_i32_0 : i32, i32
  }
  func.func @transform_3(%arg0: i32) -> (i32, i32) {
    %c0_i32 = arith.constant 0 : i32
    %c0_i32_0 = arith.constant 0 : i32
    %c0_i32_1 = arith.constant 0 : i32
    return %c0_i32, %c0_i32_0 : i32, i32
  }
  func.func @transform_4(%arg0: i32) -> (i32, i32) {
    %c0_i32 = arith.constant 0 : i32
    %c0_i32_0 = arith.constant 0 : i32
    %c0_i32_1 = arith.constant 0 : i32
    return %c0_i32, %c0_i32_0 : i32, i32
  }
  func.func @transform_5(%arg0: i32) -> (i32, i32) {
    %c0_i32 = arith.constant 0 : i32
    %c0_i32_0 = arith.constant 0 : i32
    %c0_i32_1 = arith.constant 0 : i32
    return %c0_i32, %c0_i32_0 : i32, i32
  }
  func.func @transform_6(%arg0: i32) -> (i32, i32) {
    %c0_i32 = arith.constant 0 : i32
    %c0_i32_0 = arith.constant 0 : i32
    %c0_i32_1 = arith.constant 0 : i32
    return %c0_i32, %c0_i32_0 : i32, i32
  }
  func.func @transform_7(%arg0: i32) -> (i32, i32) {
    %c0_i32 = arith.constant 0 : i32
    %c0_i32_0 = arith.constant 0 : i32
    %c0_i32_1 = arith.constant 0 : i32
    return %c0_i32, %c0_i32_0 : i32, i32
  }
  func.func @transform_8(%arg0: i32) -> (i32, i32) {
    %c0_i32 = arith.constant 0 : i32
    %c0_i32_0 = arith.constant 0 : i32
    %c0_i32_1 = arith.constant 0 : i32
    return %c0_i32, %c0_i32_0 : i32, i32
  }
  func.func @transform_9(%arg0: i32) -> (i32, i32) {
    %c0_i32 = arith.constant 0 : i32
    %c0_i32_0 = arith.constant 0 : i32
    %c0_i32_1 = arith.constant 0 : i32
    return %c0_i32, %c0_i32_0 : i32, i32
  }
  func.func @transform_10(%arg0: i32) -> (i32, i32) {
    %c0_i32 = arith.constant 0 : i32
    %c0_i32_0 = arith.constant 0 : i32
    %c0_i32_1 = arith.constant 0 : i32
    return %c0_i32, %c0_i32_0 : i32, i32
  }
  func.func @transform_11(%arg0: i32) -> (i32, i32) {
    %c0_i32 = arith.constant 0 : i32
    %c0_i32_0 = arith.constant 0 : i32
    %c0_i32_1 = arith.constant 0 : i32
    return %c0_i32, %c0_i32_0 : i32, i32
  }
  func.func @transform_12(%arg0: i32) -> (i32, i32) {
    %c0_i32 = arith.constant 0 : i32
    %c0_i32_0 = arith.constant 0 : i32
    %c0_i32_1 = arith.constant 0 : i32
    return %c0_i32, %c0_i32_0 : i32, i32
  }
  func.func @transform_13(%arg0: i32) -> (i32, i32) {
    %c0_i32 = arith.constant 0 : i32
    %c0_i32_0 = arith.constant 0 : i32
    %c0_i32_1 = arith.constant 0 : i32
    return %c0_i32, %c0_i32_0 : i32, i32
  }
  func.func @transform_14(%arg0: i32) -> (i32, i32) {
    %c0_i32 = arith.constant 0 : i32
    %c0_i32_0 = arith.constant 0 : i32
    %c0_i32_1 = arith.constant 0 : i32
    return %c0_i32, %c0_i32_0 : i32, i32
  }
  func.func @transform_15(%arg0: i32) -> (i32, i32) {
    %c0_i32 = arith.constant 0 : i32
    %c0_i32_0 = arith.constant 0 : i32
    %c0_i32_1 = arith.constant 0 : i32
    return %c0_i32, %c0_i32_0 : i32, i32
  }
  func.func @transform_16(%arg0: i32) -> (i32, i32) {
    %c0_i32 = arith.constant 0 : i32
    %c0_i32_0 = arith.constant 0 : i32
    %c0_i32_1 = arith.constant 0 : i32
    return %c0_i32, %c0_i32_0 : i32, i32
  }
  func.func @transform_17(%arg0: i32) -> (i32, i32) {
    %c0_i32 = arith.constant 0 : i32
    %c0_i32_0 = arith.constant 0 : i32
    %c0_i32_1 = arith.constant 0 : i32
    return %c0_i32, %c0_i32_0 : i32, i32
  }
  func.func @transform_18(%arg0: i32) -> (i32, i32) {
    %c0_i32 = arith.constant 0 : i32
    %c0_i32_0 = arith.constant 0 : i32
    %c0_i32_1 = arith.constant 0 : i32
    return %c0_i32, %c0_i32_0 : i32, i32
  }
  func.func @transform_19(%arg0: i32) -> (i32, i32) {
    %c0_i32 = arith.constant 0 : i32
    %c0_i32_0 = arith.constant 0 : i32
    %c0_i32_1 = arith.constant 0 : i32
    return %c0_i32, %c0_i32_0 : i32, i32
  }
  func.func @transform_20(%arg0: i32) -> (i32, i32, i32) {
    %c0_i32 = arith.constant 0 : i32
    %c0_i32_0 = arith.constant 0 : i32
    %c0_i32_1 = arith.constant 0 : i32
    return %arg0, %c0_i32, %c0_i32_0 : i32, i32, i32
  }
}

</mosaic_0001>

<llo_original>
// kernel: block_forward.1
$region0: #{block_forward.1}
  #allocation0 [shape = 'u32[]', space=smem, size = 0x4, offset = 0x4, fixed_abs, tag = 'smem constant byte address 0x4 - core index']
  #allocation1 [shape = 'u32[144,128]{1,0:T(1,128)}', space=vmem, size = 0x12000, scoped, tag = 'internal scratch']
  %s0 = inlined_call_operand.vmem [shape: f32[2,8,320], index: 0, kind: input, shape index: {}]
  %s1 = inlined_call_operand.vmem [shape: f32[8,12], index: 1, kind: input, shape index: {}]
  %s2 = inlined_call_operand.hbm [shape: bf16[2048,256], index: 2, kind: input, shape index: {}]
  %s3 = inlined_call_operand.vmem [shape: bf16[512,64], index: 3, kind: input, shape index: {}]
  %s4 = inlined_call_operand.vmem [shape: bf16[8,72], index: 4, kind: input, shape index: {}]
  %s5 = inlined_call_operand.vmem [shape: f32[8,1], index: 5, kind: input, shape index: {}]
  %s6 = inlined_call_operand.vmem [shape: bf16[8,72], index: 6, kind: input, shape index: {}]
  %s7 = inlined_call_operand.vmem [shape: f32[8,1], index: 7, kind: input, shape index: {}]
  %s8 = inlined_call_operand.vmem [shape: bf16[32,8], index: 8, kind: input, shape index: {}]
  %s9 = inlined_call_operand.vmem [shape: f32[32,1], index: 9, kind: input, shape index: {}]
  %s10 = inlined_call_operand.vmem [shape: bf16[8,32], index: 10, kind: input, shape index: {}]
  %s11 = inlined_call_operand.vmem [shape: f32[8,1], index: 11, kind: input, shape index: {}]
  %s12 = inlined_call_operand.vmem [shape: bf16[32,8], index: 12, kind: input, shape index: {}]
  %s13 = inlined_call_operand.vmem [shape: f32[32,1], index: 13, kind: input, shape index: {}]
  %s14 = inlined_call_operand.vmem [shape: bf16[8,32], index: 14, kind: input, shape index: {}]
  %s15 = inlined_call_operand.vmem [shape: f32[8,1], index: 15, kind: input, shape index: {}]
  %s16 = inlined_call_operand.vmem [shape: bf16[32,8], index: 16, kind: input, shape index: {}]
  %s17 = inlined_call_operand.vmem [shape: f32[32,1], index: 17, kind: input, shape index: {}]
  %s18 = inlined_call_operand.vmem [shape: bf16[8,32], index: 18, kind: input, shape index: {}]
  %s19 = inlined_call_operand.vmem [shape: f32[8,1], index: 19, kind: input, shape index: {}]
  %s20 = inlined_call_operand.vmem [shape: f32[2,8,320], index: 20, kind: output, shape index: {}]
  %s21 = sld [smem:[#allocation0]]
  $region117: #{block_forward.1} parent=0
    _
  %s23 = ssub.s32 1, %s21
  %s24 = scalar_select 0, %s23, %s21
  $region1: #{block_forward.1} parent=0
    #allocation2 [shape = 'u8[1048576]{0}', space=vmem, size = 0x100000, scoped, tag = 'input window, operand 2, single buffered']
    #allocation3 [shape = 's32[2]{0}', space=sflag, size = 0x8, scoped, tag = 'scoped memory for block_forward.1']
    %25 = vsyncpa [#allocation3], 0
    loop: start=0, step=1, limit=4
    $region2: #{block_forward.1} parent=1 // loop_pre_header
      _
    $region3: #{block_forward.1} parent=1 // loop_header
      %s27 = sphi 0, %s31
      %p28 = scmp.ge.s32.totalorder %s27, 4
      %s37 = sphi 0, %s39
      %s40 = sphi 0, %s37
      %s41 = sphi 0, %s40
      %s57 = sphi 0, %s41
      %s61 = sphi 0, %s61
      %s63 = sphi 0, %s61
      %s64 = sphi 0, %s63
      %s78 = sphi 0, %s64
      %s82 = sphi 0, %s82
      %s84 = sphi 0, %s82
      %s85 = sphi 0, %s84
      %s99 = sphi 0, %s85
      %s103 = sphi 0, %s103
      %s105 = sphi 0, %s103
      %s106 = sphi 0, %s105
      %s120 = sphi 0, %s106
      %s124 = sphi 0, %s124
      %s126 = sphi 0, %s124
      %s127 = sphi 0, %s126
      %s141 = sphi 0, %s127
      %s145 = sphi 0, %s145
      %s147 = sphi 0, %s145
      %s148 = sphi 0, %s147
      %s162 = sphi 0, %s148
      %s166 = sphi 0, %s166
      %s168 = sphi 0, %s166
      %s169 = sphi 0, %s168
      %s183 = sphi 0, %s169
      %s187 = sphi 0, %s187
      %s189 = sphi 0, %s187
      %s190 = sphi 0, %s189
      %s204 = sphi 0, %s190
      %s208 = sphi 0, %s208
      %s210 = sphi 0, %s208
      %s211 = sphi 0, %s210
      %s225 = sphi 0, %s211
      %s229 = sphi 0, %s229
      %s231 = sphi 0, %s229
      %s232 = sphi 0, %s231
      %s246 = sphi 0, %s232
      %s250 = sphi 0, %s250
      %s252 = sphi 0, %s250
      %s253 = sphi 0, %s252
      %s267 = sphi 0, %s253
      %s271 = sphi 0, %s271
      %s273 = sphi 0, %s271
      %s274 = sphi 0, %s273
      %s288 = sphi 0, %s274
      %s292 = sphi 0, %s292
      %s294 = sphi 0, %s292
      %s295 = sphi 0, %s294
      %s309 = sphi 0, %s295
      %s313 = sphi 0, %s313
      %s315 = sphi 0, %s313
      %s316 = sphi 0, %s315
      %s330 = sphi 0, %s316
      %s334 = sphi 0, %s334
      %s336 = sphi 0, %s334
      %s337 = sphi 0, %s336
      %s351 = sphi 0, %s337
      %s355 = sphi 0, %s355
      %s357 = sphi 0, %s355
      %s358 = sphi 0, %s357
      %s372 = sphi 0, %s358
      %s376 = sphi 0, %s376
      %s378 = sphi 0, %s376
      %s379 = sphi 0, %s378
      %s393 = sphi 0, %s379
      %s397 = sphi 0, %s397
      %s399 = sphi 0, %s397
      %s400 = sphi 0, %s399
      %s414 = sphi 0, %s400
      %s418 = sphi 0, %s418
      %s420 = sphi 0, %s418
      %s421 = sphi 0, %s420
      %s435 = sphi 0, %s421
      %s439 = sphi 0, %s439
      %s441 = sphi 0, %s439
      %s442 = sphi 0, %s441
      %s456 = sphi 0, %s442
      %s462 = sphi 0, %s464
      %s465 = sphi 0, %s462
      %s466 = sphi 0, %s465
      %s482 = sphi 0, %s466
    $region4: #{block_forward.1} parent=1 // loop_header_branch
      %30 = sbr.rel (%p28) target = $region8
    $region5: #{block_forward.1} parent=1 // loop_body
      %s32 = ssub.s32 %s27, 1
      %s33 = ssub.s32 %s27, 2
      %s34 = sadd.s32 %s27, 1
      %s35 = ssub.s32 %s27, %s34
      %p36 = scmp.eq.s32.totalorder %s35, 0
      %s38 = sadd.s32 %s37, 1
      %s39 = scalar_select %p36, %s37, %s38
      %p42 = pneg %p36
      %p43 = scmp.eq.s32.totalorder %s27, 1
      %p44 = por %p42, %p43
      %p45 = scmp.ne.s32.totalorder %s37, %s40
      %p46 = scmp.eq.s32.totalorder %s27, 0
      %p47 = por %p45, %p46
      %p48 = scmp.ne.s32.totalorder %s37, %s40
      %p49 = scmp.eq.s32.totalorder %s32, 1
      %p50 = por %p48, %p49
      %p51 = scmp.ne.s32.totalorder %s40, %s41
      %p52 = scmp.eq.s32.totalorder %s32, 0
      %p53 = por %p51, %p52
      %p54 = scmp.ne.s32.totalorder %s40, %s41
      %p55 = scmp.eq.s32.totalorder %s33, 1
      %p56 = por %p54, %p55
      %p58 = scmp.ne.s32.totalorder %s41, %s57
      %p59 = scmp.eq.s32.totalorder %s33, 0
      %p60 = por %p58, %p59
      %s62 = sadd.s32 %s61, 1
      %p65 = scmp.eq.s32.totalorder %s27, 1
      %p66 = scmp.ne.s32.totalorder %s61, %s63
      %p67 = scmp.eq.s32.totalorder %s27, 0
      %p68 = por %p66, %p67
      %p69 = scmp.ne.s32.totalorder %s61, %s63
      %p70 = scmp.eq.s32.totalorder %s32, 1
      %p71 = por %p69, %p70
      %p72 = scmp.ne.s32.totalorder %s63, %s64
      %p73 = scmp.eq.s32.totalorder %s32, 0
      %p74 = por %p72, %p73
      %p75 = scmp.ne.s32.totalorder %s63, %s64
      %p76 = scmp.eq.s32.totalorder %s33, 1
      %p77 = por %p75, %p76
      %p79 = scmp.ne.s32.totalorder %s64, %s78
      %p80 = scmp.eq.s32.totalorder %s33, 0
      %p81 = por %p79, %p80
      %s83 = sadd.s32 %s82, 1
      %p86 = scmp.eq.s32.totalorder %s27, 1
      %p87 = scmp.ne.s32.totalorder %s82, %s84
      %p88 = scmp.eq.s32.totalorder %s27, 0
      %p89 = por %p87, %p88
      %p90 = scmp.ne.s32.totalorder %s82, %s84
      %p91 = scmp.eq.s32.totalorder %s32, 1
      %p92 = por %p90, %p91
      %p93 = scmp.ne.s32.totalorder %s84, %s85
      %p94 = scmp.eq.s32.totalorder %s32, 0
      %p95 = por %p93, %p94
      %p96 = scmp.ne.s32.totalorder %s84, %s85
      %p97 = scmp.eq.s32.totalorder %s33, 1
      %p98 = por %p96, %p97
      %p100 = scmp.ne.s32.totalorder %s85, %s99
      %p101 = scmp.eq.s32.totalorder %s33, 0
      %p102 = por %p100, %p101
      %s104 = sadd.s32 %s103, 1
      %p107 = scmp.eq.s32.totalorder %s27, 1
      %p108 = scmp.ne.s32.totalorder %s103, %s105
      %p109 = scmp.eq.s32.totalorder %s27, 0
      %p110 = por %p108, %p109
      %p111 = scmp.ne.s32.totalorder %s103, %s105
      %p112 = scmp.eq.s32.totalorder %s32, 1
      %p113 = por %p111, %p112
      %p114 = scmp.ne.s32.totalorder %s105, %s106
      %p115 = scmp.eq.s32.totalorder %s32, 0
      %p116 = por %p114, %p115
      %p117 = scmp.ne.s32.totalorder %s105, %s106
      %p118 = scmp.eq.s32.totalorder %s33, 1
      %p119 = por %p117, %p118
      %p121 = scmp.ne.s32.totalorder %s106, %s120
      %p122 = scmp.eq.s32.totalorder %s33, 0
      %p123 = por %p121, %p122
      %s125 = sadd.s32 %s124, 1
      %p128 = scmp.eq.s32.totalorder %s27, 1
      %p129 = scmp.ne.s32.totalorder %s124, %s126
      %p130 = scmp.eq.s32.totalorder %s27, 0
      %p131 = por %p129, %p130
      %p132 = scmp.ne.s32.totalorder %s124, %s126
      %p133 = scmp.eq.s32.totalorder %s32, 1
      %p134 = por %p132, %p133
      %p135 = scmp.ne.s32.totalorder %s126, %s127
      %p136 = scmp.eq.s32.totalorder %s32, 0
      %p137 = por %p135, %p136
      %p138 = scmp.ne.s32.totalorder %s126, %s127
      %p139 = scmp.eq.s32.totalorder %s33, 1
      %p140 = por %p138, %p139
      %p142 = scmp.ne.s32.totalorder %s127, %s141
      %p143 = scmp.eq.s32.totalorder %s33, 0
      %p144 = por %p142, %p143
      %s146 = sadd.s32 %s145, 1
      %p149 = scmp.eq.s32.totalorder %s27, 1
      %p150 = scmp.ne.s32.totalorder %s145, %s147
      %p151 = scmp.eq.s32.totalorder %s27, 0
      %p152 = por %p150, %p151
      %p153 = scmp.ne.s32.totalorder %s145, %s147
      %p154 = scmp.eq.s32.totalorder %s32, 1
      %p155 = por %p153, %p154
      %p156 = scmp.ne.s32.totalorder %s147, %s148
      %p157 = scmp.eq.s32.totalorder %s32, 0
      %p158 = por %p156, %p157
      %p159 = scmp.ne.s32.totalorder %s147, %s148
      %p160 = scmp.eq.s32.totalorder %s33, 1
      %p161 = por %p159, %p160
      %p163 = scmp.ne.s32.totalorder %s148, %s162
      %p164 = scmp.eq.s32.totalorder %s33, 0
      %p165 = por %p163, %p164
      %s167 = sadd.s32 %s166, 1
      %p170 = scmp.eq.s32.totalorder %s27, 1
      %p171 = scmp.ne.s32.totalorder %s166, %s168
      %p172 = scmp.eq.s32.totalorder %s27, 0
      %p173 = por %p171, %p172
      %p174 = scmp.ne.s32.totalorder %s166, %s168
      %p175 = scmp.eq.s32.totalorder %s32, 1
      %p176 = por %p174, %p175
      %p177 = scmp.ne.s32.totalorder %s168, %s169
      %p178 = scmp.eq.s32.totalorder %s32, 0
      %p179 = por %p177, %p178
      %p180 = scmp.ne.s32.totalorder %s168, %s169
      %p181 = scmp.eq.s32.totalorder %s33, 1
      %p182 = por %p180, %p181
      %p184 = scmp.ne.s32.totalorder %s169, %s183
      %p185 = scmp.eq.s32.totalorder %s33, 0
      %p186 = por %p184, %p185
      %s188 = sadd.s32 %s187, 1
      %p191 = scmp.eq.s32.totalorder %s27, 1
      %p192 = scmp.ne.s32.totalorder %s187, %s189
      %p193 = scmp.eq.s32.totalorder %s27, 0
      %p194 = por %p192, %p193
      %p195 = scmp.ne.s32.totalorder %s187, %s189
      %p196 = scmp.eq.s32.totalorder %s32, 1
      %p197 = por %p195, %p196
      %p198 = scmp.ne.s32.totalorder %s189, %s190
      %p199 = scmp.eq.s32.totalorder %s32, 0
      %p200 = por %p198, %p199
      %p201 = scmp.ne.s32.totalorder %s189, %s190
      %p202 = scmp.eq.s32.totalorder %s33, 1
      %p203 = por %p201, %p202
      %p205 = scmp.ne.s32.totalorder %s190, %s204
      %p206 = scmp.eq.s32.totalorder %s33, 0
      %p207 = por %p205, %p206
      %s209 = sadd.s32 %s208, 1
      %p212 = scmp.eq.s32.totalorder %s27, 1
      %p213 = scmp.ne.s32.totalorder %s208, %s210
      %p214 = scmp.eq.s32.totalorder %s27, 0
      %p215 = por %p213, %p214
      %p216 = scmp.ne.s32.totalorder %s208, %s210
      %p217 = scmp.eq.s32.totalorder %s32, 1
      %p218 = por %p216, %p217
      %p219 = scmp.ne.s32.totalorder %s210, %s211
      %p220 = scmp.eq.s32.totalorder %s32, 0
      %p221 = por %p219, %p220
      %p222 = scmp.ne.s32.totalorder %s210, %s211
      %p223 = scmp.eq.s32.totalorder %s33, 1
      %p224 = por %p222, %p223
      %p226 = scmp.ne.s32.totalorder %s211, %s225
      %p227 = scmp.eq.s32.totalorder %s33, 0
      %p228 = por %p226, %p227
      %s230 = sadd.s32 %s229, 1
      %p233 = scmp.eq.s32.totalorder %s27, 1
      %p234 = scmp.ne.s32.totalorder %s229, %s231
      %p235 = scmp.eq.s32.totalorder %s27, 0
      %p236 = por %p234, %p235
      %p237 = scmp.ne.s32.totalorder %s229, %s231
      %p238 = scmp.eq.s32.totalorder %s32, 1
      %p239 = por %p237, %p238
      %p240 = scmp.ne.s32.totalorder %s231, %s232
      %p241 = scmp.eq.s32.totalorder %s32, 0
      %p242 = por %p240, %p241
      %p243 = scmp.ne.s32.totalorder %s231, %s232
      %p244 = scmp.eq.s32.totalorder %s33, 1
      %p245 = por %p243, %p244
      %p247 = scmp.ne.s32.totalorder %s232, %s246
      %p248 = scmp.eq.s32.totalorder %s33, 0
      %p249 = por %p247, %p248
      %s251 = sadd.s32 %s250, 1
      %p254 = scmp.eq.s32.totalorder %s27, 1
      %p255 = scmp.ne.s32.totalorder %s250, %s252
      %p256 = scmp.eq.s32.totalorder %s27, 0
      %p257 = por %p255, %p256
      %p258 = scmp.ne.s32.totalorder %s250, %s252
      %p259 = scmp.eq.s32.totalorder %s32, 1
      %p260 = por %p258, %p259
      %p261 = scmp.ne.s32.totalorder %s252, %s253
      %p262 = scmp.eq.s32.totalorder %s32, 0
      %p263 = por %p261, %p262
      %p264 = scmp.ne.s32.totalorder %s252, %s253
      %p265 = scmp.eq.s32.totalorder %s33, 1
      %p266 = por %p264, %p265
      %p268 = scmp.ne.s32.totalorder %s253, %s267
      %p269 = scmp.eq.s32.totalorder %s33, 0
      %p270 = por %p268, %p269
      %s272 = sadd.s32 %s271, 1
      %p275 = scmp.eq.s32.totalorder %s27, 1
      %p276 = scmp.ne.s32.totalorder %s271, %s273
      %p277 = scmp.eq.s32.totalorder %s27, 0
      %p278 = por %p276, %p277
      %p279 = scmp.ne.s32.totalorder %s271, %s273
      %p280 = scmp.eq.s32.totalorder %s32, 1
      %p281 = por %p279, %p280
      %p282 = scmp.ne.s32.totalorder %s273, %s274
      %p283 = scmp.eq.s32.totalorder %s32, 0
      %p284 = por %p282, %p283
      %p285 = scmp.ne.s32.totalorder %s273, %s274
      %p286 = scmp.eq.s32.totalorder %s33, 1
      %p287 = por %p285, %p286
      %p289 = scmp.ne.s32.totalorder %s274, %s288
      %p290 = scmp.eq.s32.totalorder %s33, 0
      %p291 = por %p289, %p290
      %s293 = sadd.s32 %s292, 1
      %p296 = scmp.eq.s32.totalorder %s27, 1
      %p297 = scmp.ne.s32.totalorder %s292, %s294
      %p298 = scmp.eq.s32.totalorder %s27, 0
      %p299 = por %p297, %p298
      %p300 = scmp.ne.s32.totalorder %s292, %s294
      %p301 = scmp.eq.s32.totalorder %s32, 1
      %p302 = por %p300, %p301
      %p303 = scmp.ne.s32.totalorder %s294, %s295
      %p304 = scmp.eq.s32.totalorder %s32, 0
      %p305 = por %p303, %p304
      %p306 = scmp.ne.s32.totalorder %s294, %s295
      %p307 = scmp.eq.s32.totalorder %s33, 1
      %p308 = por %p306, %p307
      %p310 = scmp.ne.s32.totalorder %s295, %s309
      %p311 = scmp.eq.s32.totalorder %s33, 0
      %p312 = por %p310, %p311
      %s314 = sadd.s32 %s313, 1
      %p317 = scmp.eq.s32.totalorder %s27, 1
      %p318 = scmp.ne.s32.totalorder %s313, %s315
      %p319 = scmp.eq.s32.totalorder %s27, 0
      %p320 = por %p318, %p319
      %p321 = scmp.ne.s32.totalorder %s313, %s315
      %p322 = scmp.eq.s32.totalorder %s32, 1
      %p323 = por %p321, %p322
      %p324 = scmp.ne.s32.totalorder %s315, %s316
      %p325 = scmp.eq.s32.totalorder %s32, 0
      %p326 = por %p324, %p325
      %p327 = scmp.ne.s32.totalorder %s315, %s316
      %p328 = scmp.eq.s32.totalorder %s33, 1
      %p329 = por %p327, %p328
      %p331 = scmp.ne.s32.totalorder %s316, %s330
      %p332 = scmp.eq.s32.totalorder %s33, 0
      %p333 = por %p331, %p332
      %s335 = sadd.s32 %s334, 1
      %p338 = scmp.eq.s32.totalorder %s27, 1
      %p339 = scmp.ne.s32.totalorder %s334, %s336
      %p340 = scmp.eq.s32.totalorder %s27, 0
      %p341 = por %p339, %p340
      %p342 = scmp.ne.s32.totalorder %s334, %s336
      %p343 = scmp.eq.s32.totalorder %s32, 1
      %p344 = por %p342, %p343
      %p345 = scmp.ne.s32.totalorder %s336, %s337
      %p346 = scmp.eq.s32.totalorder %s32, 0
      %p347 = por %p345, %p346
      %p348 = scmp.ne.s32.totalorder %s336, %s337
      %p349 = scmp.eq.s32.totalorder %s33, 1
      %p350 = por %p348, %p349
      %p352 = scmp.ne.s32.totalorder %s337, %s351
      %p353 = scmp.eq.s32.totalorder %s33, 0
      %p354 = por %p352, %p353
      %s356 = sadd.s32 %s355, 1
      %p359 = scmp.eq.s32.totalorder %s27, 1
      %p360 = scmp.ne.s32.totalorder %s355, %s357
      %p361 = scmp.eq.s32.totalorder %s27, 0
      %p362 = por %p360, %p361
      %p363 = scmp.ne.s32.totalorder %s355, %s357
      %p364 = scmp.eq.s32.totalorder %s32, 1
      %p365 = por %p363, %p364
      %p366 = scmp.ne.s32.totalorder %s357, %s358
      %p367 = scmp.eq.s32.totalorder %s32, 0
      %p368 = por %p366, %p367
      %p369 = scmp.ne.s32.totalorder %s357, %s358
      %p370 = scmp.eq.s32.totalorder %s33, 1
      %p371 = por %p369, %p370
      %p373 = scmp.ne.s32.totalorder %s358, %s372
      %p374 = scmp.eq.s32.totalorder %s33, 0
      %p375 = por %p373, %p374
      %s377 = sadd.s32 %s376, 1
      %p380 = scmp.eq.s32.totalorder %s27, 1
      %p381 = scmp.ne.s32.totalorder %s376, %s378
      %p382 = scmp.eq.s32.totalorder %s27, 0
      %p383 = por %p381, %p382
      %p384 = scmp.ne.s32.totalorder %s376, %s378
      %p385 = scmp.eq.s32.totalorder %s32, 1
      %p386 = por %p384, %p385
      %p387 = scmp.ne.s32.totalorder %s378, %s379
      %p388 = scmp.eq.s32.totalorder %s32, 0
      %p389 = por %p387, %p388
      %p390 = scmp.ne.s32.totalorder %s378, %s379
      %p391 = scmp.eq.s32.totalorder %s33, 1
      %p392 = por %p390, %p391
      %p394 = scmp.ne.s32.totalorder %s379, %s393
      %p395 = scmp.eq.s32.totalorder %s33, 0
      %p396 = por %p394, %p395
      %s398 = sadd.s32 %s397, 1
      %p401 = scmp.eq.s32.totalorder %s27, 1
      %p402 = scmp.ne.s32.totalorder %s397, %s399
      %p403 = scmp.eq.s32.totalorder %s27, 0
      %p404 = por %p402, %p403
      %p405 = scmp.ne.s32.totalorder %s397, %s399
      %p406 = scmp.eq.s32.totalorder %s32, 1
      %p407 = por %p405, %p406
      %p408 = scmp.ne.s32.totalorder %s399, %s400
      %p409 = scmp.eq.s32.totalorder %s32, 0
      %p410 = por %p408, %p409
      %p411 = scmp.ne.s32.totalorder %s399, %s400
      %p412 = scmp.eq.s32.totalorder %s33, 1
      %p413 = por %p411, %p412
      %p415 = scmp.ne.s32.totalorder %s400, %s414
      %p416 = scmp.eq.s32.totalorder %s33, 0
      %p417 = por %p415, %p416
      %s419 = sadd.s32 %s418, 1
      %p422 = scmp.eq.s32.totalorder %s27, 1
      %p423 = scmp.ne.s32.totalorder %s418, %s420
      %p424 = scmp.eq.s32.totalorder %s27, 0
      %p425 = por %p423, %p424
      %p426 = scmp.ne.s32.totalorder %s418, %s420
      %p427 = scmp.eq.s32.totalorder %s32, 1
      %p428 = por %p426, %p427
      %p429 = scmp.ne.s32.totalorder %s420, %s421
      %p430 = scmp.eq.s32.totalorder %s32, 0
      %p431 = por %p429, %p430
      %p432 = scmp.ne.s32.totalorder %s420, %s421
      %p433 = scmp.eq.s32.totalorder %s33, 1
      %p434 = por %p432, %p433
      %p436 = scmp.ne.s32.totalorder %s421, %s435
      %p437 = scmp.eq.s32.totalorder %s33, 0
      %p438 = por %p436, %p437
      %s440 = sadd.s32 %s439, 1
      %p443 = scmp.eq.s32.totalorder %s27, 1
      %p444 = scmp.ne.s32.totalorder %s439, %s441
      %p445 = scmp.eq.s32.totalorder %s27, 0
      %p446 = por %p444, %p445
      %p447 = scmp.ne.s32.totalorder %s439, %s441
      %p448 = scmp.eq.s32.totalorder %s32, 1
      %p449 = por %p447, %p448
      %p450 = scmp.ne.s32.totalorder %s441, %s442
      %p451 = scmp.eq.s32.totalorder %s32, 0
      %p452 = por %p450, %p451
      %p453 = scmp.ne.s32.totalorder %s441, %s442
      %p454 = scmp.eq.s32.totalorder %s33, 1
      %p455 = por %p453, %p454
      %p457 = scmp.ne.s32.totalorder %s442, %s456
      %p458 = scmp.eq.s32.totalorder %s33, 0
      %p459 = por %p457, %p458
      %s460 = ssub.s32 %s27, %s34
      %p461 = scmp.eq.s32.totalorder %s460, 0
      %s463 = sadd.s32 %s462, 1
      %s464 = scalar_select %p461, %s462, %s463
      %p467 = pneg %p461
      %p468 = scmp.eq.s32.totalorder %s27, 1
      %p469 = por %p467, %p468
      %p470 = scmp.ne.s32.totalorder %s462, %s465
      %p471 = scmp.eq.s32.totalorder %s27, 0
      %p472 = por %p470, %p471
      %p473 = scmp.ne.s32.totalorder %s462, %s465
      %p474 = scmp.eq.s32.totalorder %s32, 1
      %p475 = por %p473, %p474
      %p476 = scmp.ne.s32.totalorder %s465, %s466
      %p477 = scmp.eq.s32.totalorder %s32, 0
      %p478 = por %p476, %p477
      %p479 = scmp.ne.s32.totalorder %s465, %s466
      %p480 = scmp.eq.s32.totalorder %s33, 1
      %p481 = por %p479, %p480
      %p483 = scmp.ne.s32.totalorder %s466, %s482
      %p484 = scmp.eq.s32.totalorder %s33, 0
      %p485 = por %p483, %p484
      %p486 = scmp.le.s32.totalorder 1, %s27
      %p487 = scmp.lt.s32.totalorder %s27, 3
      %p488 = pnand %p486, %p487
      %p489 = pneg %p488
      // Predicated region
      $region9: #{block_forward.1} parent=5 // pred_check
        _
      $region10: #{block_forward.1} parent=5 // pred_check_branch
        %491 = sbr.rel (%p488) target = $region12
      $region11: #{block_forward.1} parent=5 // pred_region
        %s492 = ssub.s32 %s27, 1
        // Predicated region
        $region13: #{block_forward.1} parent=11 // pred_check
          %p493 = pneg %p74
        $region14: #{block_forward.1} parent=11 // pred_check_branch
          %495 = sbr.rel (%p493) target = $region16
        $region15: #{block_forward.1} parent=11 // pred_region
          _
        $region16: #{block_forward.1} parent=11 // pred_fallthru
          _
        // Predicated region
        $region17: #{block_forward.1} parent=11 // pred_check
          %p496 = pneg %p95
        $region18: #{block_forward.1} parent=11 // pred_check_branch
          %498 = sbr.rel (%p496) target = $region20
        $region19: #{block_forward.1} parent=11 // pred_region
          %s500 = ssub.s32 32768, 32768
          %501 = vsyncadd [#allocation3], %s500
          %s502 = sshll.u32 [#allocation2], 4
          %s503 = int_to_ptr.vmem [resolvable:$true] %s502
          %508 = dma.hbm_to_vmem [thread:$0]  %s2, 32768, %s503, [#allocation3], 128, 128, 8
        $region20: #{block_forward.1} parent=11 // pred_fallthru
          _
        // Predicated region
        $region21: #{block_forward.1} parent=11 // pred_check
          %p509 = pneg %p116
        $region22: #{block_forward.1} parent=11 // pred_check_branch
          %511 = sbr.rel (%p509) target = $region24
        $region23: #{block_forward.1} parent=11 // pred_region
          _
        $region24: #{block_forward.1} parent=11 // pred_fallthru
          _
        // Predicated region
        $region25: #{block_forward.1} parent=11 // pred_check
          %p512 = pneg %p137
        $region26: #{block_forward.1} parent=11 // pred_check_branch
          %514 = sbr.rel (%p512) target = $region28
        $region27: #{block_forward.1} parent=11 // pred_region
          _
        $region28: #{block_forward.1} parent=11 // pred_fallthru
          _
        // Predicated region
        $region29: #{block_forward.1} parent=11 // pred_check
          %p515 = pneg %p158
        $region30: #{block_forward.1} parent=11 // pred_check_branch
          %517 = sbr.rel (%p515) target = $region32
        $region31: #{block_forward.1} parent=11 // pred_region
          _
        $region32: #{block_forward.1} parent=11 // pred_fallthru
          _
        // Predicated region
        $region33: #{block_forward.1} parent=11 // pred_check
          %p518 = pneg %p179
        $region34: #{block_forward.1} parent=11 // pred_check_branch
          %520 = sbr.rel (%p518) target = $region36
        $region35: #{block_forward.1} parent=11 // pred_region
          _
        $region36: #{block_forward.1} parent=11 // pred_fallthru
          _
        // Predicated region
        $region37: #{block_forward.1} parent=11 // pred_check
          %p521 = pneg %p200
        $region38: #{block_forward.1} parent=11 // pred_check_branch
          %523 = sbr.rel (%p521) target = $region40
        $region39: #{block_forward.1} parent=11 // pred_region
          _
        $region40: #{block_forward.1} parent=11 // pred_fallthru
          _
        // Predicated region
        $region41: #{block_forward.1} parent=11 // pred_check
          %p524 = pneg %p221
        $region42: #{block_forward.1} parent=11 // pred_check_branch
          %526 = sbr.rel (%p524) target = $region44
        $region43: #{block_forward.1} parent=11 // pred_region
          _
        $region44: #{block_forward.1} parent=11 // pred_fallthru
          _
        // Predicated region
        $region45: #{block_forward.1} parent=11 // pred_check
          %p527 = pneg %p242
        $region46: #{block_forward.1} parent=11 // pred_check_branch
          %529 = sbr.rel (%p527) target = $region48
        $region47: #{block_forward.1} parent=11 // pred_region
          _
        $region48: #{block_forward.1} parent=11 // pred_fallthru
          _
        // Predicated region
        $region49: #{block_forward.1} parent=11 // pred_check
          %p530 = pneg %p263
        $region50: #{block_forward.1} parent=11 // pred_check_branch
          %532 = sbr.rel (%p530) target = $region52
        $region51: #{block_forward.1} parent=11 // pred_region
          _
        $region52: #{block_forward.1} parent=11 // pred_fallthru
          _
        // Predicated region
        $region53: #{block_forward.1} parent=11 // pred_check
          %p533 = pneg %p284
        $region54: #{block_forward.1} parent=11 // pred_check_branch
          %535 = sbr.rel (%p533) target = $region56
        $region55: #{block_forward.1} parent=11 // pred_region
          _
        $region56: #{block_forward.1} parent=11 // pred_fallthru
          _
        // Predicated region
        $region57: #{block_forward.1} parent=11 // pred_check
          %p536 = pneg %p305
        $region58: #{block_forward.1} parent=11 // pred_check_branch
          %538 = sbr.rel (%p536) target = $region60
        $region59: #{block_forward.1} parent=11 // pred_region
          _
        $region60: #{block_forward.1} parent=11 // pred_fallthru
          _
        // Predicated region
        $region61: #{block_forward.1} parent=11 // pred_check
          %p539 = pneg %p326
        $region62: #{block_forward.1} parent=11 // pred_check_branch
          %541 = sbr.rel (%p539) target = $region64
        $region63: #{block_forward.1} parent=11 // pred_region
          _
        $region64: #{block_forward.1} parent=11 // pred_fallthru
          _
        // Predicated region
        $region65: #{block_forward.1} parent=11 // pred_check
          %p542 = pneg %p347
        $region66: #{block_forward.1} parent=11 // pred_check_branch
          %544 = sbr.rel (%p542) target = $region68
        $region67: #{block_forward.1} parent=11 // pred_region
          _
        $region68: #{block_forward.1} parent=11 // pred_fallthru
          _
        // Predicated region
        $region69: #{block_forward.1} parent=11 // pred_check
          %p545 = pneg %p368
        $region70: #{block_forward.1} parent=11 // pred_check_branch
          %547 = sbr.rel (%p545) target = $region72
        $region71: #{block_forward.1} parent=11 // pred_region
          _
        $region72: #{block_forward.1} parent=11 // pred_fallthru
          _
        // Predicated region
        $region73: #{block_forward.1} parent=11 // pred_check
          %p548 = pneg %p389
        $region74: #{block_forward.1} parent=11 // pred_check_branch
          %550 = sbr.rel (%p548) target = $region76
        $region75: #{block_forward.1} parent=11 // pred_region
          _
        $region76: #{block_forward.1} parent=11 // pred_fallthru
          _
        // Predicated region
        $region77: #{block_forward.1} parent=11 // pred_check
          %p551 = pneg %p410
        $region78: #{block_forward.1} parent=11 // pred_check_branch
          %553 = sbr.rel (%p551) target = $region80
        $region79: #{block_forward.1} parent=11 // pred_region
          _
        $region80: #{block_forward.1} parent=11 // pred_fallthru
          _
        // Predicated region
        $region81: #{block_forward.1} parent=11 // pred_check
          %p554 = pneg %p431
        $region82: #{block_forward.1} parent=11 // pred_check_branch
          %556 = sbr.rel (%p554) target = $region84
        $region83: #{block_forward.1} parent=11 // pred_region
          _
        $region84: #{block_forward.1} parent=11 // pred_fallthru
          _
        // Predicated region
        $region85: #{block_forward.1} parent=11 // pred_check
          %p557 = pneg %p452
        $region86: #{block_forward.1} parent=11 // pred_check_branch
          %559 = sbr.rel (%p557) target = $region88
        $region87: #{block_forward.1} parent=11 // pred_region
          _
        $region88: #{block_forward.1} parent=11 // pred_fallthru
          _
      $region12: #{block_forward.1} parent=5 // pred_fallthru
        _
      %p560 = scmp.lt.s32.totalorder %s27, 2
      // Predicated region
      $region89: #{block_forward.1} parent=5 // pred_check
        %p561 = pneg %p560
      $region90: #{block_forward.1} parent=5 // pred_check_branch
        %563 = sbr.rel (%p561) target = $region92
      $region91: #{block_forward.1} parent=5 // pred_region
        // Predicated region
        $region93: #{block_forward.1} parent=91 // pred_check
          %p564 = pneg %p47
        $region94: #{block_forward.1} parent=91 // pred_check_branch
          %566 = sbr.rel (%p564) target = $region96
        $region95: #{block_forward.1} parent=91 // pred_region
          %p567 = scmp.lt.s32.totalorder %s27, 1
          %s568 = scalar_select %p567, %s27, 1
          %s569 = smul.addr %s568, 3
          %s570 = smul.addr %s569, 8
          %s571 = scalar_lea.vmem %s0, %s570
        $region96: #{block_forward.1} parent=91 // pred_fallthru
          _
      $region92: #{block_forward.1} parent=5 // pred_fallthru
        _
      %p572 = scmp.le.s32.totalorder 1, %s27
      %p573 = scmp.lt.s32.totalorder %s27, 3
      %p574 = pnand %p572, %p573
      %p575 = pneg %p574
      // Predicated region
      $region97: #{block_forward.1} parent=5 // pred_check
        _
      $region98: #{block_forward.1} parent=5 // pred_check_branch
        %577 = sbr.rel (%p574) target = $region100
      $region99: #{block_forward.1} parent=5 // pred_region
        %s578 = ssub.s32 %s27, 1
        // Predicated region
        $region101: #{block_forward.1} parent=99 // pred_check
          %p579 = pneg %p95
        $region102: #{block_forward.1} parent=99 // pred_check_branch
          %581 = sbr.rel (%p579) target = $region104
        $region103: #{block_forward.1} parent=99 // pred_region
          %582 = dma.done [#allocation3], 32768
        $region104: #{block_forward.1} parent=99 // pred_fallthru
          _
        %p583 = scmp.lt.s32.totalorder %s32, 1
        %s584 = scalar_select %p583, %s32, 1
        %s585 = smul.addr %s584, 3
        %s586 = smul.addr %s585, 8
        %s587 = scalar_lea.vmem %s0, %s586
        %p588 = pneg %p53
        %p589 = pneg %p50
        %p590 = pneg %p74
        %p591 = pneg %p71
        %p592 = pneg %p95
        %p593 = pneg %p92
        %p594 = pneg %p116
        %p595 = pneg %p113
        %p596 = pneg %p137
        %p597 = pneg %p134
        %p598 = pneg %p158
        %p599 = pneg %p155
        %p600 = pneg %p179
        %p601 = pneg %p176
        %p602 = pneg %p200
        %p603 = pneg %p197
        %p604 = pneg %p221
        %p605 = pneg %p218
        %p606 = pneg %p242
        %p607 = pneg %p239
        %p608 = pneg %p263
        %p609 = pneg %p260
        %p610 = pneg %p284
        %p611 = pneg %p281
        %p612 = pneg %p305
        %p613 = pneg %p302
        %p614 = pneg %p326
        %p615 = pneg %p323
        %p616 = pneg %p347
        %p617 = pneg %p344
        %p618 = pneg %p368
        %p619 = pneg %p365
        %p620 = pneg %p389
        %p621 = pneg %p386
        %p622 = pneg %p410
        %p623 = pneg %p407
        %p624 = pneg %p431
        %p625 = pneg %p428
        %p626 = pneg %p452
        %p627 = pneg %p449
        %p628 = pneg %p478
        %p629 = pneg %p475
        %p630 = scmp.lt.s32.totalorder %s32, 1
        %s631 = scalar_select %p630, %s32, 1
        %s632 = smul.addr %s631, 3
        %s633 = smul.addr %s632, 8
        %s634 = scalar_lea.vmem %s20, %s633
        %p635 = scmp.lt.s32.totalorder %s32, 1
        %s636 = scalar_select %p635, %s32, 1
        %s637 = smul.addr %s636, 3
        %s638 = smul.addr %s637, 8
        %s639 = scalar_lea.vmem %s0, %s638
        %p640 = scmp.lt.s32.totalorder %s32, 1
        %s641 = scalar_select %p640, %s32, 1
        %s642 = smul.addr %s641, 3
        %s643 = smul.addr %s642, 8
        %s644 = scalar_lea.vmem %s20, %s643
        %v646 = vld [vmem:[%s639] sm:$0xff]
        %v647 = vld [vmem:[%s639 + $0x8] sm:$0xff]
        %v648 = vld [vmem:[%s639 + $0x10] sm:$0xff]
        %v649 = vld [vmem:[%s1] sm:$0xff]
        %v650 = vrot.slane %v646, 4
        %v651 = vadd.f32 %v646, %v650
        %v652 = vrot.slane %v651, 2
        %v653 = vadd.f32 %v651, %v652
        %v654 = vrot.slane %v653, 1
        %v655 = vadd.f32 %v653, %v654
        %v656 = vrot.slane %v647, 4
        %v657 = vadd.f32 %v647, %v656
        %v658 = vrot.slane %v657, 2
        %v659 = vadd.f32 %v657, %v658
        %v660 = vrot.slane %v659, 1
        %v661 = vadd.f32 %v659, %v660
        %vm662 = vcmask 523264
        %v663 = vsel %vm662, %v648, 0.0
        %v664 = vrot.slane %v663, 4
        %v665 = vadd.f32 %v663, %v664
        %v666 = vrot.slane %v665, 2
        %v667 = vadd.f32 %v665, %v666
        %v668 = vrot.slane %v667, 1
        %v669 = vadd.f32 %v667, %v668
        %v670 = vrcp.pop 8.0
        %v671 = vmul.f32 %v655, %v670
        %v672 = vmul.f32 %v661, %v670
        %v673 = vmul.f32 %v669, %v670
        %v674 = vmul.f32 %v646, %v646
        %v675 = vmul.f32 %v647, %v647
        %v676 = vmul.f32 %v648, %v648
        %v677 = vrot.slane %v674, 4
        %v678 = vadd.f32 %v674, %v677
        %v679 = vrot.slane %v678, 2
        %v680 = vadd.f32 %v678, %v679
        %v681 = vrot.slane %v680, 1
        %v682 = vadd.f32 %v680, %v681
        %v683 = vrot.slane %v675, 4
        %v684 = vadd.f32 %v675, %v683
        %v685 = vrot.slane %v684, 2
        %v686 = vadd.f32 %v684, %v685
        %v687 = vrot.slane %v686, 1
        %v688 = vadd.f32 %v686, %v687
        %v689 = vsel %vm662, %v676, 0.0
        %v690 = vrot.slane %v689, 4
        %v691 = vadd.f32 %v689, %v690
        %v692 = vrot.slane %v691, 2
        %v693 = vadd.f32 %v691, %v692
        %v694 = vrot.slane %v693, 1
        %v695 = vadd.f32 %v693, %v694
        %v696 = vmul.f32 %v682, %v670
        %v697 = vmul.f32 %v688, %v670
        %v698 = vmul.f32 %v695, %v670
        %v699 = vmul.f32 %v671, %v671
        %v700 = vmul.f32 %v672, %v672
        %v701 = vmul.f32 %v673, %v673
        %v702 = vsub.f32 %v696, %v699
        %v703 = vsub.f32 %v697, %v700
        %v704 = vsub.f32 %v698, %v701
        %v705 = vsub.f32 %v646, %v671
        %v706 = vsub.f32 %v647, %v672
        %v707 = vsub.f32 %v648, %v673
        %v708 = vadd.f32 %v702, 1e-05
        %v709 = vadd.f32 %v703, 1e-05
        %v710 = vadd.f32 %v704, 1e-05
        %v711 = vrsqrt.pop %v708
        %v712 = vrsqrt.pop %v709
        %v713 = vrsqrt.pop %v710
        %v714 = vmul.f32 %v705, %v711
        %v715 = vmul.f32 %v706, %v712
        %v716 = vmul.f32 %v707, %v713
        %718 = vset.pattern.permute.xlu0 0
        %719 = vperm.xlu0 %718, %v649
        %v720 = vpop.permute.xlu0 %719
        %v722 = vmul.f32 %v714, %v720
        %v723 = vmul.f32 %v715, %v720
        %v724 = vmul.f32 %v716, %v720
        %725 = vset.pattern.permute.xlu0 1
        %726 = vperm.xlu0 %725, %v649
        %v727 = vpop.permute.xlu0 %726
        %v729 = vadd.f32 %v722, %v727
        %v730 = vadd.f32 %v723, %v727
        %v731 = vadd.f32 %v724, %v727
        %v732 = vld [vmem:[#allocation2] sm:$0xff]
        %v733 = vld [vmem:[#allocation2 + $0x8] sm:$0xff]
        %v734 = vld [vmem:[#allocation2 + $0x10] sm:$0xff]
        %v735 = vld [vmem:[#allocation2 + $0x18] sm:$0xff]
        %v736 = vld [vmem:[#allocation2 + $0x20] sm:$0xff]
        %v737 = vld [vmem:[#allocation2 + $0x28] sm:$0xff]
        %v738 = vld [vmem:[#allocation2 + $0x30] sm:$0xff]
        %v739 = vld [vmem:[#allocation2 + $0x38] sm:$0xff]
        %v740 = vld [vmem:[#allocation2 + $0x40] sm:$0xff]
        %v741 = vld [vmem:[#allocation2 + $0x48] sm:$0xff]
        %v742 = vld [vmem:[#allocation2 + $0x50] sm:$0xff]
        %v743 = vld [vmem:[#allocation2 + $0x58] sm:$0xff]
        %v744 = vld [vmem:[#allocation2 + $0x60] sm:$0xff]
        %v745 = vld [vmem:[#allocation2 + $0x68] sm:$0xff]
        %v746 = vld [vmem:[#allocation2 + $0x70] sm:$0xff]
        %v747 = vld [vmem:[#allocation2 + $0x78] sm:$0xff]
        %v748 = vld [vmem:[#allocation2 + $0x80] sm:$0xff]
        %v749 = vld [vmem:[#allocation2 + $0x88] sm:$0xff]
        %v750 = vld [vmem:[#allocation2 + $0x90] sm:$0xff]
        %v751 = vld [vmem:[#allocation2 + $0x98] sm:$0xff]
        %v752 = vld [vmem:[#allocation2 + $0xa0] sm:$0xff]
        %v753 = vld [vmem:[#allocation2 + $0xa8] sm:$0xff]
        %v754 = vld [vmem:[#allocation2 + $0xb0] sm:$0xff]
        %v755 = vld [vmem:[#allocation2 + $0xb8] sm:$0xff]
        %v756 = vld [vmem:[#allocation2 + $0xc0] sm:$0xff]
        %v757 = vld [vmem:[#allocation2 + $0xc8] sm:$0xff]
        %v758 = vld [vmem:[#allocation2 + $0xd0] sm:$0xff]
        %v759 = vld [vmem:[#allocation2 + $0xd8] sm:$0xff]
        %v760 = vld [vmem:[#allocation2 + $0xe0] sm:$0xff]
        %v761 = vld [vmem:[#allocation2 + $0xe8] sm:$0xff]
        %v762 = vld [vmem:[#allocation2 + $0xf0] sm:$0xff]
        %v763 = vld [vmem:[#allocation2 + $0xf8] sm:$0xff]
        %v764 = vld [vmem:[#allocation2 + $0x100] sm:$0xff]
        %v765 = vld [vmem:[#allocation2 + $0x108] sm:$0xff]
        %v766 = vld [vmem:[#allocation2 + $0x110] sm:$0xff]
        %v767 = vld [vmem:[#allocation2 + $0x118] sm:$0xff]
        %v768 = vld [vmem:[#allocation2 + $0x120] sm:$0xff]
        %v769 = vld [vmem:[#allocation2 + $0x128] sm:$0xff]
        %v770 = vld [vmem:[#allocation2 + $0x130] sm:$0xff]
        %v771 = vld [vmem:[#allocation2 + $0x138] sm:$0xff]
        %v772 = vld [vmem:[#allocation2 + $0x140] sm:$0xff]
        %v773 = vld [vmem:[#allocation2 + $0x148] sm:$0xff]
        %v774 = vld [vmem:[#allocation2 + $0x150] sm:$0xff]
        %v775 = vld [vmem:[#allocation2 + $0x158] sm:$0xff]
        %v776 = vld [vmem:[#allocation2 + $0x160] sm:$0xff]
        %v777 = vld [vmem:[#allocation2 + $0x168] sm:$0xff]
        %v778 = vld [vmem:[#allocation2 + $0x170] sm:$0xff]
        %v779 = vld [vmem:[#allocation2 + $0x178] sm:$0xff]
        %v780 = vld [vmem:[#allocation2 + $0x180] sm:$0xff]
        %v781 = vld [vmem:[#allocation2 + $0x188] sm:$0xff]
        %v782 = vld [vmem:[#allocation2 + $0x190] sm:$0xff]
        %v783 = vld [vmem:[#allocation2 + $0x198] sm:$0xff]
        %v784 = vld [vmem:[#allocation2 + $0x1a0] sm:$0xff]
        %v785 = vld [vmem:[#allocation2 + $0x1a8] sm:$0xff]
        %v786 = vld [vmem:[#allocation2 + $0x1b0] sm:$0xff]
        %v787 = vld [vmem:[#allocation2 + $0x1b8] sm:$0xff]
        %v788 = vld [vmem:[#allocation2 + $0x1c0] sm:$0xff]
        %v789 = vld [vmem:[#allocation2 + $0x1c8] sm:$0xff]
        %v790 = vld [vmem:[#allocation2 + $0x1d0] sm:$0xff]
        %v791 = vld [vmem:[#allocation2 + $0x1d8] sm:$0xff]
        %v792 = vld [vmem:[#allocation2 + $0x1e0] sm:$0xff]
        %v793 = vld [vmem:[#allocation2 + $0x1e8] sm:$0xff]
        %v794 = vld [vmem:[#allocation2 + $0x1f0] sm:$0xff]
        %v795 = vld [vmem:[#allocation2 + $0x1f8] sm:$0xff]
        %v796 = vld [vmem:[#allocation2 + $0x200] sm:$0xff]
        %v797 = vld [vmem:[#allocation2 + $0x208] sm:$0xff]
        %v798 = vld [vmem:[#allocation2 + $0x210] sm:$0xff]
        %v799 = vld [vmem:[#allocation2 + $0x218] sm:$0xff]
        %v800 = vld [vmem:[#allocation2 + $0x220] sm:$0xff]
        %v801 = vld [vmem:[#allocation2 + $0x228] sm:$0xff]
        %v802 = vld [vmem:[#allocation2 + $0x230] sm:$0xff]
        %v803 = vld [vmem:[#allocation2 + $0x238] sm:$0xff]
        %v804 = vld [vmem:[#allocation2 + $0x240] sm:$0xff]
        %v805 = vld [vmem:[#allocation2 + $0x248] sm:$0xff]
        %v806 = vld [vmem:[#allocation2 + $0x250] sm:$0xff]
        %v807 = vld [vmem:[#allocation2 + $0x258] sm:$0xff]
        %v808 = vld [vmem:[#allocation2 + $0x260] sm:$0xff]
        %v809 = vld [vmem:[#allocation2 + $0x268] sm:$0xff]
        %v810 = vld [vmem:[#allocation2 + $0x270] sm:$0xff]
        %v811 = vld [vmem:[#allocation2 + $0x278] sm:$0xff]
        %v812 = vld [vmem:[#allocation2 + $0x280] sm:$0xff]
        %v813 = vld [vmem:[#allocation2 + $0x288] sm:$0xff]
        %v814 = vld [vmem:[#allocation2 + $0x290] sm:$0xff]
        %v815 = vld [vmem:[#allocation2 + $0x298] sm:$0xff]
        %v816 = vld [vmem:[#allocation2 + $0x2a0] sm:$0xff]
        %v817 = vld [vmem:[#allocation2 + $0x2a8] sm:$0xff]
        %v818 = vld [vmem:[#allocation2 + $0x2b0] sm:$0xff]
        %v819 = vld [vmem:[#allocation2 + $0x2b8] sm:$0xff]
        %v820 = vld [vmem:[#allocation2 + $0x2c0] sm:$0xff]
        %v821 = vld [vmem:[#allocation2 + $0x2c8] sm:$0xff]
        %v822 = vld [vmem:[#allocation2 + $0x2d0] sm:$0xff]
        %v823 = vld [vmem:[#allocation2 + $0x2d8] sm:$0xff]
        %v824 = vld [vmem:[#allocation2 + $0x2e0] sm:$0xff]
        %v825 = vld [vmem:[#allocation2 + $0x2e8] sm:$0xff]
        %v826 = vld [vmem:[#allocation2 + $0x2f0] sm:$0xff]
        %v827 = vld [vmem:[#allocation2 + $0x2f8] sm:$0xff]
        %v828 = vld [vmem:[#allocation2 + $0x300] sm:$0xff]
        %v829 = vld [vmem:[#allocation2 + $0x308] sm:$0xff]
        %v830 = vld [vmem:[#allocation2 + $0x310] sm:$0xff]
        %v831 = vld [vmem:[#allocation2 + $0x318] sm:$0xff]
        %v832 = vld [vmem:[#allocation2 + $0x320] sm:$0xff]
        %v833 = vld [vmem:[#allocation2 + $0x328] sm:$0xff]
        %v834 = vld [vmem:[#allocation2 + $0x330] sm:$0xff]
        %v835 = vld [vmem:[#allocation2 + $0x338] sm:$0xff]
        %v836 = vld [vmem:[#allocation2 + $0x340] sm:$0xff]
        %v837 = vld [vmem:[#allocation2 + $0x348] sm:$0xff]
        %v838 = vld [vmem:[#allocation2 + $0x350] sm:$0xff]
        %v839 = vld [vmem:[#allocation2 + $0x358] sm:$0xff]
        %v840 = vld [vmem:[#allocation2 + $0x360] sm:$0xff]
        %v841 = vld [vmem:[#allocation2 + $0x368] sm:$0xff]
        %v842 = vld [vmem:[#allocation2 + $0x370] sm:$0xff]
        %v843 = vld [vmem:[#allocation2 + $0x378] sm:$0xff]
        %v844 = vld [vmem:[#allocation2 + $0x380] sm:$0xff]
        %v845 = vld [vmem:[#allocation2 + $0x388] sm:$0xff]
        %v846 = vld [vmem:[#allocation2 + $0x390] sm:$0xff]
        %v847 = vld [vmem:[#allocation2 + $0x398] sm:$0xff]
        %v848 = vld [vmem:[#allocation2 + $0x3a0] sm:$0xff]
        %v849 = vld [vmem:[#allocation2 + $0x3a8] sm:$0xff]
        %v850 = vld [vmem:[#allocation2 + $0x3b0] sm:$0xff]
        %v851 = vld [vmem:[#allocation2 + $0x3b8] sm:$0xff]
        %v852 = vld [vmem:[#allocation2 + $0x3c0] sm:$0xff]
        %v853 = vld [vmem:[#allocation2 + $0x3c8] sm:$0xff]
        %v854 = vld [vmem:[#allocation2 + $0x3d0] sm:$0xff]
        %v855 = vld [vmem:[#allocation2 + $0x3d8] sm:$0xff]
        %v856 = vld [vmem:[#allocation2 + $0x3e0] sm:$0xff]
        %v857 = vld [vmem:[#allocation2 + $0x3e8] sm:$0xff]
        %v858 = vld [vmem:[#allocation2 + $0x3f0] sm:$0xff]
        %v859 = vld [vmem:[#allocation2 + $0x3f8] sm:$0xff]
        %v860 = vld [vmem:[#allocation2 + $0x400] sm:$0xff]
        %v861 = vld [vmem:[#allocation2 + $0x408] sm:$0xff]
        %v862 = vld [vmem:[#allocation2 + $0x410] sm:$0xff]
        %v863 = vld [vmem:[#allocation2 + $0x418] sm:$0xff]
        %v864 = vld [vmem:[#allocation2 + $0x420] sm:$0xff]
        %v865 = vld [vmem:[#allocation2 + $0x428] sm:$0xff]
        %v866 = vld [vmem:[#allocation2 + $0x430] sm:$0xff]
        %v867 = vld [vmem:[#allocation2 + $0x438] sm:$0xff]
        %v868 = vld [vmem:[#allocation2 + $0x440] sm:$0xff]
        %v869 = vld [vmem:[#allocation2 + $0x448] sm:$0xff]
        %v870 = vld [vmem:[#allocation2 + $0x450] sm:$0xff]
        %v871 = vld [vmem:[#allocation2 + $0x458] sm:$0xff]
        %v872 = vld [vmem:[#allocation2 + $0x460] sm:$0xff]
        %v873 = vld [vmem:[#allocation2 + $0x468] sm:$0xff]
        %v874 = vld [vmem:[#allocation2 + $0x470] sm:$0xff]
        %v875 = vld [vmem:[#allocation2 + $0x478] sm:$0xff]
        %v876 = vld [vmem:[#allocation2 + $0x480] sm:$0xff]
        %v877 = vld [vmem:[#allocation2 + $0x488] sm:$0xff]
        %v878 = vld [vmem:[#allocation2 + $0x490] sm:$0xff]
        %v879 = vld [vmem:[#allocation2 + $0x498] sm:$0xff]
        %v880 = vld [vmem:[#allocation2 + $0x4a0] sm:$0xff]
        %v881 = vld [vmem:[#allocation2 + $0x4a8] sm:$0xff]
        %v882 = vld [vmem:[#allocation2 + $0x4b0] sm:$0xff]
        %v883 = vld [vmem:[#allocation2 + $0x4b8] sm:$0xff]
        %v884 = vld [vmem:[#allocation2 + $0x4c0] sm:$0xff]
        %v885 = vld [vmem:[#allocation2 + $0x4c8] sm:$0xff]
        %v886 = vld [vmem:[#allocation2 + $0x4d0] sm:$0xff]
        %v887 = vld [vmem:[#allocation2 + $0x4d8] sm:$0xff]
        %v888 = vld [vmem:[#allocation2 + $0x4e0] sm:$0xff]
        %v889 = vld [vmem:[#allocation2 + $0x4e8] sm:$0xff]
        %v890 = vld [vmem:[#allocation2 + $0x4f0] sm:$0xff]
        %v891 = vld [vmem:[#allocation2 + $0x4f8] sm:$0xff]
        %v892 = vld [vmem:[#allocation2 + $0x500] sm:$0xff]
        %v893 = vld [vmem:[#allocation2 + $0x508] sm:$0xff]
        %v894 = vld [vmem:[#allocation2 + $0x510] sm:$0xff]
        %v895 = vld [vmem:[#allocation2 + $0x518] sm:$0xff]
        %v896 = vld [vmem:[#allocation2 + $0x520] sm:$0xff]
        %v897 = vld [vmem:[#allocation2 + $0x528] sm:$0xff]
        %v898 = vld [vmem:[#allocation2 + $0x530] sm:$0xff]
        %v899 = vld [vmem:[#allocation2 + $0x538] sm:$0xff]
        %v900 = vld [vmem:[#allocation2 + $0x540] sm:$0xff]
        %v901 = vld [vmem:[#allocation2 + $0x548] sm:$0xff]
        %v902 = vld [vmem:[#allocation2 + $0x550] sm:$0xff]
        %v903 = vld [vmem:[#allocation2 + $0x558] sm:$0xff]
        %v904 = vld [vmem:[#allocation2 + $0x560] sm:$0xff]
        %v905 = vld [vmem:[#allocation2 + $0x568] sm:$0xff]
        %v906 = vld [vmem:[#allocation2 + $0x570] sm:$0xff]
        %v907 = vld [vmem:[#allocation2 + $0x578] sm:$0xff]
        %v908 = vld [vmem:[#allocation2 + $0x580] sm:$0xff]
        %v909 = vld [vmem:[#allocation2 + $0x588] sm:$0xff]
        %v910 = vld [vmem:[#allocation2 + $0x590] sm:$0xff]
        %v911 = vld [vmem:[#allocation2 + $0x598] sm:$0xff]
        %v912 = vld [vmem:[#allocation2 + $0x5a0] sm:$0xff]
        %v913 = vld [vmem:[#allocation2 + $0x5a8] sm:$0xff]
        %v914 = vld [vmem:[#allocation2 + $0x5b0] sm:$0xff]
        %v915 = vld [vmem:[#allocation2 + $0x5b8] sm:$0xff]
        %v916 = vld [vmem:[#allocation2 + $0x5c0] sm:$0xff]
        %v917 = vld [vmem:[#allocation2 + $0x5c8] sm:$0xff]
        %v918 = vld [vmem:[#allocation2 + $0x5d0] sm:$0xff]
        %v919 = vld [vmem:[#allocation2 + $0x5d8] sm:$0xff]
        %v920 = vld [vmem:[#allocation2 + $0x5e0] sm:$0xff]
        %v921 = vld [vmem:[#allocation2 + $0x5e8] sm:$0xff]
        %v922 = vld [vmem:[#allocation2 + $0x5f0] sm:$0xff]
        %v923 = vld [vmem:[#allocation2 + $0x5f8] sm:$0xff]
        %v924 = vld [vmem:[#allocation2 + $0x600] sm:$0xff]
        %v925 = vld [vmem:[#allocation2 + $0x608] sm:$0xff]
        %v926 = vld [vmem:[#allocation2 + $0x610] sm:$0xff]
        %v927 = vld [vmem:[#allocation2 + $0x618] sm:$0xff]
        %v928 = vld [vmem:[#allocation2 + $0x620] sm:$0xff]
        %v929 = vld [vmem:[#allocation2 + $0x628] sm:$0xff]
        %v930 = vld [vmem:[#allocation2 + $0x630] sm:$0xff]
        %v931 = vld [vmem:[#allocation2 + $0x638] sm:$0xff]
        %v932 = vld [vmem:[#allocation2 + $0x640] sm:$0xff]
        %v933 = vld [vmem:[#allocation2 + $0x648] sm:$0xff]
        %v934 = vld [vmem:[#allocation2 + $0x650] sm:$0xff]
        %v935 = vld [vmem:[#allocation2 + $0x658] sm:$0xff]
        %v936 = vld [vmem:[#allocation2 + $0x660] sm:$0xff]
        %v937 = vld [vmem:[#allocation2 + $0x668] sm:$0xff]
        %v938 = vld [vmem:[#allocation2 + $0x670] sm:$0xff]
        %v939 = vld [vmem:[#allocation2 + $0x678] sm:$0xff]
        %v940 = vld [vmem:[#allocation2 + $0x680] sm:$0xff]
        %v941 = vld [vmem:[#allocation2 + $0x688] sm:$0xff]
        %v942 = vld [vmem:[#allocation2 + $0x690] sm:$0xff]
        %v943 = vld [vmem:[#allocation2 + $0x698] sm:$0xff]
        %v944 = vld [vmem:[#allocation2 + $0x6a0] sm:$0xff]
        %v945 = vld [vmem:[#allocation2 + $0x6a8] sm:$0xff]
        %v946 = vld [vmem:[#allocation2 + $0x6b0] sm:$0xff]
        %v947 = vld [vmem:[#allocation2 + $0x6b8] sm:$0xff]
        %v948 = vld [vmem:[#allocation2 + $0x6c0] sm:$0xff]
        %v949 = vld [vmem:[#allocation2 + $0x6c8] sm:$0xff]
        %v950 = vld [vmem:[#allocation2 + $0x6d0] sm:$0xff]
        %v951 = vld [vmem:[#allocation2 + $0x6d8] sm:$0xff]
        %v952 = vld [vmem:[#allocation2 + $0x6e0] sm:$0xff]
        %v953 = vld [vmem:[#allocation2 + $0x6e8] sm:$0xff]
        %v954 = vld [vmem:[#allocation2 + $0x6f0] sm:$0xff]
        %v955 = vld [vmem:[#allocation2 + $0x6f8] sm:$0xff]
        %v956 = vld [vmem:[#allocation2 + $0x700] sm:$0xff]
        %v957 = vld [vmem:[#allocation2 + $0x708] sm:$0xff]
        %v958 = vld [vmem:[#allocation2 + $0x710] sm:$0xff]
        %v959 = vld [vmem:[#allocation2 + $0x718] sm:$0xff]
        %v960 = vld [vmem:[#allocation2 + $0x720] sm:$0xff]
        %v961 = vld [vmem:[#allocation2 + $0x728] sm:$0xff]
        %v962 = vld [vmem:[#allocation2 + $0x730] sm:$0xff]
        %v963 = vld [vmem:[#allocation2 + $0x738] sm:$0xff]
        %v964 = vld [vmem:[#allocation2 + $0x740] sm:$0xff]
        %v965 = vld [vmem:[#allocation2 + $0x748] sm:$0xff]
        %v966 = vld [vmem:[#allocation2 + $0x750] sm:$0xff]
        %v967 = vld [vmem:[#allocation2 + $0x758] sm:$0xff]
        %v968 = vld [vmem:[#allocation2 + $0x760] sm:$0xff]
        %v969 = vld [vmem:[#allocation2 + $0x768] sm:$0xff]
        %v970 = vld [vmem:[#allocation2 + $0x770] sm:$0xff]
        %v971 = vld [vmem:[#allocation2 + $0x778] sm:$0xff]
        %v972 = vld [vmem:[#allocation2 + $0x780] sm:$0xff]
        %v973 = vld [vmem:[#allocation2 + $0x788] sm:$0xff]
        %v974 = vld [vmem:[#allocation2 + $0x790] sm:$0xff]
        %v975 = vld [vmem:[#allocation2 + $0x798] sm:$0xff]
        %v976 = vld [vmem:[#allocation2 + $0x7a0] sm:$0xff]
        %v977 = vld [vmem:[#allocation2 + $0x7a8] sm:$0xff]
        %v978 = vld [vmem:[#allocation2 + $0x7b0] sm:$0xff]
        %v979 = vld [vmem:[#allocation2 + $0x7b8] sm:$0xff]
        %v980 = vld [vmem:[#allocation2 + $0x7c0] sm:$0xff]
        %v981 = vld [vmem:[#allocation2 + $0x7c8] sm:$0xff]
        %v982 = vld [vmem:[#allocation2 + $0x7d0] sm:$0xff]
        %v983 = vld [vmem:[#allocation2 + $0x7d8] sm:$0xff]
        %v984 = vld [vmem:[#allocation2 + $0x7e0] sm:$0xff]
        %v985 = vld [vmem:[#allocation2 + $0x7e8] sm:$0xff]
        %v986 = vld [vmem:[#allocation2 + $0x7f0] sm:$0xff]
        %v987 = vld [vmem:[#allocation2 + $0x7f8] sm:$0xff]
        %v988 = vld [vmem:[%s4] sm:$0xf]
        %v989 = vld [vmem:[%s5] sm:$0xff]
        %v990 = vld [vmem:[%s8] sm:$0xf]
        %v991 = vld [vmem:[%s8 + $0x4] sm:$0xf]
        %v992 = vld [vmem:[%s8 + $0x8] sm:$0xf]
        %v993 = vld [vmem:[%s8 + $0xc] sm:$0xf]
        %v994 = vld [vmem:[%s9] sm:$0xff]
        %v995 = vld [vmem:[%s9 + $0x8] sm:$0xff]
        %v996 = vld [vmem:[%s9 + $0x10] sm:$0xff]
        %v997 = vld [vmem:[%s9 + $0x18] sm:$0xff]
        %v998 = vld [vmem:[%s10] sm:$0xf]
        %v999 = vld [vmem:[%s11] sm:$0xff]
        %v1000 = vrot.slane %v729, 4
        %v1001 = vadd.f32 %v729, %v1000
        %v1002 = vrot.slane %v1001, 2
        %v1003 = vadd.f32 %v1001, %v1002
        %v1004 = vrot.slane %v1003, 1
        %v1005 = vadd.f32 %v1003, %v1004
        %v1006 = vrot.slane %v730, 4
        %v1007 = vadd.f32 %v730, %v1006
        %v1008 = vrot.slane %v1007, 2
        %v1009 = vadd.f32 %v1007, %v1008
        %v1010 = vrot.slane %v1009, 1
        %v1011 = vadd.f32 %v1009, %v1010
        %v1012 = vmul.f32 %v1005, %v670
        %v1013 = vmul.f32 %v1011, %v670
        %v1014 = vmul.f32 %v729, %v729
        %v1015 = vmul.f32 %v730, %v730
        %v1016 = vrot.slane %v1014, 4
        %v1017 = vadd.f32 %v1014, %v1016
        %v1018 = vrot.slane %v1017, 2
        %v1019 = vadd.f32 %v1017, %v1018
        %v1020 = vrot.slane %v1019, 1
        %v1021 = vadd.f32 %v1019, %v1020
        %v1022 = vrot.slane %v1015, 4
        %v1023 = vadd.f32 %v1015, %v1022
        %v1024 = vrot.slane %v1023, 2
        %v1025 = vadd.f32 %v1023, %v1024
        %v1026 = vrot.slane %v1025, 1
        %v1027 = vadd.f32 %v1025, %v1026
        %v1028 = vmul.f32 %v1021, %v670
        %v1029 = vmul.f32 %v1027, %v670
        %v1030 = vmul.f32 %v1012, %v1012
        %v1031 = vmul.f32 %v1013, %v1013
        %v1032 = vsub.f32 %v1028, %v1030
        %v1033 = vsub.f32 %v1029, %v1031
        %v1034 = vsub.f32 %v729, %v1012
        %v1035 = vsub.f32 %v730, %v1013
        %v1036 = vadd.f32 %v1032, 1e-05
        %v1037 = vadd.f32 %v1033, 1e-05
        %v1038 = vrsqrt.pop %v1036
        %v1039 = vrsqrt.pop %v1037
        %v1040 = vmul.f32 %v1034, %v1038
        %v1041 = vmul.f32 %v1035, %v1039
        %1042 = vset.pattern.permute.xlu0 4
        %1043 = vperm.xlu0 %1042, %v649
        %v1044 = vpop.permute.xlu0 %1043
        %v1046 = vmul.f32 %v1040, %v1044
        %v1047 = vmul.f32 %v1041, %v1044
        %1048 = vset.pattern.permute.xlu0 5
        %1049 = vperm.xlu0 %1048, %v649
        %v1050 = vpop.permute.xlu0 %1049
        %v1052 = vadd.f32 %v1046, %v1050
        %v1053 = vadd.f32 %v1047, %v1050
        %v1054 = vpack.c.bf16 %v1052, %v1052
        %v1055 = vpack.c.bf16 %v1053, %v1053
        %v1056 = vlaneseq
        %v1057 = vshrl.u32 %v1056, 7
        %v1058 = vlaneseq
        %v1059 = vand.u32 %v1058, 127
        %v1060 = vadd.s32 %v1059, 128
        %v1061 = vadd.s32 %v1059, 256
        %v1062 = vadd.s32 %v1059, 384
        %v1063 = vadd.s32 %v1059, 512
        %v1064 = vadd.s32 %v1059, 640
        %v1065 = vadd.s32 %v1059, 768
        %v1066 = vadd.s32 %v1059, 896
        %v1067 = vadd.s32 %v1059, 1024
        %v1068 = vadd.s32 %v1059, 1152
        %v1069 = vadd.s32 %v1059, 1280
        %v1070 = vadd.s32 %v1059, 1408
        %v1071 = vadd.s32 %v1059, 1536
        %v1072 = vadd.s32 %v1059, 1664
        %v1073 = vadd.s32 %v1059, 1792
        %v1074 = vadd.s32 %v1059, 1920
        %v1075 = vshra.s32 %v1059, 8
        %v1076 = vshra.s32 %v1060, 8
        %v1077 = vshra.s32 %v1061, 8
        %v1078 = vshra.s32 %v1062, 8
        %v1079 = vshra.s32 %v1063, 8
        %v1080 = vshra.s32 %v1064, 8
        %v1081 = vshra.s32 %v1065, 8
        %v1082 = vshra.s32 %v1066, 8
        %v1083 = vshra.s32 %v1067, 8
        %v1084 = vshra.s32 %v1068, 8
        %v1085 = vshra.s32 %v1069, 8
        %v1086 = vshra.s32 %v1070, 8
        %v1087 = vshra.s32 %v1071, 8
        %v1088 = vshra.s32 %v1072, 8
        %v1089 = vshra.s32 %v1073, 8
        %v1090 = vshra.s32 %v1074, 8
        %vm1091 = vcmp.eq.s32.totalorder %v1057, %v1075
        %vm1092 = vcmp.eq.s32.totalorder %v1057, %v1076
        %vm1093 = vcmp.eq.s32.totalorder %v1057, %v1077
        %vm1094 = vcmp.eq.s32.totalorder %v1057, %v1078
        %vm1095 = vcmp.eq.s32.totalorder %v1057, %v1079
        %vm1096 = vcmp.eq.s32.totalorder %v1057, %v1080
        %vm1097 = vcmp.eq.s32.totalorder %v1057, %v1081
        %vm1098 = vcmp.eq.s32.totalorder %v1057, %v1082
        %vm1099 = vcmp.eq.s32.totalorder %v1057, %v1083
        %vm1100 = vcmp.eq.s32.totalorder %v1057, %v1084
        %vm1101 = vcmp.eq.s32.totalorder %v1057, %v1085
        %vm1102 = vcmp.eq.s32.totalorder %v1057, %v1086
        %vm1103 = vcmp.eq.s32.totalorder %v1057, %v1087
        %vm1104 = vcmp.eq.s32.totalorder %v1057, %v1088
        %vm1105 = vcmp.eq.s32.totalorder %v1057, %v1089
        %vm1106 = vcmp.eq.s32.totalorder %v1057, %v1090
        %vm1107 = vmpackc.low %vm1091, %vm1091
        %vm1108 = vmpackc.low %vm1092, %vm1092
        %vm1109 = vmpackc.low %vm1093, %vm1093
        %vm1110 = vmpackc.low %vm1094, %vm1094
        %vm1111 = vmpackc.low %vm1095, %vm1095
        %vm1112 = vmpackc.low %vm1096, %vm1096
        %vm1113 = vmpackc.low %vm1097, %vm1097
        %vm1114 = vmpackc.low %vm1098, %vm1098
        %vm1115 = vmpackc.low %vm1099, %vm1099
        %vm1116 = vmpackc.low %vm1100, %vm1100
        %vm1117 = vmpackc.low %vm1101, %vm1101
        %vm1118 = vmpackc.low %vm1102, %vm1102
        %vm1119 = vmpackc.low %vm1103, %vm1103
        %vm1120 = vmpackc.low %vm1104, %vm1104
        %vm1121 = vmpackc.low %vm1105, %vm1105
        %vm1122 = vmpackc.low %vm1106, %vm1106
        %v1123 = vsel %vm1107, %v1054, 0
        %v1124 = vsel %vm1108, %v1055, 0
        %v1125 = vsel %vm1109, %v1054, 0
        %v1126 = vsel %vm1110, %v1055, 0
        %v1127 = vsel %vm1111, %v1054, 0
        %v1128 = vsel %vm1112, %v1055, 0
        %v1129 = vsel %vm1113, %v1054, 0
        %v1130 = vsel %vm1114, %v1055, 0
        %v1131 = vsel %vm1115, %v1054, 0
        %v1132 = vsel %vm1116, %v1055, 0
        %v1133 = vsel %vm1117, %v1054, 0
        %v1134 = vsel %vm1118, %v1055, 0
        %v1135 = vsel %vm1119, %v1054, 0
        %v1136 = vsel %vm1120, %v1055, 0
        %v1137 = vsel %vm1121, %v1054, 0
        %v1138 = vsel %vm1122, %v1055, 0
        %v1395 = vunpack.c.l.b16 %v732
        %v1396 = vunpack.c.h.b16 %v732
        %v1397 = vunpack.c.l.b16 %v733
        %v1398 = vunpack.c.h.b16 %v733
        %v1399 = vunpack.c.l.b16 %v734
        %v1400 = vunpack.c.h.b16 %v734
        %v1401 = vunpack.c.l.b16 %v735
        %v1402 = vunpack.c.h.b16 %v735
        %v1403 = vunpack.c.l.b16 %v736
        %v1404 = vunpack.c.h.b16 %v736
        %v1405 = vunpack.c.l.b16 %v737
        %v1406 = vunpack.c.h.b16 %v737
        %v1407 = vunpack.c.l.b16 %v738
        %v1408 = vunpack.c.h.b16 %v738
        %v1409 = vunpack.c.l.b16 %v739
        %v1410 = vunpack.c.h.b16 %v739
        %v1411 = vunpack.c.l.b16 %v740
        %v1412 = vunpack.c.h.b16 %v740
        %v1413 = vunpack.c.l.b16 %v741
        %v1414 = vunpack.c.h.b16 %v741
        %v1415 = vunpack.c.l.b16 %v742
        %v1416 = vunpack.c.h.b16 %v742
        %v1417 = vunpack.c.l.b16 %v743
        %v1418 = vunpack.c.h.b16 %v743
        %v1419 = vunpack.c.l.b16 %v744
        %v1420 = vunpack.c.h.b16 %v744
        %v1421 = vunpack.c.l.b16 %v745
        %v1422 = vunpack.c.h.b16 %v745
        %v1423 = vunpack.c.l.b16 %v746
        %v1424 = vunpack.c.h.b16 %v746
        %v1425 = vunpack.c.l.b16 %v747
        %v1426 = vunpack.c.h.b16 %v747
        %v1427 = vunpack.c.l.b16 %v748
        %v1428 = vunpack.c.h.b16 %v748
        %v1429 = vunpack.c.l.b16 %v749
        %v1430 = vunpack.c.h.b16 %v749
        %v1431 = vunpack.c.l.b16 %v750
        %v1432 = vunpack.c.h.b16 %v750
        %v1433 = vunpack.c.l.b16 %v751
        %v1434 = vunpack.c.h.b16 %v751
        %v1435 = vunpack.c.l.b16 %v752
        %v1436 = vunpack.c.h.b16 %v752
        %v1437 = vunpack.c.l.b16 %v753
        %v1438 = vunpack.c.h.b16 %v753
        %v1439 = vunpack.c.l.b16 %v754
        %v1440 = vunpack.c.h.b16 %v754
        %v1441 = vunpack.c.l.b16 %v755
        %v1442 = vunpack.c.h.b16 %v755
        %v1443 = vunpack.c.l.b16 %v756
        %v1444 = vunpack.c.h.b16 %v756
        %v1445 = vunpack.c.l.b16 %v757
        %v1446 = vunpack.c.h.b16 %v757
        %v1447 = vunpack.c.l.b16 %v758
        %v1448 = vunpack.c.h.b16 %v758
        %v1449 = vunpack.c.l.b16 %v759
        %v1450 = vunpack.c.h.b16 %v759
        %v1451 = vunpack.c.l.b16 %v760
        %v1452 = vunpack.c.h.b16 %v760
        %v1453 = vunpack.c.l.b16 %v761
        %v1454 = vunpack.c.h.b16 %v761
        %v1455 = vunpack.c.l.b16 %v762
        %v1456 = vunpack.c.h.b16 %v762
        %v1457 = vunpack.c.l.b16 %v763
        %v1458 = vunpack.c.h.b16 %v763
        %v1459 = vunpack.c.l.b16 %v764
        %v1460 = vunpack.c.h.b16 %v764
        %v1461 = vunpack.c.l.b16 %v765
        %v1462 = vunpack.c.h.b16 %v765
        %v1463 = vunpack.c.l.b16 %v766
        %v1464 = vunpack.c.h.b16 %v766
        %v1465 = vunpack.c.l.b16 %v767
        %v1466 = vunpack.c.h.b16 %v767
        %v1467 = vunpack.c.l.b16 %v768
        %v1468 = vunpack.c.h.b16 %v768
        %v1469 = vunpack.c.l.b16 %v769
        %v1470 = vunpack.c.h.b16 %v769
        %v1471 = vunpack.c.l.b16 %v770
        %v1472 = vunpack.c.h.b16 %v770
        %v1473 = vunpack.c.l.b16 %v771
        %v1474 = vunpack.c.h.b16 %v771
        %v1475 = vunpack.c.l.b16 %v772
        %v1476 = vunpack.c.h.b16 %v772
        %v1477 = vunpack.c.l.b16 %v773
        %v1478 = vunpack.c.h.b16 %v773
        %v1479 = vunpack.c.l.b16 %v774
        %v1480 = vunpack.c.h.b16 %v774
        %v1481 = vunpack.c.l.b16 %v775
        %v1482 = vunpack.c.h.b16 %v775
        %v1483 = vunpack.c.l.b16 %v776
        %v1484 = vunpack.c.h.b16 %v776
        %v1485 = vunpack.c.l.b16 %v777
        %v1486 = vunpack.c.h.b16 %v777
        %v1487 = vunpack.c.l.b16 %v778
        %v1488 = vunpack.c.h.b16 %v778
        %v1489 = vunpack.c.l.b16 %v779
        %v1490 = vunpack.c.h.b16 %v779
        %v1491 = vunpack.c.l.b16 %v780
        %v1492 = vunpack.c.h.b16 %v780
        %v1493 = vunpack.c.l.b16 %v781
        %v1494 = vunpack.c.h.b16 %v781
        %v1495 = vunpack.c.l.b16 %v782
        %v1496 = vunpack.c.h.b16 %v782
        %v1497 = vunpack.c.l.b16 %v783
        %v1498 = vunpack.c.h.b16 %v783
        %v1499 = vunpack.c.l.b16 %v784
        %v1500 = vunpack.c.h.b16 %v784
        %v1501 = vunpack.c.l.b16 %v785
        %v1502 = vunpack.c.h.b16 %v785
        %v1503 = vunpack.c.l.b16 %v786
        %v1504 = vunpack.c.h.b16 %v786
        %v1505 = vunpack.c.l.b16 %v787
        %v1506 = vunpack.c.h.b16 %v787
        %v1507 = vunpack.c.l.b16 %v788
        %v1508 = vunpack.c.h.b16 %v788
        %v1509 = vunpack.c.l.b16 %v789
        %v1510 = vunpack.c.h.b16 %v789
        %v1511 = vunpack.c.l.b16 %v790
        %v1512 = vunpack.c.h.b16 %v790
        %v1513 = vunpack.c.l.b16 %v791
        %v1514 = vunpack.c.h.b16 %v791
        %v1515 = vunpack.c.l.b16 %v792
        %v1516 = vunpack.c.h.b16 %v792
        %v1517 = vunpack.c.l.b16 %v793
        %v1518 = vunpack.c.h.b16 %v793
        %v1519 = vunpack.c.l.b16 %v794
        %v1520 = vunpack.c.h.b16 %v794
        %v1521 = vunpack.c.l.b16 %v795
        %v1522 = vunpack.c.h.b16 %v795
        %v1523 = vunpack.c.l.b16 %v796
        %v1524 = vunpack.c.h.b16 %v796
        %v1525 = vunpack.c.l.b16 %v797
        %v1526 = vunpack.c.h.b16 %v797
        %v1527 = vunpack.c.l.b16 %v798
        %v1528 = vunpack.c.h.b16 %v798
        %v1529 = vunpack.c.l.b16 %v799
        %v1530 = vunpack.c.h.b16 %v799
        %v1531 = vunpack.c.l.b16 %v800
        %v1532 = vunpack.c.h.b16 %v800
        %v1533 = vunpack.c.l.b16 %v801
        %v1534 = vunpack.c.h.b16 %v801
        %v1535 = vunpack.c.l.b16 %v802
        %v1536 = vunpack.c.h.b16 %v802
        %v1537 = vunpack.c.l.b16 %v803
        %v1538 = vunpack.c.h.b16 %v803
        %v1539 = vunpack.c.l.b16 %v804
        %v1540 = vunpack.c.h.b16 %v804
        %v1541 = vunpack.c.l.b16 %v805
        %v1542 = vunpack.c.h.b16 %v805
        %v1543 = vunpack.c.l.b16 %v806
        %v1544 = vunpack.c.h.b16 %v806
        %v1545 = vunpack.c.l.b16 %v807
        %v1546 = vunpack.c.h.b16 %v807
        %v1547 = vunpack.c.l.b16 %v808
        %v1548 = vunpack.c.h.b16 %v808
        %v1549 = vunpack.c.l.b16 %v809
        %v1550 = vunpack.c.h.b16 %v809
        %v1551 = vunpack.c.l.b16 %v810
        %v1552 = vunpack.c.h.b16 %v810
        %v1553 = vunpack.c.l.b16 %v811
        %v1554 = vunpack.c.h.b16 %v811
        %v1555 = vunpack.c.l.b16 %v812
        %v1556 = vunpack.c.h.b16 %v812
        %v1557 = vunpack.c.l.b16 %v813
        %v1558 = vunpack.c.h.b16 %v813
        %v1559 = vunpack.c.l.b16 %v814
        %v1560 = vunpack.c.h.b16 %v814
        %v1561 = vunpack.c.l.b16 %v815
        %v1562 = vunpack.c.h.b16 %v815
        %v1563 = vunpack.c.l.b16 %v816
        %v1564 = vunpack.c.h.b16 %v816
        %v1565 = vunpack.c.l.b16 %v817
        %v1566 = vunpack.c.h.b16 %v817
        %v1567 = vunpack.c.l.b16 %v818
        %v1568 = vunpack.c.h.b16 %v818
        %v1569 = vunpack.c.l.b16 %v819
        %v1570 = vunpack.c.h.b16 %v819
        %v1571 = vunpack.c.l.b16 %v820
        %v1572 = vunpack.c.h.b16 %v820
        %v1573 = vunpack.c.l.b16 %v821
        %v1574 = vunpack.c.h.b16 %v821
        %v1575 = vunpack.c.l.b16 %v822
        %v1576 = vunpack.c.h.b16 %v822
        %v1577 = vunpack.c.l.b16 %v823
        %v1578 = vunpack.c.h.b16 %v823
        %v1579 = vunpack.c.l.b16 %v824
        %v1580 = vunpack.c.h.b16 %v824
        %v1581 = vunpack.c.l.b16 %v825
        %v1582 = vunpack.c.h.b16 %v825
        %v1583 = vunpack.c.l.b16 %v826
        %v1584 = vunpack.c.h.b16 %v826
        %v1585 = vunpack.c.l.b16 %v827
        %v1586 = vunpack.c.h.b16 %v827
        %v1587 = vunpack.c.l.b16 %v828
        %v1588 = vunpack.c.h.b16 %v828
        %v1589 = vunpack.c.l.b16 %v829
        %v1590 = vunpack.c.h.b16 %v829
        %v1591 = vunpack.c.l.b16 %v830
        %v1592 = vunpack.c.h.b16 %v830
        %v1593 = vunpack.c.l.b16 %v831
        %v1594 = vunpack.c.h.b16 %v831
        %v1595 = vunpack.c.l.b16 %v832
        %v1596 = vunpack.c.h.b16 %v832
        %v1597 = vunpack.c.l.b16 %v833
        %v1598 = vunpack.c.h.b16 %v833
        %v1599 = vunpack.c.l.b16 %v834
        %v1600 = vunpack.c.h.b16 %v834
        %v1601 = vunpack.c.l.b16 %v835
        %v1602 = vunpack.c.h.b16 %v835
        %v1603 = vunpack.c.l.b16 %v836
        %v1604 = vunpack.c.h.b16 %v836
        %v1605 = vunpack.c.l.b16 %v837
        %v1606 = vunpack.c.h.b16 %v837
        %v1607 = vunpack.c.l.b16 %v838
        %v1608 = vunpack.c.h.b16 %v838
        %v1609 = vunpack.c.l.b16 %v839
        %v1610 = vunpack.c.h.b16 %v839
        %v1611 = vunpack.c.l.b16 %v840
        %v1612 = vunpack.c.h.b16 %v840
        %v1613 = vunpack.c.l.b16 %v841
        %v1614 = vunpack.c.h.b16 %v841
        %v1615 = vunpack.c.l.b16 %v842
        %v1616 = vunpack.c.h.b16 %v842
        %v1617 = vunpack.c.l.b16 %v843
        %v1618 = vunpack.c.h.b16 %v843
        %v1619 = vunpack.c.l.b16 %v844
        %v1620 = vunpack.c.h.b16 %v844
        %v1621 = vunpack.c.l.b16 %v845
        %v1622 = vunpack.c.h.b16 %v845
        %v1623 = vunpack.c.l.b16 %v846
        %v1624 = vunpack.c.h.b16 %v846
        %v1625 = vunpack.c.l.b16 %v847
        %v1626 = vunpack.c.h.b16 %v847
        %v1627 = vunpack.c.l.b16 %v848
        %v1628 = vunpack.c.h.b16 %v848
        %v1629 = vunpack.c.l.b16 %v849
        %v1630 = vunpack.c.h.b16 %v849
        %v1631 = vunpack.c.l.b16 %v850
        %v1632 = vunpack.c.h.b16 %v850
        %v1633 = vunpack.c.l.b16 %v851
        %v1634 = vunpack.c.h.b16 %v851
        %v1635 = vunpack.c.l.b16 %v852
        %v1636 = vunpack.c.h.b16 %v852
        %v1637 = vunpack.c.l.b16 %v853
        %v1638 = vunpack.c.h.b16 %v853
        %v1639 = vunpack.c.l.b16 %v854
        %v1640 = vunpack.c.h.b16 %v854
        %v1641 = vunpack.c.l.b16 %v855
        %v1642 = vunpack.c.h.b16 %v855
        %v1643 = vunpack.c.l.b16 %v856
        %v1644 = vunpack.c.h.b16 %v856
        %v1645 = vunpack.c.l.b16 %v857
        %v1646 = vunpack.c.h.b16 %v857
        %v1647 = vunpack.c.l.b16 %v858
        %v1648 = vunpack.c.h.b16 %v858
        %v1649 = vunpack.c.l.b16 %v859
        %v1650 = vunpack.c.h.b16 %v859
        %v1651 = vunpack.c.l.b16 %v860
        %v1652 = vunpack.c.h.b16 %v860
        %v1653 = vunpack.c.l.b16 %v861
        %v1654 = vunpack.c.h.b16 %v861
        %v1655 = vunpack.c.l.b16 %v862
        %v1656 = vunpack.c.h.b16 %v862
        %v1657 = vunpack.c.l.b16 %v863
        %v1658 = vunpack.c.h.b16 %v863
        %v1659 = vunpack.c.l.b16 %v864
        %v1660 = vunpack.c.h.b16 %v864
        %v1661 = vunpack.c.l.b16 %v865
        %v1662 = vunpack.c.h.b16 %v865
        %v1663 = vunpack.c.l.b16 %v866
        %v1664 = vunpack.c.h.b16 %v866
        %v1665 = vunpack.c.l.b16 %v867
        %v1666 = vunpack.c.h.b16 %v867
        %v1667 = vunpack.c.l.b16 %v868
        %v1668 = vunpack.c.h.b16 %v868
        %v1669 = vunpack.c.l.b16 %v869
        %v1670 = vunpack.c.h.b16 %v869
        %v1671 = vunpack.c.l.b16 %v870
        %v1672 = vunpack.c.h.b16 %v870
        %v1673 = vunpack.c.l.b16 %v871
        %v1674 = vunpack.c.h.b16 %v871
        %v1675 = vunpack.c.l.b16 %v872
        %v1676 = vunpack.c.h.b16 %v872
        %v1677 = vunpack.c.l.b16 %v873
        %v1678 = vunpack.c.h.b16 %v873
        %v1679 = vunpack.c.l.b16 %v874
        %v1680 = vunpack.c.h.b16 %v874
        %v1681 = vunpack.c.l.b16 %v875
        %v1682 = vunpack.c.h.b16 %v875
        %v1683 = vunpack.c.l.b16 %v876
        %v1684 = vunpack.c.h.b16 %v876
        %v1685 = vunpack.c.l.b16 %v877
        %v1686 = vunpack.c.h.b16 %v877
        %v1687 = vunpack.c.l.b16 %v878
        %v1688 = vunpack.c.h.b16 %v878
        %v1689 = vunpack.c.l.b16 %v879
        %v1690 = vunpack.c.h.b16 %v879
        %v1691 = vunpack.c.l.b16 %v880
        %v1692 = vunpack.c.h.b16 %v880
        %v1693 = vunpack.c.l.b16 %v881
        %v1694 = vunpack.c.h.b16 %v881
        %v1695 = vunpack.c.l.b16 %v882
        %v1696 = vunpack.c.h.b16 %v882
        %v1697 = vunpack.c.l.b16 %v883
        %v1698 = vunpack.c.h.b16 %v883
        %v1699 = vunpack.c.l.b16 %v884
        %v1700 = vunpack.c.h.b16 %v884
        %v1701 = vunpack.c.l.b16 %v885
        %v1702 = vunpack.c.h.b16 %v885
        %v1703 = vunpack.c.l.b16 %v886
        %v1704 = vunpack.c.h.b16 %v886
        %v1705 = vunpack.c.l.b16 %v887
        %v1706 = vunpack.c.h.b16 %v887
        %v1707 = vunpack.c.l.b16 %v888
        %v1708 = vunpack.c.h.b16 %v888
        %v1709 = vunpack.c.l.b16 %v889
        %v1710 = vunpack.c.h.b16 %v889
        %v1711 = vunpack.c.l.b16 %v890
        %v1712 = vunpack.c.h.b16 %v890
        %v1713 = vunpack.c.l.b16 %v891
        %v1714 = vunpack.c.h.b16 %v891
        %v1715 = vunpack.c.l.b16 %v892
        %v1716 = vunpack.c.h.b16 %v892
        %v1717 = vunpack.c.l.b16 %v893
        %v1718 = vunpack.c.h.b16 %v893
        %v1719 = vunpack.c.l.b16 %v894
        %v1720 = vunpack.c.h.b16 %v894
        %v1721 = vunpack.c.l.b16 %v895
        %v1722 = vunpack.c.h.b16 %v895
        %v1723 = vunpack.c.l.b16 %v896
        %v1724 = vunpack.c.h.b16 %v896
        %v1725 = vunpack.c.l.b16 %v897
        %v1726 = vunpack.c.h.b16 %v897
        %v1727 = vunpack.c.l.b16 %v898
        %v1728 = vunpack.c.h.b16 %v898
        %v1729 = vunpack.c.l.b16 %v899
        %v1730 = vunpack.c.h.b16 %v899
        %v1731 = vunpack.c.l.b16 %v900
        %v1732 = vunpack.c.h.b16 %v900
        %v1733 = vunpack.c.l.b16 %v901
        %v1734 = vunpack.c.h.b16 %v901
        %v1735 = vunpack.c.l.b16 %v902
        %v1736 = vunpack.c.h.b16 %v902
        %v1737 = vunpack.c.l.b16 %v903
        %v1738 = vunpack.c.h.b16 %v903
        %v1739 = vunpack.c.l.b16 %v904
        %v1740 = vunpack.c.h.b16 %v904
        %v1741 = vunpack.c.l.b16 %v905
        %v1742 = vunpack.c.h.b16 %v905
        %v1743 = vunpack.c.l.b16 %v906
        %v1744 = vunpack.c.h.b16 %v906
        %v1745 = vunpack.c.l.b16 %v907
        %v1746 = vunpack.c.h.b16 %v907
        %v1747 = vunpack.c.l.b16 %v908
        %v1748 = vunpack.c.h.b16 %v908
        %v1749 = vunpack.c.l.b16 %v909
        %v1750 = vunpack.c.h.b16 %v909
        %v1751 = vunpack.c.l.b16 %v910
        %v1752 = vunpack.c.h.b16 %v910
        %v1753 = vunpack.c.l.b16 %v911
        %v1754 = vunpack.c.h.b16 %v911
        %v1755 = vunpack.c.l.b16 %v912
        %v1756 = vunpack.c.h.b16 %v912
        %v1757 = vunpack.c.l.b16 %v913
        %v1758 = vunpack.c.h.b16 %v913
        %v1759 = vunpack.c.l.b16 %v914
        %v1760 = vunpack.c.h.b16 %v914
        %v1761 = vunpack.c.l.b16 %v915
        %v1762 = vunpack.c.h.b16 %v915
        %v1763 = vunpack.c.l.b16 %v916
        %v1764 = vunpack.c.h.b16 %v916
        %v1765 = vunpack.c.l.b16 %v917
        %v1766 = vunpack.c.h.b16 %v917
        %v1767 = vunpack.c.l.b16 %v918
        %v1768 = vunpack.c.h.b16 %v918
        %v1769 = vunpack.c.l.b16 %v919
        %v1770 = vunpack.c.h.b16 %v919
        %v1771 = vunpack.c.l.b16 %v920
        %v1772 = vunpack.c.h.b16 %v920
        %v1773 = vunpack.c.l.b16 %v921
        %v1774 = vunpack.c.h.b16 %v921
        %v1775 = vunpack.c.l.b16 %v922
        %v1776 = vunpack.c.h.b16 %v922
        %v1777 = vunpack.c.l.b16 %v923
        %v1778 = vunpack.c.h.b16 %v923
        %v1779 = vunpack.c.l.b16 %v924
        %v1780 = vunpack.c.h.b16 %v924
        %v1781 = vunpack.c.l.b16 %v925
        %v1782 = vunpack.c.h.b16 %v925
        %v1783 = vunpack.c.l.b16 %v926
        %v1784 = vunpack.c.h.b16 %v926
        %v1785 = vunpack.c.l.b16 %v927
        %v1786 = vunpack.c.h.b16 %v927
        %v1787 = vunpack.c.l.b16 %v928
        %v1788 = vunpack.c.h.b16 %v928
        %v1789 = vunpack.c.l.b16 %v929
        %v1790 = vunpack.c.h.b16 %v929
        %v1791 = vunpack.c.l.b16 %v930
        %v1792 = vunpack.c.h.b16 %v930
        %v1793 = vunpack.c.l.b16 %v931
        %v1794 = vunpack.c.h.b16 %v931
        %v1795 = vunpack.c.l.b16 %v932
        %v1796 = vunpack.c.h.b16 %v932
        %v1797 = vunpack.c.l.b16 %v933
        %v1798 = vunpack.c.h.b16 %v933
        %v1799 = vunpack.c.l.b16 %v934
        %v1800 = vunpack.c.h.b16 %v934
        %v1801 = vunpack.c.l.b16 %v935
        %v1802 = vunpack.c.h.b16 %v935
        %v1803 = vunpack.c.l.b16 %v936
        %v1804 = vunpack.c.h.b16 %v936
        %v1805 = vunpack.c.l.b16 %v937
        %v1806 = vunpack.c.h.b16 %v937
        %v1807 = vunpack.c.l.b16 %v938
        %v1808 = vunpack.c.h.b16 %v938
        %v1809 = vunpack.c.l.b16 %v939
        %v1810 = vunpack.c.h.b16 %v939
        %v1811 = vunpack.c.l.b16 %v940
        %v1812 = vunpack.c.h.b16 %v940
        %v1813 = vunpack.c.l.b16 %v941
        %v1814 = vunpack.c.h.b16 %v941
        %v1815 = vunpack.c.l.b16 %v942
        %v1816 = vunpack.c.h.b16 %v942
        %v1817 = vunpack.c.l.b16 %v943
        %v1818 = vunpack.c.h.b16 %v943
        %v1819 = vunpack.c.l.b16 %v944
        %v1820 = vunpack.c.h.b16 %v944
        %v1821 = vunpack.c.l.b16 %v945
        %v1822 = vunpack.c.h.b16 %v945
        %v1823 = vunpack.c.l.b16 %v946
        %v1824 = vunpack.c.h.b16 %v946
        %v1825 = vunpack.c.l.b16 %v947
        %v1826 = vunpack.c.h.b16 %v947
        %v1827 = vunpack.c.l.b16 %v948
        %v1828 = vunpack.c.h.b16 %v948
        %v1829 = vunpack.c.l.b16 %v949
        %v1830 = vunpack.c.h.b16 %v949
        %v1831 = vunpack.c.l.b16 %v950
        %v1832 = vunpack.c.h.b16 %v950
        %v1833 = vunpack.c.l.b16 %v951
        %v1834 = vunpack.c.h.b16 %v951
        %v1835 = vunpack.c.l.b16 %v952
        %v1836 = vunpack.c.h.b16 %v952
        %v1837 = vunpack.c.l.b16 %v953
        %v1838 = vunpack.c.h.b16 %v953
        %v1839 = vunpack.c.l.b16 %v954
        %v1840 = vunpack.c.h.b16 %v954
        %v1841 = vunpack.c.l.b16 %v955
        %v1842 = vunpack.c.h.b16 %v955
        %v1843 = vunpack.c.l.b16 %v956
        %v1844 = vunpack.c.h.b16 %v956
        %v1845 = vunpack.c.l.b16 %v957
        %v1846 = vunpack.c.h.b16 %v957
        %v1847 = vunpack.c.l.b16 %v958
        %v1848 = vunpack.c.h.b16 %v958
        %v1849 = vunpack.c.l.b16 %v959
        %v1850 = vunpack.c.h.b16 %v959
        %v1851 = vunpack.c.l.b16 %v960
        %v1852 = vunpack.c.h.b16 %v960
        %v1853 = vunpack.c.l.b16 %v961
        %v1854 = vunpack.c.h.b16 %v961
        %v1855 = vunpack.c.l.b16 %v962
        %v1856 = vunpack.c.h.b16 %v962
        %v1857 = vunpack.c.l.b16 %v963
        %v1858 = vunpack.c.h.b16 %v963
        %v1859 = vunpack.c.l.b16 %v964
        %v1860 = vunpack.c.h.b16 %v964
        %v1861 = vunpack.c.l.b16 %v965
        %v1862 = vunpack.c.h.b16 %v965
        %v1863 = vunpack.c.l.b16 %v966
        %v1864 = vunpack.c.h.b16 %v966
        %v1865 = vunpack.c.l.b16 %v967
        %v1866 = vunpack.c.h.b16 %v967
        %v1867 = vunpack.c.l.b16 %v968
        %v1868 = vunpack.c.h.b16 %v968
        %v1869 = vunpack.c.l.b16 %v969
        %v1870 = vunpack.c.h.b16 %v969
        %v1871 = vunpack.c.l.b16 %v970
        %v1872 = vunpack.c.h.b16 %v970
        %v1873 = vunpack.c.l.b16 %v971
        %v1874 = vunpack.c.h.b16 %v971
        %v1875 = vunpack.c.l.b16 %v972
        %v1876 = vunpack.c.h.b16 %v972
        %v1877 = vunpack.c.l.b16 %v973
        %v1878 = vunpack.c.h.b16 %v973
        %v1879 = vunpack.c.l.b16 %v974
        %v1880 = vunpack.c.h.b16 %v974
        %v1881 = vunpack.c.l.b16 %v975
        %v1882 = vunpack.c.h.b16 %v975
        %v1883 = vunpack.c.l.b16 %v976
        %v1884 = vunpack.c.h.b16 %v976
        %v1885 = vunpack.c.l.b16 %v977
        %v1886 = vunpack.c.h.b16 %v977
        %v1887 = vunpack.c.l.b16 %v978
        %v1888 = vunpack.c.h.b16 %v978
        %v1889 = vunpack.c.l.b16 %v979
        %v1890 = vunpack.c.h.b16 %v979
        %v1891 = vunpack.c.l.b16 %v980
        %v1892 = vunpack.c.h.b16 %v980
        %v1893 = vunpack.c.l.b16 %v981
        %v1894 = vunpack.c.h.b16 %v981
        %v1895 = vunpack.c.l.b16 %v982
        %v1896 = vunpack.c.h.b16 %v982
        %v1897 = vunpack.c.l.b16 %v983
        %v1898 = vunpack.c.h.b16 %v983
        %v1899 = vunpack.c.l.b16 %v984
        %v1900 = vunpack.c.h.b16 %v984
        %v1901 = vunpack.c.l.b16 %v985
        %v1902 = vunpack.c.h.b16 %v985
        %v1903 = vunpack.c.l.b16 %v986
        %v1904 = vunpack.c.h.b16 %v986
        %v1905 = vunpack.c.l.b16 %v987
        %v1906 = vunpack.c.h.b16 %v987
        %v1907 = vpack.c.b16 %v1397, %v1395
        %v1908 = vpack.c.b16 %v1398, %v1396
        %v1909 = vpack.c.b16 %v1401, %v1399
        %v1910 = vpack.c.b16 %v1402, %v1400
        %v1911 = vpack.c.b16 %v1405, %v1403
        %v1912 = vpack.c.b16 %v1406, %v1404
        %v1913 = vpack.c.b16 %v1409, %v1407
        %v1914 = vpack.c.b16 %v1410, %v1408
        %v1915 = vpack.c.b16 %v1413, %v1411
        %v1916 = vpack.c.b16 %v1414, %v1412
        %v1917 = vpack.c.b16 %v1417, %v1415
        %v1918 = vpack.c.b16 %v1418, %v1416
        %v1919 = vpack.c.b16 %v1421, %v1419
        %v1920 = vpack.c.b16 %v1422, %v1420
        %v1921 = vpack.c.b16 %v1425, %v1423
        %v1922 = vpack.c.b16 %v1426, %v1424
        %v1923 = vpack.c.b16 %v1429, %v1427
        %v1924 = vpack.c.b16 %v1430, %v1428
        %v1925 = vpack.c.b16 %v1433, %v1431
        %v1926 = vpack.c.b16 %v1434, %v1432
        %v1927 = vpack.c.b16 %v1437, %v1435
        %v1928 = vpack.c.b16 %v1438, %v1436
        %v1929 = vpack.c.b16 %v1441, %v1439
        %v1930 = vpack.c.b16 %v1442, %v1440
        %v1931 = vpack.c.b16 %v1445, %v1443
        %v1932 = vpack.c.b16 %v1446, %v1444
        %v1933 = vpack.c.b16 %v1449, %v1447
        %v1934 = vpack.c.b16 %v1450, %v1448
        %v1935 = vpack.c.b16 %v1453, %v1451
        %v1936 = vpack.c.b16 %v1454, %v1452
        %v1937 = vpack.c.b16 %v1457, %v1455
        %v1938 = vpack.c.b16 %v1458, %v1456
        %v1939 = vpack.c.b16 %v1461, %v1459
        %v1940 = vpack.c.b16 %v1462, %v1460
        %v1941 = vpack.c.b16 %v1465, %v1463
        %v1942 = vpack.c.b16 %v1466, %v1464
        %v1943 = vpack.c.b16 %v1469, %v1467
        %v1944 = vpack.c.b16 %v1470, %v1468
        %v1945 = vpack.c.b16 %v1473, %v1471
        %v1946 = vpack.c.b16 %v1474, %v1472
        %v1947 = vpack.c.b16 %v1477, %v1475
        %v1948 = vpack.c.b16 %v1478, %v1476
        %v1949 = vpack.c.b16 %v1481, %v1479
        %v1950 = vpack.c.b16 %v1482, %v1480
        %v1951 = vpack.c.b16 %v1485, %v1483
        %v1952 = vpack.c.b16 %v1486, %v1484
        %v1953 = vpack.c.b16 %v1489, %v1487
        %v1954 = vpack.c.b16 %v1490, %v1488
        %v1955 = vpack.c.b16 %v1493, %v1491
        %v1956 = vpack.c.b16 %v1494, %v1492
        %v1957 = vpack.c.b16 %v1497, %v1495
        %v1958 = vpack.c.b16 %v1498, %v1496
        %v1959 = vpack.c.b16 %v1501, %v1499
        %v1960 = vpack.c.b16 %v1502, %v1500
        %v1961 = vpack.c.b16 %v1505, %v1503
        %v1962 = vpack.c.b16 %v1506, %v1504
        %v1963 = vpack.c.b16 %v1509, %v1507
        %v1964 = vpack.c.b16 %v1510, %v1508
        %v1965 = vpack.c.b16 %v1513, %v1511
        %v1966 = vpack.c.b16 %v1514, %v1512
        %v1967 = vpack.c.b16 %v1517, %v1515
        %v1968 = vpack.c.b16 %v1518, %v1516
        %v1969 = vpack.c.b16 %v1521, %v1519
        %v1970 = vpack.c.b16 %v1522, %v1520
        %v1971 = vpack.c.b16 %v1525, %v1523
        %v1972 = vpack.c.b16 %v1526, %v1524
        %v1973 = vpack.c.b16 %v1529, %v1527
        %v1974 = vpack.c.b16 %v1530, %v1528
        %v1975 = vpack.c.b16 %v1533, %v1531
        %v1976 = vpack.c.b16 %v1534, %v1532
        %v1977 = vpack.c.b16 %v1537, %v1535
        %v1978 = vpack.c.b16 %v1538, %v1536
        %v1979 = vpack.c.b16 %v1541, %v1539
        %v1980 = vpack.c.b16 %v1542, %v1540
        %v1981 = vpack.c.b16 %v1545, %v1543
        %v1982 = vpack.c.b16 %v1546, %v1544
        %v1983 = vpack.c.b16 %v1549, %v1547
        %v1984 = vpack.c.b16 %v1550, %v1548
        %v1985 = vpack.c.b16 %v1553, %v1551
        %v1986 = vpack.c.b16 %v1554, %v1552
        %v1987 = vpack.c.b16 %v1557, %v1555
        %v1988 = vpack.c.b16 %v1558, %v1556
        %v1989 = vpack.c.b16 %v1561, %v1559
        %v1990 = vpack.c.b16 %v1562, %v1560
        %v1991 = vpack.c.b16 %v1565, %v1563
        %v1992 = vpack.c.b16 %v1566, %v1564
        %v1993 = vpack.c.b16 %v1569, %v1567
        %v1994 = vpack.c.b16 %v1570, %v1568
        %v1995 = vpack.c.b16 %v1573, %v1571
        %v1996 = vpack.c.b16 %v1574, %v1572
        %v1997 = vpack.c.b16 %v1577, %v1575
        %v1998 = vpack.c.b16 %v1578, %v1576
        %v1999 = vpack.c.b16 %v1581, %v1579
        %v2000 = vpack.c.b16 %v1582, %v1580
        %v2001 = vpack.c.b16 %v1585, %v1583
        %v2002 = vpack.c.b16 %v1586, %v1584
        %v2003 = vpack.c.b16 %v1589, %v1587
        %v2004 = vpack.c.b16 %v1590, %v1588
        %v2005 = vpack.c.b16 %v1593, %v1591
        %v2006 = vpack.c.b16 %v1594, %v1592
        %v2007 = vpack.c.b16 %v1597, %v1595
        %v2008 = vpack.c.b16 %v1598, %v1596
        %v2009 = vpack.c.b16 %v1601, %v1599
        %v2010 = vpack.c.b16 %v1602, %v1600
        %v2011 = vpack.c.b16 %v1605, %v1603
        %v2012 = vpack.c.b16 %v1606, %v1604
        %v2013 = vpack.c.b16 %v1609, %v1607
        %v2014 = vpack.c.b16 %v1610, %v1608
        %v2015 = vpack.c.b16 %v1613, %v1611
        %v2016 = vpack.c.b16 %v1614, %v1612
        %v2017 = vpack.c.b16 %v1617, %v1615
        %v2018 = vpack.c.b16 %v1618, %v1616
        %v2019 = vpack.c.b16 %v1621, %v1619
        %v2020 = vpack.c.b16 %v1622, %v1620
        %v2021 = vpack.c.b16 %v1625, %v1623
        %v2022 = vpack.c.b16 %v1626, %v1624
        %v2023 = vpack.c.b16 %v1629, %v1627
        %v2024 = vpack.c.b16 %v1630, %v1628
        %v2025 = vpack.c.b16 %v1633, %v1631
        %v2026 = vpack.c.b16 %v1634, %v1632
        %v2027 = vpack.c.b16 %v1637, %v1635
        %v2028 = vpack.c.b16 %v1638, %v1636
        %v2029 = vpack.c.b16 %v1641, %v1639
        %v2030 = vpack.c.b16 %v1642, %v1640
        %v2031 = vpack.c.b16 %v1645, %v1643
        %v2032 = vpack.c.b16 %v1646, %v1644
        %v2033 = vpack.c.b16 %v1649, %v1647
        %v2034 = vpack.c.b16 %v1650, %v1648
        %v2035 = vpack.c.b16 %v1653, %v1651
        %v2036 = vpack.c.b16 %v1654, %v1652
        %v2037 = vpack.c.b16 %v1657, %v1655
        %v2038 = vpack.c.b16 %v1658, %v1656
        %v2039 = vpack.c.b16 %v1661, %v1659
        %v2040 = vpack.c.b16 %v1662, %v1660
        %v2041 = vpack.c.b16 %v1665, %v1663
        %v2042 = vpack.c.b16 %v1666, %v1664
        %v2043 = vpack.c.b16 %v1669, %v1667
        %v2044 = vpack.c.b16 %v1670, %v1668
        %v2045 = vpack.c.b16 %v1673, %v1671
        %v2046 = vpack.c.b16 %v1674, %v1672
        %v2047 = vpack.c.b16 %v1677, %v1675
        %v2048 = vpack.c.b16 %v1678, %v1676
        %v2049 = vpack.c.b16 %v1681, %v1679
        %v2050 = vpack.c.b16 %v1682, %v1680
        %v2051 = vpack.c.b16 %v1685, %v1683
        %v2052 = vpack.c.b16 %v1686, %v1684
        %v2053 = vpack.c.b16 %v1689, %v1687
        %v2054 = vpack.c.b16 %v1690, %v1688
        %v2055 = vpack.c.b16 %v1693, %v1691
        %v2056 = vpack.c.b16 %v1694, %v1692
        %v2057 = vpack.c.b16 %v1697, %v1695
        %v2058 = vpack.c.b16 %v1698, %v1696
        %v2059 = vpack.c.b16 %v1701, %v1699
        %v2060 = vpack.c.b16 %v1702, %v1700
        %v2061 = vpack.c.b16 %v1705, %v1703
        %v2062 = vpack.c.b16 %v1706, %v1704
        %v2063 = vpack.c.b16 %v1709, %v1707
        %v2064 = vpack.c.b16 %v1710, %v1708
        %v2065 = vpack.c.b16 %v1713, %v1711
        %v2066 = vpack.c.b16 %v1714, %v1712
        %v2067 = vpack.c.b16 %v1717, %v1715
        %v2068 = vpack.c.b16 %v1718, %v1716
        %v2069 = vpack.c.b16 %v1721, %v1719
        %v2070 = vpack.c.b16 %v1722, %v1720
        %v2071 = vpack.c.b16 %v1725, %v1723
        %v2072 = vpack.c.b16 %v1726, %v1724
        %v2073 = vpack.c.b16 %v1729, %v1727
        %v2074 = vpack.c.b16 %v1730, %v1728
        %v2075 = vpack.c.b16 %v1733, %v1731
        %v2076 = vpack.c.b16 %v1734, %v1732
        %v2077 = vpack.c.b16 %v1737, %v1735
        %v2078 = vpack.c.b16 %v1738, %v1736
        %v2079 = vpack.c.b16 %v1741, %v1739
        %v2080 = vpack.c.b16 %v1742, %v1740
        %v2081 = vpack.c.b16 %v1745, %v1743
        %v2082 = vpack.c.b16 %v1746, %v1744
        %v2083 = vpack.c.b16 %v1749, %v1747
        %v2084 = vpack.c.b16 %v1750, %v1748
        %v2085 = vpack.c.b16 %v1753, %v1751
        %v2086 = vpack.c.b16 %v1754, %v1752
        %v2087 = vpack.c.b16 %v1757, %v1755
        %v2088 = vpack.c.b16 %v1758, %v1756
        %v2089 = vpack.c.b16 %v1761, %v1759
        %v2090 = vpack.c.b16 %v1762, %v1760
        %v2091 = vpack.c.b16 %v1765, %v1763
        %v2092 = vpack.c.b16 %v1766, %v1764
        %v2093 = vpack.c.b16 %v1769, %v1767
        %v2094 = vpack.c.b16 %v1770, %v1768
        %v2095 = vpack.c.b16 %v1773, %v1771
        %v2096 = vpack.c.b16 %v1774, %v1772
        %v2097 = vpack.c.b16 %v1777, %v1775
        %v2098 = vpack.c.b16 %v1778, %v1776
        %v2099 = vpack.c.b16 %v1781, %v1779
        %v2100 = vpack.c.b16 %v1782, %v1780
        %v2101 = vpack.c.b16 %v1785, %v1783
        %v2102 = vpack.c.b16 %v1786, %v1784
        %v2103 = vpack.c.b16 %v1789, %v1787
        %v2104 = vpack.c.b16 %v1790, %v1788
        %v2105 = vpack.c.b16 %v1793, %v1791
        %v2106 = vpack.c.b16 %v1794, %v1792
        %v2107 = vpack.c.b16 %v1797, %v1795
        %v2108 = vpack.c.b16 %v1798, %v1796
        %v2109 = vpack.c.b16 %v1801, %v1799
        %v2110 = vpack.c.b16 %v1802, %v1800
        %v2111 = vpack.c.b16 %v1805, %v1803
        %v2112 = vpack.c.b16 %v1806, %v1804
        %v2113 = vpack.c.b16 %v1809, %v1807
        %v2114 = vpack.c.b16 %v1810, %v1808
        %v2115 = vpack.c.b16 %v1813, %v1811
        %v2116 = vpack.c.b16 %v1814, %v1812
        %v2117 = vpack.c.b16 %v1817, %v1815
        %v2118 = vpack.c.b16 %v1818, %v1816
        %v2119 = vpack.c.b16 %v1821, %v1819
        %v2120 = vpack.c.b16 %v1822, %v1820
        %v2121 = vpack.c.b16 %v1825, %v1823
        %v2122 = vpack.c.b16 %v1826, %v1824
        %v2123 = vpack.c.b16 %v1829, %v1827
        %v2124 = vpack.c.b16 %v1830, %v1828
        %v2125 = vpack.c.b16 %v1833, %v1831
        %v2126 = vpack.c.b16 %v1834, %v1832
        %v2127 = vpack.c.b16 %v1837, %v1835
        %v2128 = vpack.c.b16 %v1838, %v1836
        %v2129 = vpack.c.b16 %v1841, %v1839
        %v2130 = vpack.c.b16 %v1842, %v1840
        %v2131 = vpack.c.b16 %v1845, %v1843
        %v2132 = vpack.c.b16 %v1846, %v1844
        %v2133 = vpack.c.b16 %v1849, %v1847
        %v2134 = vpack.c.b16 %v1850, %v1848
        %v2135 = vpack.c.b16 %v1853, %v1851
        %v2136 = vpack.c.b16 %v1854, %v1852
        %v2137 = vpack.c.b16 %v1857, %v1855
        %v2138 = vpack.c.b16 %v1858, %v1856
        %v2139 = vpack.c.b16 %v1861, %v1859
        %v2140 = vpack.c.b16 %v1862, %v1860
        %v2141 = vpack.c.b16 %v1865, %v1863
        %v2142 = vpack.c.b16 %v1866, %v1864
        %v2143 = vpack.c.b16 %v1869, %v1867
        %v2144 = vpack.c.b16 %v1870, %v1868
        %v2145 = vpack.c.b16 %v1873, %v1871
        %v2146 = vpack.c.b16 %v1874, %v1872
        %v2147 = vpack.c.b16 %v1877, %v1875
        %v2148 = vpack.c.b16 %v1878, %v1876
        %v2149 = vpack.c.b16 %v1881, %v1879
        %v2150 = vpack.c.b16 %v1882, %v1880
        %v2151 = vpack.c.b16 %v1885, %v1883
        %v2152 = vpack.c.b16 %v1886, %v1884
        %v2153 = vpack.c.b16 %v1889, %v1887
        %v2154 = vpack.c.b16 %v1890, %v1888
        %v2155 = vpack.c.b16 %v1893, %v1891
        %v2156 = vpack.c.b16 %v1894, %v1892
        %v2157 = vpack.c.b16 %v1897, %v1895
        %v2158 = vpack.c.b16 %v1898, %v1896
        %v2159 = vpack.c.b16 %v1901, %v1899
        %v2160 = vpack.c.b16 %v1902, %v1900
        %v2161 = vpack.c.b16 %v1905, %v1903
        %v2162 = vpack.c.b16 %v1906, %v1904
        %2419 = vmatprep.subr.bf16.mxu0 %v1922
        %2420 = vmatpush1.bf16.msra.mxu0 %v1921
        %2421 = vmatprep.subr.bf16.mxu0 %v1920
        %2422 = vmatpush1.bf16.msra.mxu0 %v1919
        %2423 = vmatprep.subr.bf16.mxu0 %v1918
        %2424 = vmatpush1.bf16.msra.mxu0 %v1917
        %2425 = vmatprep.subr.bf16.mxu0 %v1916
        %2426 = vmatpush1.bf16.msra.mxu0 %v1915
        %2427 = vmatprep.subr.bf16.mxu0 %v1914
        %2428 = vmatpush1.bf16.msra.mxu0 %v1913
        %2429 = vmatprep.subr.bf16.mxu0 %v1912
        %2430 = vmatpush1.bf16.msra.mxu0 %v1911
        %2431 = vmatprep.subr.bf16.mxu0 %v1910
        %2432 = vmatpush1.bf16.msra.mxu0 %v1909
        %2433 = vmatprep.subr.bf16.mxu0 %v1908
        %2434 = vmatpush1.bf16.msra.mxu0 %v1907
        %2435 = vmatprep.subr.bf16.mxu0 %v1938
        %2436 = vmatpush2.bf16.msra.mxu0 %v1937
        %2437 = vmatprep.subr.bf16.mxu0 %v1936
        %2438 = vmatpush2.bf16.msra.mxu0 %v1935
        %2439 = vmatprep.subr.bf16.mxu0 %v1934
        %2440 = vmatpush2.bf16.msra.mxu0 %v1933
        %2441 = vmatprep.subr.bf16.mxu0 %v1932
        %2442 = vmatpush2.bf16.msra.mxu0 %v1931
        %2443 = vmatprep.subr.bf16.mxu0 %v1930
        %2444 = vmatpush2.bf16.msra.mxu0 %v1929
        %2445 = vmatprep.subr.bf16.mxu0 %v1928
        %2446 = vmatpush2.bf16.msra.mxu0 %v1927
        %2447 = vmatprep.subr.bf16.mxu0 %v1926
        %2448 = vmatpush2.bf16.msra.mxu0 %v1925
        %2449 = vmatprep.subr.bf16.mxu0 %v1924
        %2450 = vmatpush2.bf16.msra.mxu0 %v1923
        %2451 = vmatprep.mubr.bf16.mxu0 %v1124
        %2452 = vmatmul.mubr.bf16.gmra.mxu0 %v1123
        %v2453 = vpop.f32.mrf.mxu0
        %v2454 = vadd.f32 0.0, %v2453
        %v2455 = vpop.f32.mrf.mxu0
        %v2456 = vadd.f32 0.0, %v2455
        %v2457 = vpop.f32.mrf.mxu0
        %v2458 = vpop.f32.mrf.mxu0
        %2459 = vdwg.mxu0
        %2460 = vmatprep.subr.bf16.mxu0 %v1954
        %2461 = vmatpush1.bf16.msra.mxu0 %v1953
        %2462 = vmatprep.subr.bf16.mxu0 %v1952
        %2463 = vmatpush1.bf16.msra.mxu0 %v1951
        %2464 = vmatprep.subr.bf16.mxu0 %v1950
        %2465 = vmatpush1.bf16.msra.mxu0 %v1949
        %2466 = vmatprep.subr.bf16.mxu0 %v1948
        %2467 = vmatpush1.bf16.msra.mxu0 %v1947
        %2468 = vmatprep.subr.bf16.mxu0 %v1946
        %2469 = vmatpush1.bf16.msra.mxu0 %v1945
        %2470 = vmatprep.subr.bf16.mxu0 %v1944
        %2471 = vmatpush1.bf16.msra.mxu0 %v1943
        %2472 = vmatprep.subr.bf16.mxu0 %v1942
        %2473 = vmatpush1.bf16.msra.mxu0 %v1941
        %2474 = vmatprep.subr.bf16.mxu0 %v1940
        %2475 = vmatpush1.bf16.msra.mxu0 %v1939
        %2476 = vmatprep.subr.bf16.mxu0 %v1970
        %2477 = vmatpush2.bf16.msra.mxu0 %v1969
        %2478 = vmatprep.subr.bf16.mxu0 %v1968
        %2479 = vmatpush2.bf16.msra.mxu0 %v1967
        %2480 = vmatprep.subr.bf16.mxu0 %v1966
        %2481 = vmatpush2.bf16.msra.mxu0 %v1965
        %2482 = vmatprep.subr.bf16.mxu0 %v1964
        %2483 = vmatpush2.bf16.msra.mxu0 %v1963
        %2484 = vmatprep.subr.bf16.mxu0 %v1962
        %2485 = vmatpush2.bf16.msra.mxu0 %v1961
        %2486 = vmatprep.subr.bf16.mxu0 %v1960
        %2487 = vmatpush2.bf16.msra.mxu0 %v1959
        %2488 = vmatprep.subr.bf16.mxu0 %v1958
        %2489 = vmatpush2.bf16.msra.mxu0 %v1957
        %2490 = vmatprep.subr.bf16.mxu0 %v1956
        %2491 = vmatpush2.bf16.msra.mxu0 %v1955
        %2492 = vmatprep.mubr.bf16.mxu0 %v1126
        %2493 = vmatmul.mubr.bf16.gmra.mxu0 %v1125
        %v2494 = vpop.f32.mrf.mxu0
        %v2495 = vadd.f32 %v2454, %v2494
        %v2496 = vpop.f32.mrf.mxu0
        %v2497 = vadd.f32 %v2456, %v2496
        %v2498 = vpop.f32.mrf.mxu0
        %v2499 = vpop.f32.mrf.mxu0
        %2500 = vdwg.mxu0
        %2501 = vmatprep.subr.bf16.mxu0 %v1986
        %2502 = vmatpush1.bf16.msra.mxu0 %v1985
        %2503 = vmatprep.subr.bf16.mxu0 %v1984
        %2504 = vmatpush1.bf16.msra.mxu0 %v1983
        %2505 = vmatprep.subr.bf16.mxu0 %v1982
        %2506 = vmatpush1.bf16.msra.mxu0 %v1981
        %2507 = vmatprep.subr.bf16.mxu0 %v1980
        %2508 = vmatpush1.bf16.msra.mxu0 %v1979
        %2509 = vmatprep.subr.bf16.mxu0 %v1978
        %2510 = vmatpush1.bf16.msra.mxu0 %v1977
        %2511 = vmatprep.subr.bf16.mxu0 %v1976
        %2512 = vmatpush1.bf16.msra.mxu0 %v1975
        %2513 = vmatprep.subr.bf16.mxu0 %v1974
        %2514 = vmatpush1.bf16.msra.mxu0 %v1973
        %2515 = vmatprep.subr.bf16.mxu0 %v1972
        %2516 = vmatpush1.bf16.msra.mxu0 %v1971
        %2517 = vmatprep.subr.bf16.mxu0 %v2002
        %2518 = vmatpush2.bf16.msra.mxu0 %v2001
        %2519 = vmatprep.subr.bf16.mxu0 %v2000
        %2520 = vmatpush2.bf16.msra.mxu0 %v1999
        %2521 = vmatprep.subr.bf16.mxu0 %v1998
        %2522 = vmatpush2.bf16.msra.mxu0 %v1997
        %2523 = vmatprep.subr.bf16.mxu0 %v1996
        %2524 = vmatpush2.bf16.msra.mxu0 %v1995
        %2525 = vmatprep.subr.bf16.mxu0 %v1994
        %2526 = vmatpush2.bf16.msra.mxu0 %v1993
        %2527 = vmatprep.subr.bf16.mxu0 %v1992
        %2528 = vmatpush2.bf16.msra.mxu0 %v1991
        %2529 = vmatprep.subr.bf16.mxu0 %v1990
        %2530 = vmatpush2.bf16.msra.mxu0 %v1989
        %2531 = vmatprep.subr.bf16.mxu0 %v1988
        %2532 = vmatpush2.bf16.msra.mxu0 %v1987
        %2533 = vmatprep.mubr.bf16.mxu0 %v1128
        %2534 = vmatmul.mubr.bf16.gmra.mxu0 %v1127
        %v2535 = vpop.f32.mrf.mxu0
        %v2536 = vadd.f32 %v2495, %v2535
        %v2537 = vpop.f32.mrf.mxu0
        %v2538 = vadd.f32 %v2497, %v2537
        %v2539 = vpop.f32.mrf.mxu0
        %v2540 = vpop.f32.mrf.mxu0
        %2541 = vdwg.mxu0
        %2542 = vmatprep.subr.bf16.mxu0 %v2018
        %2543 = vmatpush1.bf16.msra.mxu0 %v2017
        %2544 = vmatprep.subr.bf16.mxu0 %v2016
        %2545 = vmatpush1.bf16.msra.mxu0 %v2015
        %2546 = vmatprep.subr.bf16.mxu0 %v2014
        %2547 = vmatpush1.bf16.msra.mxu0 %v2013
        %2548 = vmatprep.subr.bf16.mxu0 %v2012
        %2549 = vmatpush1.bf16.msra.mxu0 %v2011
        %2550 = vmatprep.subr.bf16.mxu0 %v2010
        %2551 = vmatpush1.bf16.msra.mxu0 %v2009
        %2552 = vmatprep.subr.bf16.mxu0 %v2008
        %2553 = vmatpush1.bf16.msra.mxu0 %v2007
        %2554 = vmatprep.subr.bf16.mxu0 %v2006
        %2555 = vmatpush1.bf16.msra.mxu0 %v2005
        %2556 = vmatprep.subr.bf16.mxu0 %v2004
        %2557 = vmatpush1.bf16.msra.mxu0 %v2003
        %2558 = vmatprep.subr.bf16.mxu0 %v2034
        %2559 = vmatpush2.bf16.msra.mxu0 %v2033
        %2560 = vmatprep.subr.bf16.mxu0 %v2032
        %2561 = vmatpush2.bf16.msra.mxu0 %v2031
        %2562 = vmatprep.subr.bf16.mxu0 %v2030
        %2563 = vmatpush2.bf16.msra.mxu0 %v2029
        %2564 = vmatprep.subr.bf16.mxu0 %v2028
        %2565 = vmatpush2.bf16.msra.mxu0 %v2027
        %2566 = vmatprep.subr.bf16.mxu0 %v2026
        %2567 = vmatpush2.bf16.msra.mxu0 %v2025
        %2568 = vmatprep.subr.bf16.mxu0 %v2024
        %2569 = vmatpush2.bf16.msra.mxu0 %v2023
        %2570 = vmatprep.subr.bf16.mxu0 %v2022
        %2571 = vmatpush2.bf16.msra.mxu0 %v2021
        %2572 = vmatprep.subr.bf16.mxu0 %v2020
        %2573 = vmatpush2.bf16.msra.mxu0 %v2019
        %2574 = vmatprep.mubr.bf16.mxu0 %v1130
        %2575 = vmatmul.mubr.bf16.gmra.mxu0 %v1129
        %v2576 = vpop.f32.mrf.mxu0
        %v2577 = vadd.f32 %v2536, %v2576
        %v2578 = vpop.f32.mrf.mxu0
        %v2579 = vadd.f32 %v2538, %v2578
        %v2580 = vpop.f32.mrf.mxu0
        %v2581 = vpop.f32.mrf.mxu0
        %2582 = vdwg.mxu0
        %2583 = vmatprep.subr.bf16.mxu0 %v2050
        %2584 = vmatpush1.bf16.msra.mxu0 %v2049
        %2585 = vmatprep.subr.bf16.mxu0 %v2048
        %2586 = vmatpush1.bf16.msra.mxu0 %v2047
        %2587 = vmatprep.subr.bf16.mxu0 %v2046
        %2588 = vmatpush1.bf16.msra.mxu0 %v2045
        %2589 = vmatprep.subr.bf16.mxu0 %v2044
        %2590 = vmatpush1.bf16.msra.mxu0 %v2043
        %2591 = vmatprep.subr.bf16.mxu0 %v2042
        %2592 = vmatpush1.bf16.msra.mxu0 %v2041
        %2593 = vmatprep.subr.bf16.mxu0 %v2040
        %2594 = vmatpush1.bf16.msra.mxu0 %v2039
        %2595 = vmatprep.subr.bf16.mxu0 %v2038
        %2596 = vmatpush1.bf16.msra.mxu0 %v2037
        %2597 = vmatprep.subr.bf16.mxu0 %v2036
        %2598 = vmatpush1.bf16.msra.mxu0 %v2035
        %2599 = vmatprep.subr.bf16.mxu0 %v2066
        %2600 = vmatpush2.bf16.msra.mxu0 %v2065
        %2601 = vmatprep.subr.bf16.mxu0 %v2064
        %2602 = vmatpush2.bf16.msra.mxu0 %v2063
        %2603 = vmatprep.subr.bf16.mxu0 %v2062
        %2604 = vmatpush2.bf16.msra.mxu0 %v2061
        %2605 = vmatprep.subr.bf16.mxu0 %v2060
        %2606 = vmatpush2.bf16.msra.mxu0 %v2059
        %2607 = vmatprep.subr.bf16.mxu0 %v2058
        %2608 = vmatpush2.bf16.msra.mxu0 %v2057
        %2609 = vmatprep.subr.bf16.mxu0 %v2056
        %2610 = vmatpush2.bf16.msra.mxu0 %v2055
        %2611 = vmatprep.subr.bf16.mxu0 %v2054
        %2612 = vmatpush2.bf16.msra.mxu0 %v2053
        %2613 = vmatprep.subr.bf16.mxu0 %v2052
        %2614 = vmatpush2.bf16.msra.mxu0 %v2051
        %2615 = vmatprep.mubr.bf16.mxu0 %v1132
        %2616 = vmatmul.mubr.bf16.gmra.mxu0 %v1131
        %v2617 = vpop.f32.mrf.mxu0
        %v2618 = vadd.f32 %v2577, %v2617
        %v2619 = vpop.f32.mrf.mxu0
        %v2620 = vadd.f32 %v2579, %v2619
        %v2621 = vpop.f32.mrf.mxu0
        %v2622 = vpop.f32.mrf.mxu0
        %2623 = vdwg.mxu0
        %2624 = vmatprep.subr.bf16.mxu0 %v2082
        %2625 = vmatpush1.bf16.msra.mxu0 %v2081
        %2626 = vmatprep.subr.bf16.mxu0 %v2080
        %2627 = vmatpush1.bf16.msra.mxu0 %v2079
        %2628 = vmatprep.subr.bf16.mxu0 %v2078
        %2629 = vmatpush1.bf16.msra.mxu0 %v2077
        %2630 = vmatprep.subr.bf16.mxu0 %v2076
        %2631 = vmatpush1.bf16.msra.mxu0 %v2075
        %2632 = vmatprep.subr.bf16.mxu0 %v2074
        %2633 = vmatpush1.bf16.msra.mxu0 %v2073
        %2634 = vmatprep.subr.bf16.mxu0 %v2072
        %2635 = vmatpush1.bf16.msra.mxu0 %v2071
        %2636 = vmatprep.subr.bf16.mxu0 %v2070
        %2637 = vmatpush1.bf16.msra.mxu0 %v2069
        %2638 = vmatprep.subr.bf16.mxu0 %v2068
        %2639 = vmatpush1.bf16.msra.mxu0 %v2067
        %2640 = vmatprep.subr.bf16.mxu0 %v2098
        %2641 = vmatpush2.bf16.msra.mxu0 %v2097
        %2642 = vmatprep.subr.bf16.mxu0 %v2096
        %2643 = vmatpush2.bf16.msra.mxu0 %v2095
        %2644 = vmatprep.subr.bf16.mxu0 %v2094
        %2645 = vmatpush2.bf16.msra.mxu0 %v2093
        %2646 = vmatprep.subr.bf16.mxu0 %v2092
        %2647 = vmatpush2.bf16.msra.mxu0 %v2091
        %2648 = vmatprep.subr.bf16.mxu0 %v2090
        %2649 = vmatpush2.bf16.msra.mxu0 %v2089
        %2650 = vmatprep.subr.bf16.mxu0 %v2088
        %2651 = vmatpush2.bf16.msra.mxu0 %v2087
        %2652 = vmatprep.subr.bf16.mxu0 %v2086
        %2653 = vmatpush2.bf16.msra.mxu0 %v2085
        %2654 = vmatprep.subr.bf16.mxu0 %v2084
        %2655 = vmatpush2.bf16.msra.mxu0 %v2083
        %2656 = vmatprep.mubr.bf16.mxu0 %v1134
        %2657 = vmatmul.mubr.bf16.gmra.mxu0 %v1133
        %v2658 = vpop.f32.mrf.mxu0
        %v2659 = vadd.f32 %v2618, %v2658
        %v2660 = vpop.f32.mrf.mxu0
        %v2661 = vadd.f32 %v2620, %v2660
        %v2662 = vpop.f32.mrf.mxu0
        %v2663 = vpop.f32.mrf.mxu0
        %2664 = vdwg.mxu0
        %2665 = vmatprep.subr.bf16.mxu0 %v2114
        %2666 = vmatpush1.bf16.msra.mxu0 %v2113
        %2667 = vmatprep.subr.bf16.mxu0 %v2112
        %2668 = vmatpush1.bf16.msra.mxu0 %v2111
        %2669 = vmatprep.subr.bf16.mxu0 %v2110
        %2670 = vmatpush1.bf16.msra.mxu0 %v2109
        %2671 = vmatprep.subr.bf16.mxu0 %v2108
        %2672 = vmatpush1.bf16.msra.mxu0 %v2107
        %2673 = vmatprep.subr.bf16.mxu0 %v2106
        %2674 = vmatpush1.bf16.msra.mxu0 %v2105
        %2675 = vmatprep.subr.bf16.mxu0 %v2104
        %2676 = vmatpush1.bf16.msra.mxu0 %v2103
        %2677 = vmatprep.subr.bf16.mxu0 %v2102
        %2678 = vmatpush1.bf16.msra.mxu0 %v2101
        %2679 = vmatprep.subr.bf16.mxu0 %v2100
        %2680 = vmatpush1.bf16.msra.mxu0 %v2099
        %2681 = vmatprep.subr.bf16.mxu0 %v2130
        %2682 = vmatpush2.bf16.msra.mxu0 %v2129
        %2683 = vmatprep.subr.bf16.mxu0 %v2128
        %2684 = vmatpush2.bf16.msra.mxu0 %v2127
        %2685 = vmatprep.subr.bf16.mxu0 %v2126
        %2686 = vmatpush2.bf16.msra.mxu0 %v2125
        %2687 = vmatprep.subr.bf16.mxu0 %v2124
        %2688 = vmatpush2.bf16.msra.mxu0 %v2123
        %2689 = vmatprep.subr.bf16.mxu0 %v2122
        %2690 = vmatpush2.bf16.msra.mxu0 %v2121
        %2691 = vmatprep.subr.bf16.mxu0 %v2120
        %2692 = vmatpush2.bf16.msra.mxu0 %v2119
        %2693 = vmatprep.subr.bf16.mxu0 %v2118
        %2694 = vmatpush2.bf16.msra.mxu0 %v2117
        %2695 = vmatprep.subr.bf16.mxu0 %v2116
        %2696 = vmatpush2.bf16.msra.mxu0 %v2115
        %2697 = vmatprep.mubr.bf16.mxu0 %v1136
        %2698 = vmatmul.mubr.bf16.gmra.mxu0 %v1135
        %v2699 = vpop.f32.mrf.mxu0
        %v2700 = vadd.f32 %v2659, %v2699
        %v2701 = vpop.f32.mrf.mxu0
        %v2702 = vadd.f32 %v2661, %v2701
        %v2703 = vpop.f32.mrf.mxu0
        %v2704 = vpop.f32.mrf.mxu0
        %2705 = vdwg.mxu0
        %2706 = vmatprep.subr.bf16.mxu0 %v2146
        %2707 = vmatpush1.bf16.msra.mxu0 %v2145
        %2708 = vmatprep.subr.bf16.mxu0 %v2144
        %2709 = vmatpush1.bf16.msra.mxu0 %v2143
        %2710 = vmatprep.subr.bf16.mxu0 %v2142
        %2711 = vmatpush1.bf16.msra.mxu0 %v2141
        %2712 = vmatprep.subr.bf16.mxu0 %v2140
        %2713 = vmatpush1.bf16.msra.mxu0 %v2139
        %2714 = vmatprep.subr.bf16.mxu0 %v2138
        %2715 = vmatpush1.bf16.msra.mxu0 %v2137
        %2716 = vmatprep.subr.bf16.mxu0 %v2136
        %2717 = vmatpush1.bf16.msra.mxu0 %v2135
        %2718 = vmatprep.subr.bf16.mxu0 %v2134
        %2719 = vmatpush1.bf16.msra.mxu0 %v2133
        %2720 = vmatprep.subr.bf16.mxu0 %v2132
        %2721 = vmatpush1.bf16.msra.mxu0 %v2131
        %2722 = vmatprep.subr.bf16.mxu0 %v2162
        %2723 = vmatpush2.bf16.msra.mxu0 %v2161
        %2724 = vmatprep.subr.bf16.mxu0 %v2160
        %2725 = vmatpush2.bf16.msra.mxu0 %v2159
        %2726 = vmatprep.subr.bf16.mxu0 %v2158
        %2727 = vmatpush2.bf16.msra.mxu0 %v2157
        %2728 = vmatprep.subr.bf16.mxu0 %v2156
        %2729 = vmatpush2.bf16.msra.mxu0 %v2155
        %2730 = vmatprep.subr.bf16.mxu0 %v2154
        %2731 = vmatpush2.bf16.msra.mxu0 %v2153
        %2732 = vmatprep.subr.bf16.mxu0 %v2152
        %2733 = vmatpush2.bf16.msra.mxu0 %v2151
        %2734 = vmatprep.subr.bf16.mxu0 %v2150
        %2735 = vmatpush2.bf16.msra.mxu0 %v2149
        %2736 = vmatprep.subr.bf16.mxu0 %v2148
        %2737 = vmatpush2.bf16.msra.mxu0 %v2147
        %2738 = vmatprep.mubr.bf16.mxu0 %v1138
        %2739 = vmatmul.mubr.bf16.gmra.mxu0 %v1137
        %v2740 = vpop.f32.mrf.mxu0
        %v2741 = vadd.f32 %v2700, %v2740
        %v2742 = vpop.f32.mrf.mxu0
        %v2743 = vadd.f32 %v2702, %v2742
        %v2744 = vpop.f32.mrf.mxu0
        %v2745 = vpop.f32.mrf.mxu0
        %2746 = vdwg.mxu0
        %v2747 = vrot.slane %v2741, 4
        %v2748 = vadd.f32 %v2741, %v2747
        %v2749 = vrot.slane %v2748, 2
        %v2750 = vadd.f32 %v2748, %v2749
        %v2751 = vrot.slane %v2750, 1
        %v2752 = vadd.f32 %v2750, %v2751
        %v2753 = vrot.slane %v2743, 4
        %v2754 = vadd.f32 %v2743, %v2753
        %v2755 = vrot.slane %v2754, 2
        %v2756 = vadd.f32 %v2754, %v2755
        %v2757 = vrot.slane %v2756, 1
        %v2758 = vadd.f32 %v2756, %v2757
        %v2759 = vmul.f32 %v2752, %v670
        %v2760 = vmul.f32 %v2758, %v670
        %v2761 = vmul.f32 %v2741, %v2741
        %v2762 = vmul.f32 %v2743, %v2743
        %v2763 = vrot.slane %v2761, 4
        %v2764 = vadd.f32 %v2761, %v2763
        %v2765 = vrot.slane %v2764, 2
        %v2766 = vadd.f32 %v2764, %v2765
        %v2767 = vrot.slane %v2766, 1
        %v2768 = vadd.f32 %v2766, %v2767
        %v2769 = vrot.slane %v2762, 4
        %v2770 = vadd.f32 %v2762, %v2769
        %v2771 = vrot.slane %v2770, 2
        %v2772 = vadd.f32 %v2770, %v2771
        %v2773 = vrot.slane %v2772, 1
        %v2774 = vadd.f32 %v2772, %v2773
        %v2775 = vmul.f32 %v2768, %v670
        %v2776 = vmul.f32 %v2774, %v670
        %v2777 = vmul.f32 %v2759, %v2759
        %v2778 = vmul.f32 %v2760, %v2760
        %v2779 = vsub.f32 %v2775, %v2777
        %v2780 = vsub.f32 %v2776, %v2778
        %v2781 = vsub.f32 %v2741, %v2759
        %v2782 = vsub.f32 %v2743, %v2760
        %v2783 = vadd.f32 %v2779, 1e-05
        %v2784 = vadd.f32 %v2780, 1e-05
        %v2785 = vrsqrt.pop %v2783
        %v2786 = vrsqrt.pop %v2784
        %v2787 = vmul.f32 %v2781, %v2785
        %v2788 = vmul.f32 %v2782, %v2786
        %2789 = vset.pattern.permute.xlu0 6
        %2790 = vperm.xlu0 %2789, %v649
        %v2791 = vpop.permute.xlu0 %2790
        %v2793 = vmul.f32 %v2787, %v2791
        %v2794 = vmul.f32 %v2788, %v2791
        %2795 = vset.pattern.permute.xlu0 7
        %2796 = vperm.xlu0 %2795, %v649
        %v2797 = vpop.permute.xlu0 %2796
        %v2799 = vadd.f32 %v2793, %v2797
        %v2800 = vadd.f32 %v2794, %v2797
        %v2801 = vpack.c.bf16 %v2799, %v2799
        %v2802 = vpack.c.bf16 %v2800, %v2800
        %2804 = vset.pattern.permute.xlu0 0
        %2805 = vperm.xlu0 %2804, %v994
        %v2806 = vpop.permute.xlu0 %2805
        %2809 = vset.pattern.permute.xlu0 0
        %2810 = vperm.xlu0 %2809, %v995
        %v2811 = vpop.permute.xlu0 %2810
        %2814 = vset.pattern.permute.xlu0 0
        %2815 = vperm.xlu0 %2814, %v996
        %v2816 = vpop.permute.xlu0 %2815
        %2819 = vset.pattern.permute.xlu0 0
        %2820 = vperm.xlu0 %2819, %v997
        %v2821 = vpop.permute.xlu0 %2820
        %v2827 = vunpack.c.l.b16 %v990
        %v2828 = vunpack.c.l.b16 %v991
        %v2829 = vunpack.c.l.b16 %v992
        %v2830 = vunpack.c.l.b16 %v993
        %v2831 = vpack.c.b16 %v2828, %v2827
        %v2832 = vpack.c.b16 %v2830, %v2829
        %vm2833 = vcmask 64512
        %v2835 = vsel %vm2833, %v2831, 0
        %v2838 = vsel %vm2833, %v2832, 0
        %vm2840 = vcmask 1043456
        %v2842 = vsel %vm2840, %v2801, 0
        %v2845 = vsel %vm2840, %v2802, 0
        %2847 = vmatprep.subr.bf16.mxu0 0
        %2848 = vmatpush1.bf16.msra.mxu0 0
        %2849 = vmatprep.subr.bf16.mxu0 0
        %2850 = vmatpush1.bf16.msra.mxu0 0
        %2851 = vmatprep.subr.bf16.mxu0 0
        %2852 = vmatpush1.bf16.msra.mxu0 0
        %2853 = vmatprep.subr.bf16.mxu0 0
        %2854 = vmatpush1.bf16.msra.mxu0 0
        %2855 = vmatprep.subr.bf16.mxu0 0
        %2856 = vmatpush1.bf16.msra.mxu0 0
        %2857 = vmatprep.subr.bf16.mxu0 0
        %2858 = vmatpush1.bf16.msra.mxu0 0
        %2859 = vmatprep.subr.bf16.mxu0 0
        %2860 = vmatpush1.bf16.msra.mxu0 0
        %2861 = vmatprep.subr.bf16.mxu0 %v2845
        %2862 = vmatpush1.bf16.msra.mxu0 %v2842
        %2863 = vmatprep.subr.bf16.mxu0 0
        %2864 = vmatpush2.bf16.msra.mxu0 0
        %2865 = vmatprep.subr.bf16.mxu0 0
        %2866 = vmatpush2.bf16.msra.mxu0 0
        %2867 = vmatprep.subr.bf16.mxu0 0
        %2868 = vmatpush2.bf16.msra.mxu0 0
        %2869 = vmatprep.subr.bf16.mxu0 0
        %2870 = vmatpush2.bf16.msra.mxu0 0
        %2871 = vmatprep.subr.bf16.mxu0 0
        %2872 = vmatpush2.bf16.msra.mxu0 0
        %2873 = vmatprep.subr.bf16.mxu0 0
        %2874 = vmatpush2.bf16.msra.mxu0 0
        %2875 = vmatprep.subr.bf16.mxu0 0
        %2876 = vmatpush2.bf16.msra.mxu0 0
        %2877 = vmatprep.subr.bf16.mxu0 0
        %2878 = vmatpush2.bf16.msra.mxu0 0
        %2879 = vmatprep.mubr.bf16.mxu0 0
        %2880 = vmatmul.mubr.bf16.gmra.mxu0 %v2835
        %v2881 = vpop.f32.mrf.mxu0
        %v2882 = vadd.f32 %v2806, %v2881
        %v2883 = vpop.f32.mrf.mxu0
        %v2884 = vadd.f32 %v2806, %v2883
        %v2885 = vpop.f32.mrf.mxu0
        %v2886 = vadd.f32 %v2811, %v2885
        %v2887 = vpop.f32.mrf.mxu0
        %v2888 = vadd.f32 %v2811, %v2887
        %2889 = vmatprep.mubr.bf16.mxu0 0
        %2890 = vmatmul.mubr.bf16.gmra.mxu0 %v2838
        %v2891 = vpop.f32.mrf.mxu0
        %v2892 = vadd.f32 %v2816, %v2891
        %v2893 = vpop.f32.mrf.mxu0
        %v2894 = vadd.f32 %v2816, %v2893
        %v2895 = vpop.f32.mrf.mxu0
        %v2896 = vadd.f32 %v2821, %v2895
        %v2897 = vpop.f32.mrf.mxu0
        %v2898 = vadd.f32 %v2821, %v2897
        %2899 = vdwg.mxu0
        %v2900 = vmul.f32 %v2882, 0.5
        %v2901 = vmul.f32 %v2884, 0.5
        %v2902 = vmul.f32 %v2886, 0.5
        %v2903 = vmul.f32 %v2888, 0.5
        %v2904 = vmul.f32 %v2892, 0.5
        %v2905 = vmul.f32 %v2894, 0.5
        %v2906 = vmul.f32 %v2896, 0.5
        %v2907 = vmul.f32 %v2898, 0.5
        %v2908 = vmul.f32 %v2882, 0.70710677
        %v2909 = vmul.f32 %v2884, 0.70710677
        %v2910 = vmul.f32 %v2886, 0.70710677
        %v2911 = vmul.f32 %v2888, 0.70710677
        %v2912 = vmul.f32 %v2892, 0.70710677
        %v2913 = vmul.f32 %v2894, 0.70710677
        %v2914 = vmul.f32 %v2896, 0.70710677
        %v2915 = vmul.f32 %v2898, 0.70710677
        %v2916 = vand.u32 2147483647, %v2908
        %v2917 = vand.u32 2147483647, %v2909
        %v2918 = vand.u32 2147483647, %v2910
        %v2919 = vand.u32 2147483647, %v2911
        %v2920 = vand.u32 2147483647, %v2912
        %v2921 = vand.u32 2147483647, %v2913
        %v2922 = vand.u32 2147483647, %v2914
        %v2923 = vand.u32 2147483647, %v2915
        %v2924 = vmul.f32 %v2916, 0.3275911
        %v2925 = vmul.f32 %v2917, 0.3275911
        %v2926 = vmul.f32 %v2918, 0.3275911
        %v2927 = vmul.f32 %v2919, 0.3275911
        %v2928 = vmul.f32 %v2920, 0.3275911
        %v2929 = vmul.f32 %v2921, 0.3275911
        %v2930 = vmul.f32 %v2922, 0.3275911
        %v2931 = vmul.f32 %v2923, 0.3275911
        %v2932 = vadd.f32 %v2924, 1.0
        %v2933 = vadd.f32 %v2925, 1.0
        %v2934 = vadd.f32 %v2926, 1.0
        %v2935 = vadd.f32 %v2927, 1.0
        %v2936 = vadd.f32 %v2928, 1.0
        %v2937 = vadd.f32 %v2929, 1.0
        %v2938 = vadd.f32 %v2930, 1.0
        %v2939 = vadd.f32 %v2931, 1.0
        %v2940 = vrcp.pop %v2932
        %v2941 = vmul.f32 1.0, %v2940
        %v2942 = vrcp.pop %v2933
        %v2943 = vmul.f32 1.0, %v2942
        %v2944 = vrcp.pop %v2934
        %v2945 = vmul.f32 1.0, %v2944
        %v2946 = vrcp.pop %v2935
        %v2947 = vmul.f32 1.0, %v2946
        %v2948 = vrcp.pop %v2936
        %v2949 = vmul.f32 1.0, %v2948
        %v2950 = vrcp.pop %v2937
        %v2951 = vmul.f32 1.0, %v2950
        %v2952 = vrcp.pop %v2938
        %v2953 = vmul.f32 1.0, %v2952
        %v2954 = vrcp.pop %v2939
        %v2955 = vmul.f32 1.0, %v2954
        %v2956 = vmul.f32 %v2941, 1.0614054
        %v2957 = vmul.f32 %v2943, 1.0614054
        %v2958 = vmul.f32 %v2945, 1.0614054
        %v2959 = vmul.f32 %v2947, 1.0614054
        %v2960 = vmul.f32 %v2949, 1.0614054
        %v2961 = vmul.f32 %v2951, 1.0614054
        %v2962 = vmul.f32 %v2953, 1.0614054
        %v2963 = vmul.f32 %v2955, 1.0614054
        %v2964 = vadd.f32 %v2956, -1.4531521
        %v2965 = vadd.f32 %v2957, -1.4531521
        %v2966 = vadd.f32 %v2958, -1.4531521
        %v2967 = vadd.f32 %v2959, -1.4531521
        %v2968 = vadd.f32 %v2960, -1.4531521
        %v2969 = vadd.f32 %v2961, -1.4531521
        %v2970 = vadd.f32 %v2962, -1.4531521
        %v2971 = vadd.f32 %v2963, -1.4531521
        %v2972 = vmul.f32 %v2964, %v2941
        %v2973 = vmul.f32 %v2965, %v2943
        %v2974 = vmul.f32 %v2966, %v2945
        %v2975 = vmul.f32 %v2967, %v2947
        %v2976 = vmul.f32 %v2968, %v2949
        %v2977 = vmul.f32 %v2969, %v2951
        %v2978 = vmul.f32 %v2970, %v2953
        %v2979 = vmul.f32 %v2971, %v2955
        %v2980 = vadd.f32 %v2972, 1.4214138
        %v2981 = vadd.f32 %v2973, 1.4214138
        %v2982 = vadd.f32 %v2974, 1.4214138
        %v2983 = vadd.f32 %v2975, 1.4214138
        %v2984 = vadd.f32 %v2976, 1.4214138
        %v2985 = vadd.f32 %v2977, 1.4214138
        %v2986 = vadd.f32 %v2978, 1.4214138
        %v2987 = vadd.f32 %v2979, 1.4214138
        %v2988 = vmul.f32 %v2980, %v2941
        %v2989 = vmul.f32 %v2981, %v2943
        %v2990 = vmul.f32 %v2982, %v2945
        %v2991 = vmul.f32 %v2983, %v2947
        %v2992 = vmul.f32 %v2984, %v2949
        %v2993 = vmul.f32 %v2985, %v2951
        %v2994 = vmul.f32 %v2986, %v2953
        %v2995 = vmul.f32 %v2987, %v2955
        %v2996 = vadd.f32 %v2988, -0.28449672
        %v2997 = vadd.f32 %v2989, -0.28449672
        %v2998 = vadd.f32 %v2990, -0.28449672
        %v2999 = vadd.f32 %v2991, -0.28449672
        %v3000 = vadd.f32 %v2992, -0.28449672
        %v3001 = vadd.f32 %v2993, -0.28449672
        %v3002 = vadd.f32 %v2994, -0.28449672
        %v3003 = vadd.f32 %v2995, -0.28449672
        %v3004 = vmul.f32 %v2996, %v2941
        %v3005 = vmul.f32 %v2997, %v2943
        %v3006 = vmul.f32 %v2998, %v2945
        %v3007 = vmul.f32 %v2999, %v2947
        %v3008 = vmul.f32 %v3000, %v2949
        %v3009 = vmul.f32 %v3001, %v2951
        %v3010 = vmul.f32 %v3002, %v2953
        %v3011 = vmul.f32 %v3003, %v2955
        %v3012 = vadd.f32 %v3004, 0.2548296
        %v3013 = vadd.f32 %v3005, 0.2548296
        %v3014 = vadd.f32 %v3006, 0.2548296
        %v3015 = vadd.f32 %v3007, 0.2548296
        %v3016 = vadd.f32 %v3008, 0.2548296
        %v3017 = vadd.f32 %v3009, 0.2548296
        %v3018 = vadd.f32 %v3010, 0.2548296
        %v3019 = vadd.f32 %v3011, 0.2548296
        %v3020 = vmul.f32 %v3012, %v2941
        %v3021 = vmul.f32 %v3013, %v2943
        %v3022 = vmul.f32 %v3014, %v2945
        %v3023 = vmul.f32 %v3015, %v2947
        %v3024 = vmul.f32 %v3016, %v2949
        %v3025 = vmul.f32 %v3017, %v2951
        %v3026 = vmul.f32 %v3018, %v2953
        %v3027 = vmul.f32 %v3019, %v2955
        %v3028 = vsub.f32 0.0, %v2916
        %v3029 = vsub.f32 0.0, %v2917
        %v3030 = vsub.f32 0.0, %v2918
        %v3031 = vsub.f32 0.0, %v2919
        %v3032 = vsub.f32 0.0, %v2920
        %v3033 = vsub.f32 0.0, %v2921
        %v3034 = vsub.f32 0.0, %v2922
        %v3035 = vsub.f32 0.0, %v2923
        %v3036 = vmul.f32 %v3028, %v2916
        %v3037 = vmul.f32 %v3029, %v2917
        %v3038 = vmul.f32 %v3030, %v2918
        %v3039 = vmul.f32 %v3031, %v2919
        %v3040 = vmul.f32 %v3032, %v2920
        %v3041 = vmul.f32 %v3033, %v2921
        %v3042 = vmul.f32 %v3034, %v2922
        %v3043 = vmul.f32 %v3035, %v2923
        %v3044 = vmul.f32 %v3036, 1.442695
        %v3045 = vpow.pop %v3044
        %v3046 = vmul.f32 %v3037, 1.442695
        %v3047 = vpow.pop %v3046
        %v3048 = vmul.f32 %v3038, 1.442695
        %v3049 = vpow.pop %v3048
        %v3050 = vmul.f32 %v3039, 1.442695
        %v3051 = vpow.pop %v3050
        %v3052 = vmul.f32 %v3040, 1.442695
        %v3053 = vpow.pop %v3052
        %v3054 = vmul.f32 %v3041, 1.442695
        %v3055 = vpow.pop %v3054
        %v3056 = vmul.f32 %v3042, 1.442695
        %v3057 = vpow.pop %v3056
        %v3058 = vmul.f32 %v3043, 1.442695
        %v3059 = vpow.pop %v3058
        %v3060 = vmul.f32 %v3020, %v3045
        %v3061 = vmul.f32 %v3021, %v3047
        %v3062 = vmul.f32 %v3022, %v3049
        %v3063 = vmul.f32 %v3023, %v3051
        %v3064 = vmul.f32 %v3024, %v3053
        %v3065 = vmul.f32 %v3025, %v3055
        %v3066 = vmul.f32 %v3026, %v3057
        %v3067 = vmul.f32 %v3027, %v3059
        %v3068 = vsub.f32 1.0, %v3060
        %v3069 = vsub.f32 1.0, %v3061
        %v3070 = vsub.f32 1.0, %v3062
        %v3071 = vsub.f32 1.0, %v3063
        %v3072 = vsub.f32 1.0, %v3064
        %v3073 = vsub.f32 1.0, %v3065
        %v3074 = vsub.f32 1.0, %v3066
        %v3075 = vsub.f32 1.0, %v3067
        %vm3076 = vcmp.ge.f32.partialorder %v2908, 0.0
        %vm3077 = vcmp.ge.f32.partialorder %v2909, 0.0
        %vm3078 = vcmp.ge.f32.partialorder %v2910, 0.0
        %vm3079 = vcmp.ge.f32.partialorder %v2911, 0.0
        %vm3080 = vcmp.ge.f32.partialorder %v2912, 0.0
        %vm3081 = vcmp.ge.f32.partialorder %v2913, 0.0
        %vm3082 = vcmp.ge.f32.partialorder %v2914, 0.0
        %vm3083 = vcmp.ge.f32.partialorder %v2915, 0.0
        %v3084 = vsub.f32 0.0, %v3068
        %v3085 = vsub.f32 0.0, %v3069
        %v3086 = vsub.f32 0.0, %v3070
        %v3087 = vsub.f32 0.0, %v3071
        %v3088 = vsub.f32 0.0, %v3072
        %v3089 = vsub.f32 0.0, %v3073
        %v3090 = vsub.f32 0.0, %v3074
        %v3091 = vsub.f32 0.0, %v3075
        %v3092 = vsel %vm3076, %v3068, %v3084
        %v3093 = vsel %vm3077, %v3069, %v3085
        %v3094 = vsel %vm3078, %v3070, %v3086
        %v3095 = vsel %vm3079, %v3071, %v3087
        %v3096 = vsel %vm3080, %v3072, %v3088
        %v3097 = vsel %vm3081, %v3073, %v3089
        %v3098 = vsel %vm3082, %v3074, %v3090
        %v3099 = vsel %vm3083, %v3075, %v3091
        %v3100 = vadd.f32 %v3092, 1.0
        %v3101 = vadd.f32 %v3093, 1.0
        %v3102 = vadd.f32 %v3094, 1.0
        %v3103 = vadd.f32 %v3095, 1.0
        %v3104 = vadd.f32 %v3096, 1.0
        %v3105 = vadd.f32 %v3097, 1.0
        %v3106 = vadd.f32 %v3098, 1.0
        %v3107 = vadd.f32 %v3099, 1.0
        %v3108 = vmul.f32 %v2900, %v3100
        %v3109 = vmul.f32 %v2901, %v3101
        %v3110 = vmul.f32 %v2902, %v3102
        %v3111 = vmul.f32 %v2903, %v3103
        %v3112 = vmul.f32 %v2904, %v3104
        %v3113 = vmul.f32 %v2905, %v3105
        %v3114 = vmul.f32 %v2906, %v3106
        %v3115 = vmul.f32 %v2907, %v3107
        %v3116 = vpack.c.bf16 %v3110, %v3108
        %v3117 = vpack.c.bf16 %v3111, %v3109
        %v3118 = vpack.c.bf16 %v3114, %v3112
        %v3119 = vpack.c.bf16 %v3115, %v3113
        %3121 = vset.pattern.permute.xlu0 0
        %3122 = vperm.xlu0 %3121, %v999
        %v3123 = vpop.permute.xlu0 %3122
        %vm3125 = vcmask 261120
        %v3127 = vsel %vm3125, %v998, 0
        %3129 = vmatprep.subr.bf16.mxu0 0
        %3130 = vmatpush1.bf16.msra.mxu0 0
        %3131 = vmatprep.subr.bf16.mxu0 0
        %3132 = vmatpush1.bf16.msra.mxu0 0
        %3133 = vmatprep.subr.bf16.mxu0 0
        %3134 = vmatpush1.bf16.msra.mxu0 0
        %3135 = vmatprep.subr.bf16.mxu0 0
        %3136 = vmatpush1.bf16.msra.mxu0 0
        %3137 = vmatprep.subr.bf16.mxu0 0
        %3138 = vmatpush1.bf16.msra.mxu0 0
        %3139 = vmatprep.subr.bf16.mxu0 0
        %3140 = vmatpush1.bf16.msra.mxu0 0
        %3141 = vmatprep.subr.bf16.mxu0 %v3119
        %3142 = vmatpush1.bf16.msra.mxu0 %v3118
        %3143 = vmatprep.subr.bf16.mxu0 %v3117
        %3144 = vmatpush1.bf16.msra.mxu0 %v3116
        %3145 = vmatprep.subr.bf16.mxu0 0
        %3146 = vmatpush2.bf16.msra.mxu0 0
        %3147 = vmatprep.subr.bf16.mxu0 0
        %3148 = vmatpush2.bf16.msra.mxu0 0
        %3149 = vmatprep.subr.bf16.mxu0 0
        %3150 = vmatpush2.bf16.msra.mxu0 0
        %3151 = vmatprep.subr.bf16.mxu0 0
        %3152 = vmatpush2.bf16.msra.mxu0 0
        %3153 = vmatprep.subr.bf16.mxu0 0
        %3154 = vmatpush2.bf16.msra.mxu0 0
        %3155 = vmatprep.subr.bf16.mxu0 0
        %3156 = vmatpush2.bf16.msra.mxu0 0
        %3157 = vmatprep.subr.bf16.mxu0 0
        %3158 = vmatpush2.bf16.msra.mxu0 0
        %3159 = vmatprep.subr.bf16.mxu0 0
        %3160 = vmatpush2.bf16.msra.mxu0 0
        %3161 = vmatprep.mubr.bf16.mxu0 0
        %3162 = vmatmul.mubr.bf16.gmra.mxu0 %v3127
        %v3163 = vpop.f32.mrf.mxu0
        %v3164 = vadd.f32 %v3123, %v3163
        %v3165 = vpop.f32.mrf.mxu0
        %v3166 = vadd.f32 %v3123, %v3165
        %v3167 = vpop.f32.mrf.mxu0
        %v3168 = vpop.f32.mrf.mxu0
        %3169 = vdwg.mxu0
        %v3170 = vshra.s32 %v1059, 4
        %v3171 = vshra.s32 %v1060, 4
        %v3172 = vand.u32 %v1059, 15
        %v3173 = vand.u32 %v1060, 15
        %3174 = vrot.lane.b32.xlu0 %v1052, 17
        %v3175 = vpop.permute.xlu0 %3174
        %3176 = vrot.lane.b32.xlu0 %v1053, 17
        %v3177 = vpop.permute.xlu0 %3176
        %vm3178 = vcmp.lt.s32.totalorder %v1059, 17
        %v3179 = vsel %vm3178, %v3175, %v3177
        %v3180 = vsel %vm3178, %v3177, %v3175
        %vm3181 = vcmp.ge.s32.totalorder %v3170, 1
        %vm3182 = vcmp.ge.s32.totalorder %v3171, 1
        %vm3183 = vcmp.ge.s32.totalorder %v3172, 1
        %vm3184 = vcmp.ge.s32.totalorder %v3173, 1
        %vm3185 = vmand %vm3181, %vm3183
        %vm3186 = vmand %vm3182, %vm3184
        %v3187 = vsel %vm3185, %v3180, 0.0
        %v3188 = vsel %vm3186, %v3179, 0.0
        %3189 = vrot.lane.b32.xlu0 %v1052, 16
        %v3190 = vpop.permute.xlu0 %3189
        %3191 = vrot.lane.b32.xlu0 %v1053, 16
        %v3192 = vpop.permute.xlu0 %3191
        %vm3193 = vcmp.lt.s32.totalorder %v1059, 16
        %v3194 = vsel %vm3193, %v3190, %v3192
        %v3195 = vsel %vm3193, %v3192, %v3190
        %v3196 = vsel %vm3181, %v3195, 0.0
        %v3197 = vsel %vm3182, %v3194, 0.0
        %3198 = vrot.lane.b32.xlu0 %v1052, 15
        %v3199 = vpop.permute.xlu0 %3198
        %3200 = vrot.lane.b32.xlu0 %v1053, 15
        %v3201 = vpop.permute.xlu0 %3200
        %vm3202 = vcmp.lt.s32.totalorder %v1059, 15
        %v3203 = vsel %vm3202, %v3199, %v3201
        %v3204 = vsel %vm3202, %v3201, %v3199
        %vm3205 = vcmp.le.s32.totalorder %v3172, 14
        %vm3206 = vcmp.le.s32.totalorder %v3173, 14
        %vm3207 = vmand %vm3181, %vm3205
        %vm3208 = vmand %vm3182, %vm3206
        %v3209 = vsel %vm3207, %v3204, 0.0
        %v3210 = vsel %vm3208, %v3203, 0.0
        %3211 = vrot.lane.b32.xlu0 %v1052, 1
        %v3212 = vpop.permute.xlu0 %3211
        %3213 = vrot.lane.b32.xlu0 %v1053, 1
        %v3214 = vpop.permute.xlu0 %3213
        %vm3215 = vcmp.lt.s32.totalorder %v1059, 1
        %v3216 = vsel %vm3215, %v3212, %v3214
        %v3217 = vsel %vm3215, %v3214, %v3212
        %v3218 = vsel %vm3183, %v3217, 0.0
        %v3219 = vsel %vm3184, %v3216, 0.0
        %3220 = vrot.lane.b32.xlu0 %v1052, 127
        %v3221 = vpop.permute.xlu0 %3220
        %3222 = vrot.lane.b32.xlu0 %v1053, 127
        %v3223 = vpop.permute.xlu0 %3222
        %vm3224 = vcmp.lt.s32.totalorder %v1059, 127
        %v3225 = vsel %vm3224, %v3221, %v3223
        %v3226 = vsel %vm3224, %v3223, %v3221
        %v3227 = vsel %vm3205, %v3225, 0.0
        %v3228 = vsel %vm3206, %v3226, 0.0
        %3229 = vrot.lane.b32.xlu0 %v1052, 113
        %v3230 = vpop.permute.xlu0 %3229
        %3231 = vrot.lane.b32.xlu0 %v1053, 113
        %v3232 = vpop.permute.xlu0 %3231
        %vm3233 = vcmp.lt.s32.totalorder %v1059, 113
        %v3234 = vsel %vm3233, %v3230, %v3232
        %v3235 = vsel %vm3233, %v3232, %v3230
        %vm3236 = vcmp.le.s32.totalorder %v3170, 14
        %vm3237 = vcmp.le.s32.totalorder %v3171, 14
        %vm3238 = vmand %vm3236, %vm3183
        %vm3239 = vmand %vm3237, %vm3184
        %v3240 = vsel %vm3238, %v3234, 0.0
        %v3241 = vsel %vm3239, %v3235, 0.0
        %3242 = vrot.lane.b32.xlu0 %v1052, 112
        %v3243 = vpop.permute.xlu0 %3242
        %3244 = vrot.lane.b32.xlu0 %v1053, 112
        %v3245 = vpop.permute.xlu0 %3244
        %vm3246 = vcmp.lt.s32.totalorder %v1059, 112
        %v3247 = vsel %vm3246, %v3243, %v3245
        %v3248 = vsel %vm3246, %v3245, %v3243
        %v3249 = vsel %vm3236, %v3247, 0.0
        %v3250 = vsel %vm3237, %v3248, 0.0
        %3251 = vrot.lane.b32.xlu0 %v1052, 111
        %v3252 = vpop.permute.xlu0 %3251
        %3253 = vrot.lane.b32.xlu0 %v1053, 111
        %v3254 = vpop.permute.xlu0 %3253
        %vm3255 = vcmp.lt.s32.totalorder %v1059, 111
        %v3256 = vsel %vm3255, %v3252, %v3254
        %v3257 = vsel %vm3255, %v3254, %v3252
        %vm3258 = vmand %vm3236, %vm3205
        %vm3259 = vmand %vm3237, %vm3206
        %v3260 = vsel %vm3258, %v3256, 0.0
        %v3261 = vsel %vm3259, %v3257, 0.0
        %v3262 = vpack.c.bf16 %v3196, %v3187
        %v3263 = vpack.c.bf16 %v3197, %v3188
        %v3264 = vpack.c.bf16 %v3218, %v3209
        %v3265 = vpack.c.bf16 %v3219, %v3210
        %v3266 = vpack.c.bf16 %v3227, %v1052
        %v3267 = vpack.c.bf16 %v3228, %v1053
        %v3268 = vpack.c.bf16 %v3249, %v3240
        %v3269 = vpack.c.bf16 %v3250, %v3241
        %v3270 = vpack.c.bf16 %v3260, %v3260
        %v3271 = vpack.c.bf16 %v3261, %v3261
        %3273 = vset.pattern.permute.xlu0 0
        %3274 = vperm.xlu0 %3273, %v989
        %v3275 = vpop.permute.xlu0 %3274
        %vm3277 = vcmask 588800
        %v3279 = vsel %vm3277, %v988, 0
        %v3282 = vsel %vm2840, %v3270, 0
        %v3285 = vsel %vm2840, %v3271, 0
        %3287 = vmatprep.subr.bf16.mxu0 0
        %3288 = vmatpush1.bf16.msra.mxu0 0
        %3289 = vmatprep.subr.bf16.mxu0 0
        %3290 = vmatpush1.bf16.msra.mxu0 0
        %3291 = vmatprep.subr.bf16.mxu0 0
        %3292 = vmatpush1.bf16.msra.mxu0 0
        %3293 = vmatprep.subr.bf16.mxu0 %v3285
        %3294 = vmatpush1.bf16.msra.mxu0 %v3282
        %3295 = vmatprep.subr.bf16.mxu0 %v3269
        %3296 = vmatpush1.bf16.msra.mxu0 %v3268
        %3297 = vmatprep.subr.bf16.mxu0 %v3267
        %3298 = vmatpush1.bf16.msra.mxu0 %v3266
        %3299 = vmatprep.subr.bf16.mxu0 %v3265
        %3300 = vmatpush1.bf16.msra.mxu0 %v3264
        %3301 = vmatprep.subr.bf16.mxu0 %v3263
        %3302 = vmatpush1.bf16.msra.mxu0 %v3262
        %3303 = vmatprep.subr.bf16.mxu0 0
        %3304 = vmatpush2.bf16.msra.mxu0 0
        %3305 = vmatprep.subr.bf16.mxu0 0
        %3306 = vmatpush2.bf16.msra.mxu0 0
        %3307 = vmatprep.subr.bf16.mxu0 0
        %3308 = vmatpush2.bf16.msra.mxu0 0
        %3309 = vmatprep.subr.bf16.mxu0 0
        %3310 = vmatpush2.bf16.msra.mxu0 0
        %3311 = vmatprep.subr.bf16.mxu0 0
        %3312 = vmatpush2.bf16.msra.mxu0 0
        %3313 = vmatprep.subr.bf16.mxu0 0
        %3314 = vmatpush2.bf16.msra.mxu0 0
        %3315 = vmatprep.subr.bf16.mxu0 0
        %3316 = vmatpush2.bf16.msra.mxu0 0
        %3317 = vmatprep.subr.bf16.mxu0 0
        %3318 = vmatpush2.bf16.msra.mxu0 0
        %3319 = vmatprep.mubr.bf16.mxu0 0
        %3320 = vmatmul.mubr.bf16.gmra.mxu0 %v3279
        %v3321 = vpop.f32.mrf.mxu0
        %v3322 = vadd.f32 %v3275, %v3321
        %v3323 = vpop.f32.mrf.mxu0
        %v3324 = vadd.f32 %v3275, %v3323
        %v3325 = vpop.f32.mrf.mxu0
        %v3326 = vpop.f32.mrf.mxu0
        %3327 = vdwg.mxu0
        %v3328 = vadd.f32 %v3322, %v3164
        %v3329 = vadd.f32 %v3324, %v3166
        %v3330 = vrot.slane %v3328, 4
        %v3331 = vadd.f32 %v3328, %v3330
        %v3332 = vrot.slane %v3331, 2
        %v3333 = vadd.f32 %v3331, %v3332
        %v3334 = vrot.slane %v3333, 1
        %v3335 = vadd.f32 %v3333, %v3334
        %v3336 = vrot.slane %v3329, 4
        %v3337 = vadd.f32 %v3329, %v3336
        %v3338 = vrot.slane %v3337, 2
        %v3339 = vadd.f32 %v3337, %v3338
        %v3340 = vrot.slane %v3339, 1
        %v3341 = vadd.f32 %v3339, %v3340
        %v3342 = vmul.f32 %v3335, %v670
        %v3343 = vmul.f32 %v3341, %v670
        %v3344 = vmul.f32 %v3328, %v3328
        %v3345 = vmul.f32 %v3329, %v3329
        %v3346 = vrot.slane %v3344, 4
        %v3347 = vadd.f32 %v3344, %v3346
        %v3348 = vrot.slane %v3347, 2
        %v3349 = vadd.f32 %v3347, %v3348
        %v3350 = vrot.slane %v3349, 1
        %v3351 = vadd.f32 %v3349, %v3350
        %v3352 = vrot.slane %v3345, 4
        %v3353 = vadd.f32 %v3345, %v3352
        %v3354 = vrot.slane %v3353, 2
        %v3355 = vadd.f32 %v3353, %v3354
        %v3356 = vrot.slane %v3355, 1
        %v3357 = vadd.f32 %v3355, %v3356
        %v3358 = vmul.f32 %v3351, %v670
        %v3359 = vmul.f32 %v3357, %v670
        %v3360 = vmul.f32 %v3342, %v3342
        %v3361 = vmul.f32 %v3343, %v3343
        %v3362 = vsub.f32 %v3358, %v3360
        %v3363 = vsub.f32 %v3359, %v3361
        %v3364 = vsub.f32 %v3328, %v3342
        %v3365 = vsub.f32 %v3329, %v3343
        %v3366 = vadd.f32 %v3362, 1e-05
        %v3367 = vadd.f32 %v3363, 1e-05
        %v3368 = vrsqrt.pop %v3366
        %v3369 = vrsqrt.pop %v3367
        %v3370 = vmul.f32 %v3364, %v3368
        %v3371 = vmul.f32 %v3365, %v3369
        %3372 = vset.pattern.permute.xlu0 8
        %3373 = vperm.xlu0 %3372, %v649
        %v3374 = vpop.permute.xlu0 %3373
        %v3376 = vmul.f32 %v3370, %v3374
        %v3377 = vmul.f32 %v3371, %v3374
        %3378 = vset.pattern.permute.xlu0 9
        %3379 = vperm.xlu0 %3378, %v649
        %v3380 = vpop.permute.xlu0 %3379
        %v3382 = vadd.f32 %v3376, %v3380
        %v3383 = vadd.f32 %v3377, %v3380
        %v3384 = vmax.f32 %v3382, 0.0
        %v3385 = vmax.f32 %v3383, 0.0
        %v3386 = vld [vmem:[%s3] sm:$0xf]
        %v3387 = vld [vmem:[%s3 + $0x4] sm:$0xf]
        %v3388 = vld [vmem:[%s3 + $0x8] sm:$0xf]
        %v3389 = vld [vmem:[%s3 + $0xc] sm:$0xf]
        %v3390 = vld [vmem:[%s3 + $0x10] sm:$0xf]
        %v3391 = vld [vmem:[%s3 + $0x14] sm:$0xf]
        %v3392 = vld [vmem:[%s3 + $0x18] sm:$0xf]
        %v3393 = vld [vmem:[%s3 + $0x1c] sm:$0xf]
        %v3394 = vld [vmem:[%s3 + $0x20] sm:$0xf]
        %v3395 = vld [vmem:[%s3 + $0x24] sm:$0xf]
        %v3396 = vld [vmem:[%s3 + $0x28] sm:$0xf]
        %v3397 = vld [vmem:[%s3 + $0x2c] sm:$0xf]
        %v3398 = vld [vmem:[%s3 + $0x30] sm:$0xf]
        %v3399 = vld [vmem:[%s3 + $0x34] sm:$0xf]
        %v3400 = vld [vmem:[%s3 + $0x38] sm:$0xf]
        %v3401 = vld [vmem:[%s3 + $0x3c] sm:$0xf]
        %v3402 = vld [vmem:[%s3 + $0x40] sm:$0xf]
        %v3403 = vld [vmem:[%s3 + $0x44] sm:$0xf]
        %v3404 = vld [vmem:[%s3 + $0x48] sm:$0xf]
        %v3405 = vld [vmem:[%s3 + $0x4c] sm:$0xf]
        %v3406 = vld [vmem:[%s3 + $0x50] sm:$0xf]
        %v3407 = vld [vmem:[%s3 + $0x54] sm:$0xf]
        %v3408 = vld [vmem:[%s3 + $0x58] sm:$0xf]
        %v3409 = vld [vmem:[%s3 + $0x5c] sm:$0xf]
        %v3410 = vld [vmem:[%s3 + $0x60] sm:$0xf]
        %v3411 = vld [vmem:[%s3 + $0x64] sm:$0xf]
        %v3412 = vld [vmem:[%s3 + $0x68] sm:$0xf]
        %v3413 = vld [vmem:[%s3 + $0x6c] sm:$0xf]
        %v3414 = vld [vmem:[%s3 + $0x70] sm:$0xf]
        %v3415 = vld [vmem:[%s3 + $0x74] sm:$0xf]
        %v3416 = vld [vmem:[%s3 + $0x78] sm:$0xf]
        %v3417 = vld [vmem:[%s3 + $0x7c] sm:$0xf]
        %v3418 = vld [vmem:[%s3 + $0x80] sm:$0xf]
        %v3419 = vld [vmem:[%s3 + $0x84] sm:$0xf]
        %v3420 = vld [vmem:[%s3 + $0x88] sm:$0xf]
        %v3421 = vld [vmem:[%s3 + $0x8c] sm:$0xf]
        %v3422 = vld [vmem:[%s3 + $0x90] sm:$0xf]
        %v3423 = vld [vmem:[%s3 + $0x94] sm:$0xf]
        %v3424 = vld [vmem:[%s3 + $0x98] sm:$0xf]
        %v3425 = vld [vmem:[%s3 + $0x9c] sm:$0xf]
        %v3426 = vld [vmem:[%s3 + $0xa0] sm:$0xf]
        %v3427 = vld [vmem:[%s3 + $0xa4] sm:$0xf]
        %v3428 = vld [vmem:[%s3 + $0xa8] sm:$0xf]
        %v3429 = vld [vmem:[%s3 + $0xac] sm:$0xf]
        %v3430 = vld [vmem:[%s3 + $0xb0] sm:$0xf]
        %v3431 = vld [vmem:[%s3 + $0xb4] sm:$0xf]
        %v3432 = vld [vmem:[%s3 + $0xb8] sm:$0xf]
        %v3433 = vld [vmem:[%s3 + $0xbc] sm:$0xf]
        %v3434 = vld [vmem:[%s3 + $0xc0] sm:$0xf]
        %v3435 = vld [vmem:[%s3 + $0xc4] sm:$0xf]
        %v3436 = vld [vmem:[%s3 + $0xc8] sm:$0xf]
        %v3437 = vld [vmem:[%s3 + $0xcc] sm:$0xf]
        %v3438 = vld [vmem:[%s3 + $0xd0] sm:$0xf]
        %v3439 = vld [vmem:[%s3 + $0xd4] sm:$0xf]
        %v3440 = vld [vmem:[%s3 + $0xd8] sm:$0xf]
        %v3441 = vld [vmem:[%s3 + $0xdc] sm:$0xf]
        %v3442 = vld [vmem:[%s3 + $0xe0] sm:$0xf]
        %v3443 = vld [vmem:[%s3 + $0xe4] sm:$0xf]
        %v3444 = vld [vmem:[%s3 + $0xe8] sm:$0xf]
        %v3445 = vld [vmem:[%s3 + $0xec] sm:$0xf]
        %v3446 = vld [vmem:[%s3 + $0xf0] sm:$0xf]
        %v3447 = vld [vmem:[%s3 + $0xf4] sm:$0xf]
        %v3448 = vld [vmem:[%s3 + $0xf8] sm:$0xf]
        %v3449 = vld [vmem:[%s3 + $0xfc] sm:$0xf]
        %v3450 = vld [vmem:[%s6] sm:$0xf]
        %v3451 = vld [vmem:[%s7] sm:$0xff]
        %v3452 = vld [vmem:[%s12] sm:$0xf]
        %v3453 = vld [vmem:[%s12 + $0x4] sm:$0xf]
        %v3454 = vld [vmem:[%s12 + $0x8] sm:$0xf]
        %v3455 = vld [vmem:[%s12 + $0xc] sm:$0xf]
        %v3456 = vld [vmem:[%s13] sm:$0xff]
        %v3457 = vld [vmem:[%s13 + $0x8] sm:$0xff]
        %v3458 = vld [vmem:[%s13 + $0x10] sm:$0xff]
        %v3459 = vld [vmem:[%s13 + $0x18] sm:$0xff]
        %v3460 = vld [vmem:[%s14] sm:$0xf]
        %v3461 = vld [vmem:[%s15] sm:$0xff]
        %v3462 = vsel %vm662, %v731, 0.0
        %v3463 = vrot.slane %v3462, 4
        %v3464 = vadd.f32 %v3462, %v3463
        %v3465 = vrot.slane %v3464, 2
        %v3466 = vadd.f32 %v3464, %v3465
        %v3467 = vrot.slane %v3466, 1
        %v3468 = vadd.f32 %v3466, %v3467
        %v3469 = vmul.f32 %v3468, %v670
        %v3470 = vmul.f32 %v731, %v731
        %v3471 = vsel %vm662, %v3470, 0.0
        %v3472 = vrot.slane %v3471, 4
        %v3473 = vadd.f32 %v3471, %v3472
        %v3474 = vrot.slane %v3473, 2
        %v3475 = vadd.f32 %v3473, %v3474
        %v3476 = vrot.slane %v3475, 1
        %v3477 = vadd.f32 %v3475, %v3476
        %v3478 = vmul.f32 %v3477, %v670
        %v3479 = vmul.f32 %v3469, %v3469
        %v3480 = vsub.f32 %v3478, %v3479
        %v3481 = vsub.f32 %v731, %v3469
        %v3482 = vadd.f32 %v3480, 1e-05
        %v3483 = vrsqrt.pop %v3482
        %v3484 = vmul.f32 %v3481, %v3483
        %v3485 = vmul.f32 %v3484, %v1044
        %v3486 = vadd.f32 %v3485, %v1050
        %v3487 = vpack.c.bf16 %v3486, %v3486
        %3489 = vrot.lane.b32.xlu0 %v3487, 64
        %v3490 = vpop.permute.xlu0 %3489
        %v3493 = vsel %vm662, %v3487, %v3490
        %v3495 = vshra.s32 %v1059, 6
        %v3496 = vshra.s32 %v1060, 6
        %v3497 = vshra.s32 %v1061, 6
        %v3498 = vshra.s32 %v1062, 6
        %vm3499 = vcmp.eq.s32.totalorder %v1057, %v3495
        %vm3500 = vcmp.eq.s32.totalorder %v1057, %v3496
        %vm3501 = vcmp.eq.s32.totalorder %v1057, %v3497
        %vm3502 = vcmp.eq.s32.totalorder %v1057, %v3498
        %vm3503 = vmpackc.low %vm3499, %vm3499
        %vm3504 = vmpackc.low %vm3500, %vm3500
        %vm3505 = vmpackc.low %vm3501, %vm3501
        %vm3506 = vmpackc.low %vm3502, %vm3502
        %v3507 = vsel %vm3503, %v3493, 0
        %v3508 = vsel %vm3504, %v3493, 0
        %v3509 = vsel %vm3505, %v3493, 0
        %v3510 = vsel %vm3506, %v3493, 0
        %v3575 = vunpack.c.l.b16 %v3386
        %v3576 = vunpack.c.l.b16 %v3387
        %v3577 = vunpack.c.l.b16 %v3388
        %v3578 = vunpack.c.l.b16 %v3389
        %v3579 = vunpack.c.l.b16 %v3390
        %v3580 = vunpack.c.l.b16 %v3391
        %v3581 = vunpack.c.l.b16 %v3392
        %v3582 = vunpack.c.l.b16 %v3393
        %v3583 = vunpack.c.l.b16 %v3394
        %v3584 = vunpack.c.l.b16 %v3395
        %v3585 = vunpack.c.l.b16 %v3396
        %v3586 = vunpack.c.l.b16 %v3397
        %v3587 = vunpack.c.l.b16 %v3398
        %v3588 = vunpack.c.l.b16 %v3399
        %v3589 = vunpack.c.l.b16 %v3400
        %v3590 = vunpack.c.l.b16 %v3401
        %v3591 = vunpack.c.l.b16 %v3402
        %v3592 = vunpack.c.l.b16 %v3403
        %v3593 = vunpack.c.l.b16 %v3404
        %v3594 = vunpack.c.l.b16 %v3405
        %v3595 = vunpack.c.l.b16 %v3406
        %v3596 = vunpack.c.l.b16 %v3407
        %v3597 = vunpack.c.l.b16 %v3408
        %v3598 = vunpack.c.l.b16 %v3409
        %v3599 = vunpack.c.l.b16 %v3410
        %v3600 = vunpack.c.l.b16 %v3411
        %v3601 = vunpack.c.l.b16 %v3412
        %v3602 = vunpack.c.l.b16 %v3413
        %v3603 = vunpack.c.l.b16 %v3414
        %v3604 = vunpack.c.l.b16 %v3415
        %v3605 = vunpack.c.l.b16 %v3416
        %v3606 = vunpack.c.l.b16 %v3417
        %v3607 = vunpack.c.l.b16 %v3418
        %v3608 = vunpack.c.l.b16 %v3419
        %v3609 = vunpack.c.l.b16 %v3420
        %v3610 = vunpack.c.l.b16 %v3421
        %v3611 = vunpack.c.l.b16 %v3422
        %v3612 = vunpack.c.l.b16 %v3423
        %v3613 = vunpack.c.l.b16 %v3424
        %v3614 = vunpack.c.l.b16 %v3425
        %v3615 = vunpack.c.l.b16 %v3426
        %v3616 = vunpack.c.l.b16 %v3427
        %v3617 = vunpack.c.l.b16 %v3428
        %v3618 = vunpack.c.l.b16 %v3429
        %v3619 = vunpack.c.l.b16 %v3430
        %v3620 = vunpack.c.l.b16 %v3431
        %v3621 = vunpack.c.l.b16 %v3432
        %v3622 = vunpack.c.l.b16 %v3433
        %v3623 = vunpack.c.l.b16 %v3434
        %v3624 = vunpack.c.l.b16 %v3435
        %v3625 = vunpack.c.l.b16 %v3436
        %v3626 = vunpack.c.l.b16 %v3437
        %v3627 = vunpack.c.l.b16 %v3438
        %v3628 = vunpack.c.l.b16 %v3439
        %v3629 = vunpack.c.l.b16 %v3440
        %v3630 = vunpack.c.l.b16 %v3441
        %v3631 = vunpack.c.l.b16 %v3442
        %v3632 = vunpack.c.l.b16 %v3443
        %v3633 = vunpack.c.l.b16 %v3444
        %v3634 = vunpack.c.l.b16 %v3445
        %v3635 = vunpack.c.l.b16 %v3446
        %v3636 = vunpack.c.l.b16 %v3447
        %v3637 = vunpack.c.l.b16 %v3448
        %v3638 = vunpack.c.l.b16 %v3449
        %v3639 = vpack.c.b16 %v3576, %v3575
        %v3640 = vpack.c.b16 %v3578, %v3577
        %v3641 = vpack.c.b16 %v3580, %v3579
        %v3642 = vpack.c.b16 %v3582, %v3581
        %v3643 = vpack.c.b16 %v3584, %v3583
        %v3644 = vpack.c.b16 %v3586, %v3585
        %v3645 = vpack.c.b16 %v3588, %v3587
        %v3646 = vpack.c.b16 %v3590, %v3589
        %v3647 = vpack.c.b16 %v3592, %v3591
        %v3648 = vpack.c.b16 %v3594, %v3593
        %v3649 = vpack.c.b16 %v3596, %v3595
        %v3650 = vpack.c.b16 %v3598, %v3597
        %v3651 = vpack.c.b16 %v3600, %v3599
        %v3652 = vpack.c.b16 %v3602, %v3601
        %v3653 = vpack.c.b16 %v3604, %v3603
        %v3654 = vpack.c.b16 %v3606, %v3605
        %v3655 = vpack.c.b16 %v3608, %v3607
        %v3656 = vpack.c.b16 %v3610, %v3609
        %v3657 = vpack.c.b16 %v3612, %v3611
        %v3658 = vpack.c.b16 %v3614, %v3613
        %v3659 = vpack.c.b16 %v3616, %v3615
        %v3660 = vpack.c.b16 %v3618, %v3617
        %v3661 = vpack.c.b16 %v3620, %v3619
        %v3662 = vpack.c.b16 %v3622, %v3621
        %v3663 = vpack.c.b16 %v3624, %v3623
        %v3664 = vpack.c.b16 %v3626, %v3625
        %v3665 = vpack.c.b16 %v3628, %v3627
        %v3666 = vpack.c.b16 %v3630, %v3629
        %v3667 = vpack.c.b16 %v3632, %v3631
        %v3668 = vpack.c.b16 %v3634, %v3633
        %v3669 = vpack.c.b16 %v3636, %v3635
        %v3670 = vpack.c.b16 %v3638, %v3637
        %3703 = vmatprep.subr.bf16.mxu0 0
        %3704 = vmatpush1.bf16.msra.mxu0 %v3646
        %3705 = vmatprep.subr.bf16.mxu0 0
        %3706 = vmatpush1.bf16.msra.mxu0 %v3645
        %3707 = vmatprep.subr.bf16.mxu0 0
        %3708 = vmatpush1.bf16.msra.mxu0 %v3644
        %3709 = vmatprep.subr.bf16.mxu0 0
        %3710 = vmatpush1.bf16.msra.mxu0 %v3643
        %3711 = vmatprep.subr.bf16.mxu0 0
        %3712 = vmatpush1.bf16.msra.mxu0 %v3642
        %3713 = vmatprep.subr.bf16.mxu0 0
        %3714 = vmatpush1.bf16.msra.mxu0 %v3641
        %3715 = vmatprep.subr.bf16.mxu0 0
        %3716 = vmatpush1.bf16.msra.mxu0 %v3640
        %3717 = vmatprep.subr.bf16.mxu0 0
        %3718 = vmatpush1.bf16.msra.mxu0 %v3639
        %3719 = vmatprep.subr.bf16.mxu0 0
        %3720 = vmatpush2.bf16.msra.mxu0 %v3654
        %3721 = vmatprep.subr.bf16.mxu0 0
        %3722 = vmatpush2.bf16.msra.mxu0 %v3653
        %3723 = vmatprep.subr.bf16.mxu0 0
        %3724 = vmatpush2.bf16.msra.mxu0 %v3652
        %3725 = vmatprep.subr.bf16.mxu0 0
        %3726 = vmatpush2.bf16.msra.mxu0 %v3651
        %3727 = vmatprep.subr.bf16.mxu0 0
        %3728 = vmatpush2.bf16.msra.mxu0 %v3650
        %3729 = vmatprep.subr.bf16.mxu0 0
        %3730 = vmatpush2.bf16.msra.mxu0 %v3649
        %3731 = vmatprep.subr.bf16.mxu0 0
        %3732 = vmatpush2.bf16.msra.mxu0 %v3648
        %3733 = vmatprep.subr.bf16.mxu0 0
        %3734 = vmatpush2.bf16.msra.mxu0 %v3647
        %3735 = vmatprep.mubr.bf16.mxu0 %v3508
        %3736 = vmatmul.mubr.bf16.gmra.mxu0 %v3507
        %v3737 = vpop.f32.mrf.mxu0
        %v3738 = vadd.f32 0.0, %v3737
        %v3739 = vpop.f32.mrf.mxu0
        %v3740 = vpop.f32.mrf.mxu0
        %v3741 = vpop.f32.mrf.mxu0
        %3742 = vdwg.mxu0
        %3743 = vmatprep.subr.bf16.mxu0 0
        %3744 = vmatpush1.bf16.msra.mxu0 %v3662
        %3745 = vmatprep.subr.bf16.mxu0 0
        %3746 = vmatpush1.bf16.msra.mxu0 %v3661
        %3747 = vmatprep.subr.bf16.mxu0 0
        %3748 = vmatpush1.bf16.msra.mxu0 %v3660
        %3749 = vmatprep.subr.bf16.mxu0 0
        %3750 = vmatpush1.bf16.msra.mxu0 %v3659
        %3751 = vmatprep.subr.bf16.mxu0 0
        %3752 = vmatpush1.bf16.msra.mxu0 %v3658
        %3753 = vmatprep.subr.bf16.mxu0 0
        %3754 = vmatpush1.bf16.msra.mxu0 %v3657
        %3755 = vmatprep.subr.bf16.mxu0 0
        %3756 = vmatpush1.bf16.msra.mxu0 %v3656
        %3757 = vmatprep.subr.bf16.mxu0 0
        %3758 = vmatpush1.bf16.msra.mxu0 %v3655
        %3759 = vmatprep.subr.bf16.mxu0 0
        %3760 = vmatpush2.bf16.msra.mxu0 %v3670
        %3761 = vmatprep.subr.bf16.mxu0 0
        %3762 = vmatpush2.bf16.msra.mxu0 %v3669
        %3763 = vmatprep.subr.bf16.mxu0 0
        %3764 = vmatpush2.bf16.msra.mxu0 %v3668
        %3765 = vmatprep.subr.bf16.mxu0 0
        %3766 = vmatpush2.bf16.msra.mxu0 %v3667
        %3767 = vmatprep.subr.bf16.mxu0 0
        %3768 = vmatpush2.bf16.msra.mxu0 %v3666
        %3769 = vmatprep.subr.bf16.mxu0 0
        %3770 = vmatpush2.bf16.msra.mxu0 %v3665
        %3771 = vmatprep.subr.bf16.mxu0 0
        %3772 = vmatpush2.bf16.msra.mxu0 %v3664
        %3773 = vmatprep.subr.bf16.mxu0 0
        %3774 = vmatpush2.bf16.msra.mxu0 %v3663
        %3775 = vmatprep.mubr.bf16.mxu0 %v3510
        %3776 = vmatmul.mubr.bf16.gmra.mxu0 %v3509
        %v3777 = vpop.f32.mrf.mxu0
        %v3778 = vadd.f32 %v3738, %v3777
        %v3779 = vpop.f32.mrf.mxu0
        %v3780 = vpop.f32.mrf.mxu0
        %v3781 = vpop.f32.mrf.mxu0
        %3782 = vdwg.mxu0
        %v3783 = vsel %vm662, %v3778, 0.0
        %v3784 = vrot.slane %v3783, 4
        %v3785 = vadd.f32 %v3783, %v3784
        %v3786 = vrot.slane %v3785, 2
        %v3787 = vadd.f32 %v3785, %v3786
        %v3788 = vrot.slane %v3787, 1
        %v3789 = vadd.f32 %v3787, %v3788
        %v3790 = vmul.f32 %v3789, %v670
        %v3791 = vmul.f32 %v3778, %v3778
        %v3792 = vsel %vm662, %v3791, 0.0
        %v3793 = vrot.slane %v3792, 4
        %v3794 = vadd.f32 %v3792, %v3793
        %v3795 = vrot.slane %v3794, 2
        %v3796 = vadd.f32 %v3794, %v3795
        %v3797 = vrot.slane %v3796, 1
        %v3798 = vadd.f32 %v3796, %v3797
        %v3799 = vmul.f32 %v3798, %v670
        %v3800 = vmul.f32 %v3790, %v3790
        %v3801 = vsub.f32 %v3799, %v3800
        %v3802 = vsub.f32 %v3778, %v3790
        %v3803 = vadd.f32 %v3801, 1e-05
        %v3804 = vrsqrt.pop %v3803
        %v3805 = vmul.f32 %v3802, %v3804
        %v3806 = vmul.f32 %v3805, %v2791
        %v3807 = vadd.f32 %v3806, %v2797
        %v3808 = vpack.c.bf16 %v3807, %v3807
        %3810 = vset.pattern.permute.xlu0 0
        %3811 = vperm.xlu0 %3810, %v3456
        %v3812 = vpop.permute.xlu0 %3811
        %3815 = vset.pattern.permute.xlu0 0
        %3816 = vperm.xlu0 %3815, %v3457
        %v3817 = vpop.permute.xlu0 %3816
        %3820 = vset.pattern.permute.xlu0 0
        %3821 = vperm.xlu0 %3820, %v3458
        %v3822 = vpop.permute.xlu0 %3821
        %3825 = vset.pattern.permute.xlu0 0
        %3826 = vperm.xlu0 %3825, %v3459
        %v3827 = vpop.permute.xlu0 %3826
        %v3833 = vunpack.c.l.b16 %v3452
        %v3834 = vunpack.c.l.b16 %v3453
        %v3835 = vunpack.c.l.b16 %v3454
        %v3836 = vunpack.c.l.b16 %v3455
        %v3837 = vpack.c.b16 %v3834, %v3833
        %v3838 = vpack.c.b16 %v3836, %v3835
        %v3840 = vsel %vm2833, %v3837, 0
        %v3843 = vsel %vm2833, %v3838, 0
        %v3846 = vsel %vm2840, %v3808, 0
        %3848 = vmatprep.subr.bf16.mxu0 0
        %3849 = vmatpush1.bf16.msra.mxu0 0
        %3850 = vmatprep.subr.bf16.mxu0 0
        %3851 = vmatpush1.bf16.msra.mxu0 0
        %3852 = vmatprep.subr.bf16.mxu0 0
        %3853 = vmatpush1.bf16.msra.mxu0 0
        %3854 = vmatprep.subr.bf16.mxu0 0
        %3855 = vmatpush1.bf16.msra.mxu0 0
        %3856 = vmatprep.subr.bf16.mxu0 0
        %3857 = vmatpush1.bf16.msra.mxu0 0
        %3858 = vmatprep.subr.bf16.mxu0 0
        %3859 = vmatpush1.bf16.msra.mxu0 0
        %3860 = vmatprep.subr.bf16.mxu0 0
        %3861 = vmatpush1.bf16.msra.mxu0 0
        %3862 = vmatprep.subr.bf16.mxu0 0
        %3863 = vmatpush1.bf16.msra.mxu0 %v3846
        %3864 = vmatprep.subr.bf16.mxu0 0
        %3865 = vmatpush2.bf16.msra.mxu0 0
        %3866 = vmatprep.subr.bf16.mxu0 0
        %3867 = vmatpush2.bf16.msra.mxu0 0
        %3868 = vmatprep.subr.bf16.mxu0 0
        %3869 = vmatpush2.bf16.msra.mxu0 0
        %3870 = vmatprep.subr.bf16.mxu0 0
        %3871 = vmatpush2.bf16.msra.mxu0 0
        %3872 = vmatprep.subr.bf16.mxu0 0
        %3873 = vmatpush2.bf16.msra.mxu0 0
        %3874 = vmatprep.subr.bf16.mxu0 0
        %3875 = vmatpush2.bf16.msra.mxu0 0
        %3876 = vmatprep.subr.bf16.mxu0 0
        %3877 = vmatpush2.bf16.msra.mxu0 0
        %3878 = vmatprep.subr.bf16.mxu0 0
        %3879 = vmatpush2.bf16.msra.mxu0 0
        %3880 = vmatprep.mubr.bf16.mxu0 0
        %3881 = vmatmul.mubr.bf16.gmra.mxu0 %v3840
        %v3882 = vpop.f32.mrf.mxu0
        %v3883 = vadd.f32 %v3812, %v3882
        %v3884 = vpop.f32.mrf.mxu0
        %v3885 = vpop.f32.mrf.mxu0
        %v3886 = vadd.f32 %v3817, %v3885
        %v3887 = vpop.f32.mrf.mxu0
        %3888 = vmatprep.mubr.bf16.mxu0 0
        %3889 = vmatmul.mubr.bf16.gmra.mxu0 %v3843
        %v3890 = vpop.f32.mrf.mxu0
        %v3891 = vadd.f32 %v3822, %v3890
        %v3892 = vpop.f32.mrf.mxu0
        %v3893 = vpop.f32.mrf.mxu0
        %v3894 = vadd.f32 %v3827, %v3893
        %v3895 = vpop.f32.mrf.mxu0
        %3896 = vdwg.mxu0
        %v3897 = vmul.f32 %v3883, 0.5
        %v3898 = vmul.f32 %v3886, 0.5
        %v3899 = vmul.f32 %v3891, 0.5
        %v3900 = vmul.f32 %v3894, 0.5
        %v3901 = vmul.f32 %v3883, 0.70710677
        %v3902 = vmul.f32 %v3886, 0.70710677
        %v3903 = vmul.f32 %v3891, 0.70710677
        %v3904 = vmul.f32 %v3894, 0.70710677
        %v3905 = vand.u32 2147483647, %v3901
        %v3906 = vand.u32 2147483647, %v3902
        %v3907 = vand.u32 2147483647, %v3903
        %v3908 = vand.u32 2147483647, %v3904
        %v3909 = vmul.f32 %v3905, 0.3275911
        %v3910 = vmul.f32 %v3906, 0.3275911
        %v3911 = vmul.f32 %v3907, 0.3275911
        %v3912 = vmul.f32 %v3908, 0.3275911
        %v3913 = vadd.f32 %v3909, 1.0
        %v3914 = vadd.f32 %v3910, 1.0
        %v3915 = vadd.f32 %v3911, 1.0
        %v3916 = vadd.f32 %v3912, 1.0
        %v3917 = vrcp.pop %v3913
        %v3918 = vmul.f32 1.0, %v3917
        %v3919 = vrcp.pop %v3914
        %v3920 = vmul.f32 1.0, %v3919
        %v3921 = vrcp.pop %v3915
        %v3922 = vmul.f32 1.0, %v3921
        %v3923 = vrcp.pop %v3916
        %v3924 = vmul.f32 1.0, %v3923
        %v3925 = vmul.f32 %v3918, 1.0614054
        %v3926 = vmul.f32 %v3920, 1.0614054
        %v3927 = vmul.f32 %v3922, 1.0614054
        %v3928 = vmul.f32 %v3924, 1.0614054
        %v3929 = vadd.f32 %v3925, -1.4531521
        %v3930 = vadd.f32 %v3926, -1.4531521
        %v3931 = vadd.f32 %v3927, -1.4531521
        %v3932 = vadd.f32 %v3928, -1.4531521
        %v3933 = vmul.f32 %v3929, %v3918
        %v3934 = vmul.f32 %v3930, %v3920
        %v3935 = vmul.f32 %v3931, %v3922
        %v3936 = vmul.f32 %v3932, %v3924
        %v3937 = vadd.f32 %v3933, 1.4214138
        %v3938 = vadd.f32 %v3934, 1.4214138
        %v3939 = vadd.f32 %v3935, 1.4214138
        %v3940 = vadd.f32 %v3936, 1.4214138
        %v3941 = vmul.f32 %v3937, %v3918
        %v3942 = vmul.f32 %v3938, %v3920
        %v3943 = vmul.f32 %v3939, %v3922
        %v3944 = vmul.f32 %v3940, %v3924
        %v3945 = vadd.f32 %v3941, -0.28449672
        %v3946 = vadd.f32 %v3942, -0.28449672
        %v3947 = vadd.f32 %v3943, -0.28449672
        %v3948 = vadd.f32 %v3944, -0.28449672
        %v3949 = vmul.f32 %v3945, %v3918
        %v3950 = vmul.f32 %v3946, %v3920
        %v3951 = vmul.f32 %v3947, %v3922
        %v3952 = vmul.f32 %v3948, %v3924
        %v3953 = vadd.f32 %v3949, 0.2548296
        %v3954 = vadd.f32 %v3950, 0.2548296
        %v3955 = vadd.f32 %v3951, 0.2548296
        %v3956 = vadd.f32 %v3952, 0.2548296
        %v3957 = vmul.f32 %v3953, %v3918
        %v3958 = vmul.f32 %v3954, %v3920
        %v3959 = vmul.f32 %v3955, %v3922
        %v3960 = vmul.f32 %v3956, %v3924
        %v3961 = vsub.f32 0.0, %v3905
        %v3962 = vsub.f32 0.0, %v3906
        %v3963 = vsub.f32 0.0, %v3907
        %v3964 = vsub.f32 0.0, %v3908
        %v3965 = vmul.f32 %v3961, %v3905
        %v3966 = vmul.f32 %v3962, %v3906
        %v3967 = vmul.f32 %v3963, %v3907
        %v3968 = vmul.f32 %v3964, %v3908
        %v3969 = vmul.f32 %v3965, 1.442695
        %v3970 = vpow.pop %v3969
        %v3971 = vmul.f32 %v3966, 1.442695
        %v3972 = vpow.pop %v3971
        %v3973 = vmul.f32 %v3967, 1.442695
        %v3974 = vpow.pop %v3973
        %v3975 = vmul.f32 %v3968, 1.442695
        %v3976 = vpow.pop %v3975
        %v3977 = vmul.f32 %v3957, %v3970
        %v3978 = vmul.f32 %v3958, %v3972
        %v3979 = vmul.f32 %v3959, %v3974
        %v3980 = vmul.f32 %v3960, %v3976
        %v3981 = vsub.f32 1.0, %v3977
        %v3982 = vsub.f32 1.0, %v3978
        %v3983 = vsub.f32 1.0, %v3979
        %v3984 = vsub.f32 1.0, %v3980
        %vm3985 = vcmp.ge.f32.partialorder %v3901, 0.0
        %vm3986 = vcmp.ge.f32.partialorder %v3902, 0.0
        %vm3987 = vcmp.ge.f32.partialorder %v3903, 0.0
        %vm3988 = vcmp.ge.f32.partialorder %v3904, 0.0
        %v3989 = vsub.f32 0.0, %v3981
        %v3990 = vsub.f32 0.0, %v3982
        %v3991 = vsub.f32 0.0, %v3983
        %v3992 = vsub.f32 0.0, %v3984
        %v3993 = vsel %vm3985, %v3981, %v3989
        %v3994 = vsel %vm3986, %v3982, %v3990
        %v3995 = vsel %vm3987, %v3983, %v3991
        %v3996 = vsel %vm3988, %v3984, %v3992
        %v3997 = vadd.f32 %v3993, 1.0
        %v3998 = vadd.f32 %v3994, 1.0
        %v3999 = vadd.f32 %v3995, 1.0
        %v4000 = vadd.f32 %v3996, 1.0
        %v4001 = vmul.f32 %v3897, %v3997
        %v4002 = vmul.f32 %v3898, %v3998
        %v4003 = vmul.f32 %v3899, %v3999
        %v4004 = vmul.f32 %v3900, %v4000
        %v4005 = vpack.c.bf16 %v4002, %v4001
        %v4006 = vpack.c.bf16 %v4004, %v4003
        %4008 = vset.pattern.permute.xlu0 0
        %4009 = vperm.xlu0 %4008, %v3461
        %v4010 = vpop.permute.xlu0 %4009
        %v4013 = vsel %vm3125, %v3460, 0
        %4015 = vmatprep.subr.bf16.mxu0 0
        %4016 = vmatpush1.bf16.msra.mxu0 0
        %4017 = vmatprep.subr.bf16.mxu0 0
        %4018 = vmatpush1.bf16.msra.mxu0 0
        %4019 = vmatprep.subr.bf16.mxu0 0
        %4020 = vmatpush1.bf16.msra.mxu0 0
        %4021 = vmatprep.subr.bf16.mxu0 0
        %4022 = vmatpush1.bf16.msra.mxu0 0
        %4023 = vmatprep.subr.bf16.mxu0 0
        %4024 = vmatpush1.bf16.msra.mxu0 0
        %4025 = vmatprep.subr.bf16.mxu0 0
        %4026 = vmatpush1.bf16.msra.mxu0 0
        %4027 = vmatprep.subr.bf16.mxu0 0
        %4028 = vmatpush1.bf16.msra.mxu0 %v4006
        %4029 = vmatprep.subr.bf16.mxu0 0
        %4030 = vmatpush1.bf16.msra.mxu0 %v4005
        %4031 = vmatprep.subr.bf16.mxu0 0
        %4032 = vmatpush2.bf16.msra.mxu0 0
        %4033 = vmatprep.subr.bf16.mxu0 0
        %4034 = vmatpush2.bf16.msra.mxu0 0
        %4035 = vmatprep.subr.bf16.mxu0 0
        %4036 = vmatpush2.bf16.msra.mxu0 0
        %4037 = vmatprep.subr.bf16.mxu0 0
        %4038 = vmatpush2.bf16.msra.mxu0 0
        %4039 = vmatprep.subr.bf16.mxu0 0
        %4040 = vmatpush2.bf16.msra.mxu0 0
        %4041 = vmatprep.subr.bf16.mxu0 0
        %4042 = vmatpush2.bf16.msra.mxu0 0
        %4043 = vmatprep.subr.bf16.mxu0 0
        %4044 = vmatpush2.bf16.msra.mxu0 0
        %4045 = vmatprep.subr.bf16.mxu0 0
        %4046 = vmatpush2.bf16.msra.mxu0 0
        %4047 = vmatprep.mubr.bf16.mxu0 0
        %4048 = vmatmul.mubr.bf16.gmra.mxu0 %v4013
        %v4049 = vpop.f32.mrf.mxu0
        %v4050 = vadd.f32 %v4010, %v4049
        %v4051 = vpop.f32.mrf.mxu0
        %v4052 = vpop.f32.mrf.mxu0
        %v4053 = vpop.f32.mrf.mxu0
        %4054 = vdwg.mxu0
        %v4055 = vshra.s32 %v1059, 3
        %v4056 = vand.u32 %v1059, 7
        %4058 = vrot.lane.b32.xlu0 %v3486, 73
        %v4059 = vpop.permute.xlu0 %4058
        %4061 = vrot.lane.b32.xlu0 %v3486, 9
        %v4062 = vpop.permute.xlu0 %4061
        %vm4064 = vcmask 72704
        %v4065 = vsel %vm4064, %v4059, %v4062
        %vm4066 = vcmp.ge.s32.totalorder %v4055, 1
        %vm4067 = vcmp.ge.s32.totalorder %v4056, 1
        %vm4068 = vmand %vm4066, %vm4067
        %v4069 = vsel %vm4068, %v4065, 0.0
        %4070 = vrot.lane.b32.xlu0 %v3486, 72
        %v4071 = vpop.permute.xlu0 %4070
        %4073 = vrot.lane.b32.xlu0 %v3486, 8
        %v4074 = vpop.permute.xlu0 %4073
        %v4076 = vsel %vm2833, %v4071, %v4074
        %v4077 = vsel %vm4066, %v4076, 0.0
        %4078 = vrot.lane.b32.xlu0 %v3486, 71
        %v4079 = vpop.permute.xlu0 %4078
        %4081 = vrot.lane.b32.xlu0 %v3486, 7
        %v4082 = vpop.permute.xlu0 %4081
        %vm4084 = vcmask 56320
        %v4085 = vsel %vm4084, %v4079, %v4082
        %vm4086 = vcmp.le.s32.totalorder %v4056, 6
        %vm4087 = vmand %vm4066, %vm4086
        %v4088 = vsel %vm4087, %v4085, 0.0
        %4089 = vrot.lane.b32.xlu0 %v3486, 65
        %v4090 = vpop.permute.xlu0 %4089
        %4092 = vrot.lane.b32.xlu0 %v3486, 1
        %v4093 = vpop.permute.xlu0 %4092
        %vm4095 = vcmask 7168
        %v4096 = vsel %vm4095, %v4090, %v4093
        %v4097 = vsel %vm4067, %v4096, 0.0
        %4098 = vrot.lane.b32.xlu0 %v3486, 127
        %v4099 = vpop.permute.xlu0 %4098
        %4101 = vrot.lane.b32.xlu0 %v3486, 63
        %v4102 = vpop.permute.xlu0 %4101
        %vm4104 = vcmask 515072
        %v4105 = vsel %vm4104, %v4099, %v4102
        %v4106 = vsel %vm4086, %v4105, 0.0
        %4107 = vrot.lane.b32.xlu0 %v3486, 121
        %v4108 = vpop.permute.xlu0 %4107
        %4110 = vrot.lane.b32.xlu0 %v3486, 57
        %v4111 = vpop.permute.xlu0 %4110
        %vm4113 = vcmask 465920
        %v4114 = vsel %vm4113, %v4108, %v4111
        %vm4115 = vcmp.le.s32.totalorder %v4055, 6
        %vm4116 = vmand %vm4115, %vm4067
        %v4117 = vsel %vm4116, %v4114, 0.0
        %4118 = vrot.lane.b32.xlu0 %v3486, 120
        %v4119 = vpop.permute.xlu0 %4118
        %4121 = vrot.lane.b32.xlu0 %v3486, 56
        %v4122 = vpop.permute.xlu0 %4121
        %vm4124 = vcmask 457728
        %v4125 = vsel %vm4124, %v4119, %v4122
        %v4126 = vsel %vm4115, %v4125, 0.0
        %4127 = vrot.lane.b32.xlu0 %v3486, 119
        %v4128 = vpop.permute.xlu0 %4127
        %4130 = vrot.lane.b32.xlu0 %v3486, 55
        %v4131 = vpop.permute.xlu0 %4130
        %vm4133 = vcmask 449536
        %v4134 = vsel %vm4133, %v4128, %v4131
        %vm4135 = vmand %vm4115, %vm4086
        %v4136 = vsel %vm4135, %v4134, 0.0
        %v4137 = vpack.c.bf16 %v4077, %v4069
        %v4138 = vpack.c.bf16 %v4097, %v4088
        %v4139 = vpack.c.bf16 %v4106, %v3486
        %v4140 = vpack.c.bf16 %v4126, %v4117
        %v4141 = vpack.c.bf16 %v4136, %v4136
        %4143 = vset.pattern.permute.xlu0 0
        %4144 = vperm.xlu0 %4143, %v3451
        %v4145 = vpop.permute.xlu0 %4144
        %v4148 = vsel %vm3277, %v3450, 0
        %v4151 = vsel %vm2840, %v4141, 0
        %4153 = vmatprep.subr.bf16.mxu0 0
        %4154 = vmatpush1.bf16.msra.mxu0 0
        %4155 = vmatprep.subr.bf16.mxu0 0
        %4156 = vmatpush1.bf16.msra.mxu0 0
        %4157 = vmatprep.subr.bf16.mxu0 0
        %4158 = vmatpush1.bf16.msra.mxu0 0
        %4159 = vmatprep.subr.bf16.mxu0 0
        %4160 = vmatpush1.bf16.msra.mxu0 %v4151
        %4161 = vmatprep.subr.bf16.mxu0 0
        %4162 = vmatpush1.bf16.msra.mxu0 %v4140
        %4163 = vmatprep.subr.bf16.mxu0 0
        %4164 = vmatpush1.bf16.msra.mxu0 %v4139
        %4165 = vmatprep.subr.bf16.mxu0 0
        %4166 = vmatpush1.bf16.msra.mxu0 %v4138
        %4167 = vmatprep.subr.bf16.mxu0 0
        %4168 = vmatpush1.bf16.msra.mxu0 %v4137
        %4169 = vmatprep.subr.bf16.mxu0 0
        %4170 = vmatpush2.bf16.msra.mxu0 0
        %4171 = vmatprep.subr.bf16.mxu0 0
        %4172 = vmatpush2.bf16.msra.mxu0 0
        %4173 = vmatprep.subr.bf16.mxu0 0
        %4174 = vmatpush2.bf16.msra.mxu0 0
        %4175 = vmatprep.subr.bf16.mxu0 0
        %4176 = vmatpush2.bf16.msra.mxu0 0
        %4177 = vmatprep.subr.bf16.mxu0 0
        %4178 = vmatpush2.bf16.msra.mxu0 0
        %4179 = vmatprep.subr.bf16.mxu0 0
        %4180 = vmatpush2.bf16.msra.mxu0 0
        %4181 = vmatprep.subr.bf16.mxu0 0
        %4182 = vmatpush2.bf16.msra.mxu0 0
        %4183 = vmatprep.subr.bf16.mxu0 0
        %4184 = vmatpush2.bf16.msra.mxu0 0
        %4185 = vmatprep.mubr.bf16.mxu0 0
        %4186 = vmatmul.mubr.bf16.gmra.mxu0 %v4148
        %v4187 = vpop.f32.mrf.mxu0
        %v4188 = vadd.f32 %v4145, %v4187
        %v4189 = vpop.f32.mrf.mxu0
        %v4190 = vpop.f32.mrf.mxu0
        %v4191 = vpop.f32.mrf.mxu0
        %4192 = vdwg.mxu0
        %v4193 = vadd.f32 %v4188, %v4050
        %v4194 = vsel %vm662, %v4193, 0.0
        %v4195 = vrot.slane %v4194, 4
        %v4196 = vadd.f32 %v4194, %v4195
        %v4197 = vrot.slane %v4196, 2
        %v4198 = vadd.f32 %v4196, %v4197
        %v4199 = vrot.slane %v4198, 1
        %v4200 = vadd.f32 %v4198, %v4199
        %v4201 = vmul.f32 %v4200, %v670
        %v4202 = vmul.f32 %v4193, %v4193
        %v4203 = vsel %vm662, %v4202, 0.0
        %v4204 = vrot.slane %v4203, 4
        %v4205 = vadd.f32 %v4203, %v4204
        %v4206 = vrot.slane %v4205, 2
        %v4207 = vadd.f32 %v4205, %v4206
        %v4208 = vrot.slane %v4207, 1
        %v4209 = vadd.f32 %v4207, %v4208
        %v4210 = vmul.f32 %v4209, %v670
        %v4211 = vmul.f32 %v4201, %v4201
        %v4212 = vsub.f32 %v4210, %v4211
        %v4213 = vsub.f32 %v4193, %v4201
        %v4214 = vadd.f32 %v4212, 1e-05
        %v4215 = vrsqrt.pop %v4214
        %v4216 = vmul.f32 %v4213, %v4215
        %4217 = vset.pattern.permute.xlu0 10
        %4218 = vperm.xlu0 %4217, %v649
        %v4219 = vpop.permute.xlu0 %4218
        %v4221 = vmul.f32 %v4216, %v4219
        %4222 = vset.pattern.permute.xlu0 11
        %4223 = vperm.xlu0 %4222, %v649
        %v4224 = vpop.permute.xlu0 %4223
        %v4226 = vadd.f32 %v4221, %v4224
        %v4227 = vmax.f32 %v4226, 0.0
        %v4228 = vrot.slane %v3384, 4
        %v4229 = vadd.f32 %v3384, %v4228
        %v4230 = vrot.slane %v4229, 2
        %v4231 = vadd.f32 %v4229, %v4230
        %v4232 = vrot.slane %v4231, 1
        %v4233 = vadd.f32 %v4231, %v4232
        %v4234 = vrot.slane %v3385, 4
        %v4235 = vadd.f32 %v3385, %v4234
        %v4236 = vrot.slane %v4235, 2
        %v4237 = vadd.f32 %v4235, %v4236
        %v4238 = vrot.slane %v4237, 1
        %v4239 = vadd.f32 %v4237, %v4238
        %v4240 = vsel %vm662, %v4227, 0.0
        %v4241 = vrot.slane %v4240, 4
        %v4242 = vadd.f32 %v4240, %v4241
        %v4243 = vrot.slane %v4242, 2
        %v4244 = vadd.f32 %v4242, %v4243
        %v4245 = vrot.slane %v4244, 1
        %v4246 = vadd.f32 %v4244, %v4245
        %v4247 = vmul.f32 %v4233, %v670
        %v4248 = vmul.f32 %v4239, %v670
        %v4249 = vmul.f32 %v4246, %v670
        %v4250 = vmul.f32 %v3384, %v3384
        %v4251 = vmul.f32 %v3385, %v3385
        %v4252 = vmul.f32 %v4227, %v4227
        %v4253 = vrot.slane %v4250, 4
        %v4254 = vadd.f32 %v4250, %v4253
        %v4255 = vrot.slane %v4254, 2
        %v4256 = vadd.f32 %v4254, %v4255
        %v4257 = vrot.slane %v4256, 1
        %v4258 = vadd.f32 %v4256, %v4257
        %v4259 = vrot.slane %v4251, 4
        %v4260 = vadd.f32 %v4251, %v4259
        %v4261 = vrot.slane %v4260, 2
        %v4262 = vadd.f32 %v4260, %v4261
        %v4263 = vrot.slane %v4262, 1
        %v4264 = vadd.f32 %v4262, %v4263
        %v4265 = vsel %vm662, %v4252, 0.0
        %v4266 = vrot.slane %v4265, 4
        %v4267 = vadd.f32 %v4265, %v4266
        %v4268 = vrot.slane %v4267, 2
        %v4269 = vadd.f32 %v4267, %v4268
        %v4270 = vrot.slane %v4269, 1
        %v4271 = vadd.f32 %v4269, %v4270
        %v4272 = vmul.f32 %v4258, %v670
        %v4273 = vmul.f32 %v4264, %v670
        %v4274 = vmul.f32 %v4271, %v670
        %v4275 = vmul.f32 %v4247, %v4247
        %v4276 = vmul.f32 %v4248, %v4248
        %v4277 = vmul.f32 %v4249, %v4249
        %v4278 = vsub.f32 %v4272, %v4275
        %v4279 = vsub.f32 %v4273, %v4276
        %v4280 = vsub.f32 %v4274, %v4277
        %v4281 = vsub.f32 %v3384, %v4247
        %v4282 = vsub.f32 %v3385, %v4248
        %v4283 = vsub.f32 %v4227, %v4249
        %v4284 = vadd.f32 %v4278, 1e-05
        %v4285 = vadd.f32 %v4279, 1e-05
        %v4286 = vadd.f32 %v4280, 1e-05
        %v4287 = vrsqrt.pop %v4284
        %v4288 = vrsqrt.pop %v4285
        %v4289 = vrsqrt.pop %v4286
        %v4290 = vmul.f32 %v4281, %v4287
        %v4291 = vmul.f32 %v4282, %v4288
        %v4292 = vmul.f32 %v4283, %v4289
        %4293 = vset.pattern.permute.xlu0 2
        %4294 = vperm.xlu0 %4293, %v649
        %v4295 = vpop.permute.xlu0 %4294
        %v4297 = vmul.f32 %v4290, %v4295
        %v4298 = vmul.f32 %v4291, %v4295
        %v4299 = vmul.f32 %v4292, %v4295
        %4300 = vset.pattern.permute.xlu0 3
        %4301 = vperm.xlu0 %4300, %v649
        %v4302 = vpop.permute.xlu0 %4301
        %v4304 = vadd.f32 %v4297, %v4302
        %v4305 = vadd.f32 %v4298, %v4302
        %v4306 = vadd.f32 %v4299, %v4302
        %v4307 = vld [vmem:[%s16] sm:$0xf]
        %v4308 = vld [vmem:[%s16 + $0x4] sm:$0xf]
        %v4309 = vld [vmem:[%s16 + $0x8] sm:$0xf]
        %v4310 = vld [vmem:[%s16 + $0xc] sm:$0xf]
        %v4311 = vld [vmem:[%s17] sm:$0xff]
        %v4312 = vld [vmem:[%s17 + $0x8] sm:$0xff]
        %v4313 = vld [vmem:[%s17 + $0x10] sm:$0xff]
        %v4314 = vld [vmem:[%s17 + $0x18] sm:$0xff]
        %v4315 = vld [vmem:[%s18] sm:$0xf]
        %v4316 = vld [vmem:[%s19] sm:$0xff]
        %v4317 = vpack.c.bf16 %v4304, %v4304
        %v4318 = vpack.c.bf16 %v4305, %v4305
        %v4319 = vpack.c.bf16 %v4306, %v4306
        %4321 = vset.pattern.permute.xlu0 0
        %4322 = vperm.xlu0 %4321, %v4311
        %v4323 = vpop.permute.xlu0 %4322
        %4326 = vset.pattern.permute.xlu0 0
        %4327 = vperm.xlu0 %4326, %v4312
        %v4328 = vpop.permute.xlu0 %4327
        %4331 = vset.pattern.permute.xlu0 0
        %4332 = vperm.xlu0 %4331, %v4313
        %v4333 = vpop.permute.xlu0 %4332
        %4336 = vset.pattern.permute.xlu0 0
        %4337 = vperm.xlu0 %4336, %v4314
        %v4338 = vpop.permute.xlu0 %4337
        %v4344 = vunpack.c.l.b16 %v4307
        %v4345 = vunpack.c.l.b16 %v4308
        %v4346 = vunpack.c.l.b16 %v4309
        %v4347 = vunpack.c.l.b16 %v4310
        %v4348 = vpack.c.b16 %v4345, %v4344
        %v4349 = vpack.c.b16 %v4347, %v4346
        %v4351 = vsel %vm2833, %v4348, 0
        %v4354 = vsel %vm2833, %v4349, 0
        %v4357 = vsel %vm2840, %v4317, 0
        %v4360 = vsel %vm2840, %v4318, 0
        %v4363 = vsel %vm2840, %v4319, 0
        %4365 = vmatprep.subr.bf16.mxu0 0
        %4366 = vmatpush1.bf16.msra.mxu0 0
        %4367 = vmatprep.subr.bf16.mxu0 0
        %4368 = vmatpush1.bf16.msra.mxu0 0
        %4369 = vmatprep.subr.bf16.mxu0 0
        %4370 = vmatpush1.bf16.msra.mxu0 0
        %4371 = vmatprep.subr.bf16.mxu0 0
        %4372 = vmatpush1.bf16.msra.mxu0 0
        %4373 = vmatprep.subr.bf16.mxu0 0
        %4374 = vmatpush1.bf16.msra.mxu0 0
        %4375 = vmatprep.subr.bf16.mxu0 0
        %4376 = vmatpush1.bf16.msra.mxu0 0
        %4377 = vmatprep.subr.bf16.mxu0 0
        %4378 = vmatpush1.bf16.msra.mxu0 0
        %4379 = vmatprep.subr.bf16.mxu0 %v4360
        %4380 = vmatpush1.bf16.msra.mxu0 %v4357
        %4381 = vmatprep.subr.bf16.mxu0 0
        %4382 = vmatpush2.bf16.msra.mxu0 0
        %4383 = vmatprep.subr.bf16.mxu0 0
        %4384 = vmatpush2.bf16.msra.mxu0 0
        %4385 = vmatprep.subr.bf16.mxu0 0
        %4386 = vmatpush2.bf16.msra.mxu0 0
        %4387 = vmatprep.subr.bf16.mxu0 0
        %4388 = vmatpush2.bf16.msra.mxu0 0
        %4389 = vmatprep.subr.bf16.mxu0 0
        %4390 = vmatpush2.bf16.msra.mxu0 0
        %4391 = vmatprep.subr.bf16.mxu0 0
        %4392 = vmatpush2.bf16.msra.mxu0 0
        %4393 = vmatprep.subr.bf16.mxu0 0
        %4394 = vmatpush2.bf16.msra.mxu0 0
        %4395 = vmatprep.subr.bf16.mxu0 0
        %4396 = vmatpush2.bf16.msra.mxu0 0
        %4397 = vmatprep.mubr.bf16.mxu0 0
        %4398 = vmatmul.mubr.bf16.gmra.mxu0 %v4351
        %v4399 = vpop.f32.mrf.mxu0
        %v4400 = vadd.f32 %v4323, %v4399
        %v4401 = vpop.f32.mrf.mxu0
        %v4402 = vadd.f32 %v4323, %v4401
        %v4403 = vpop.f32.mrf.mxu0
        %v4404 = vadd.f32 %v4328, %v4403
        %v4405 = vpop.f32.mrf.mxu0
        %v4406 = vadd.f32 %v4328, %v4405
        %4407 = vmatprep.mubr.bf16.mxu0 0
        %4408 = vmatmul.mubr.bf16.gmra.mxu0 %v4354
        %v4409 = vpop.f32.mrf.mxu0
        %v4410 = vadd.f32 %v4333, %v4409
        %v4411 = vpop.f32.mrf.mxu0
        %v4412 = vadd.f32 %v4333, %v4411
        %v4413 = vpop.f32.mrf.mxu0
        %v4414 = vadd.f32 %v4338, %v4413
        %v4415 = vpop.f32.mrf.mxu0
        %v4416 = vadd.f32 %v4338, %v4415
        %4417 = vdwg.mxu0
        %4418 = vmatprep.subr.bf16.mxu0 0
        %4419 = vmatpush1.bf16.msra.mxu0 0
        %4420 = vmatprep.subr.bf16.mxu0 0
        %4421 = vmatpush1.bf16.msra.mxu0 0
        %4422 = vmatprep.subr.bf16.mxu0 0
        %4423 = vmatpush1.bf16.msra.mxu0 0
        %4424 = vmatprep.subr.bf16.mxu0 0
        %4425 = vmatpush1.bf16.msra.mxu0 0
        %4426 = vmatprep.subr.bf16.mxu0 0
        %4427 = vmatpush1.bf16.msra.mxu0 0
        %4428 = vmatprep.subr.bf16.mxu0 0
        %4429 = vmatpush1.bf16.msra.mxu0 0
        %4430 = vmatprep.subr.bf16.mxu0 0
        %4431 = vmatpush1.bf16.msra.mxu0 0
        %4432 = vmatprep.subr.bf16.mxu0 0
        %4433 = vmatpush1.bf16.msra.mxu0 %v4363
        %4434 = vmatprep.subr.bf16.mxu0 0
        %4435 = vmatpush2.bf16.msra.mxu0 0
        %4436 = vmatprep.subr.bf16.mxu0 0
        %4437 = vmatpush2.bf16.msra.mxu0 0
        %4438 = vmatprep.subr.bf16.mxu0 0
        %4439 = vmatpush2.bf16.msra.mxu0 0
        %4440 = vmatprep.subr.bf16.mxu0 0
        %4441 = vmatpush2.bf16.msra.mxu0 0
        %4442 = vmatprep.subr.bf16.mxu0 0
        %4443 = vmatpush2.bf16.msra.mxu0 0
        %4444 = vmatprep.subr.bf16.mxu0 0
        %4445 = vmatpush2.bf16.msra.mxu0 0
        %4446 = vmatprep.subr.bf16.mxu0 0
        %4447 = vmatpush2.bf16.msra.mxu0 0
        %4448 = vmatprep.subr.bf16.mxu0 0
        %4449 = vmatpush2.bf16.msra.mxu0 0
        %4450 = vmatprep.mubr.bf16.mxu0 0
        %4451 = vmatmul.mubr.bf16.gmra.mxu0 %v4351
        %v4452 = vpop.f32.mrf.mxu0
        %v4453 = vadd.f32 %v4323, %v4452
        %v4454 = vpop.f32.mrf.mxu0
        %v4455 = vpop.f32.mrf.mxu0
        %v4456 = vadd.f32 %v4328, %v4455
        %v4457 = vpop.f32.mrf.mxu0
        %4458 = vmatprep.mubr.bf16.mxu0 0
        %4459 = vmatmul.mubr.bf16.gmra.mxu0 %v4354
        %v4460 = vpop.f32.mrf.mxu0
        %v4461 = vadd.f32 %v4333, %v4460
        %v4462 = vpop.f32.mrf.mxu0
        %v4463 = vpop.f32.mrf.mxu0
        %v4464 = vadd.f32 %v4338, %v4463
        %v4465 = vpop.f32.mrf.mxu0
        %4466 = vdwg.mxu0
        %v4467 = vmul.f32 %v4400, 0.5
        %v4468 = vmul.f32 %v4402, 0.5
        %v4469 = vmul.f32 %v4453, 0.5
        %v4470 = vmul.f32 %v4404, 0.5
        %v4471 = vmul.f32 %v4406, 0.5
        %v4472 = vmul.f32 %v4456, 0.5
        %v4473 = vmul.f32 %v4410, 0.5
        %v4474 = vmul.f32 %v4412, 0.5
        %v4475 = vmul.f32 %v4461, 0.5
        %v4476 = vmul.f32 %v4414, 0.5
        %v4477 = vmul.f32 %v4416, 0.5
        %v4478 = vmul.f32 %v4464, 0.5
        %v4479 = vmul.f32 %v4400, 0.70710677
        %v4480 = vmul.f32 %v4402, 0.70710677
        %v4481 = vmul.f32 %v4453, 0.70710677
        %v4482 = vmul.f32 %v4404, 0.70710677
        %v4483 = vmul.f32 %v4406, 0.70710677
        %v4484 = vmul.f32 %v4456, 0.70710677
        %v4485 = vmul.f32 %v4410, 0.70710677
        %v4486 = vmul.f32 %v4412, 0.70710677
        %v4487 = vmul.f32 %v4461, 0.70710677
        %v4488 = vmul.f32 %v4414, 0.70710677
        %v4489 = vmul.f32 %v4416, 0.70710677
        %v4490 = vmul.f32 %v4464, 0.70710677
        %v4491 = vand.u32 2147483647, %v4479
        %v4492 = vand.u32 2147483647, %v4480
        %v4493 = vand.u32 2147483647, %v4481
        %v4494 = vand.u32 2147483647, %v4482
        %v4495 = vand.u32 2147483647, %v4483
        %v4496 = vand.u32 2147483647, %v4484
        %v4497 = vand.u32 2147483647, %v4485
        %v4498 = vand.u32 2147483647, %v4486
        %v4499 = vand.u32 2147483647, %v4487
        %v4500 = vand.u32 2147483647, %v4488
        %v4501 = vand.u32 2147483647, %v4489
        %v4502 = vand.u32 2147483647, %v4490
        %v4503 = vmul.f32 %v4491, 0.3275911
        %v4504 = vmul.f32 %v4492, 0.3275911
        %v4505 = vmul.f32 %v4493, 0.3275911
        %v4506 = vmul.f32 %v4494, 0.3275911
        %v4507 = vmul.f32 %v4495, 0.3275911
        %v4508 = vmul.f32 %v4496, 0.3275911
        %v4509 = vmul.f32 %v4497, 0.3275911
        %v4510 = vmul.f32 %v4498, 0.3275911
        %v4511 = vmul.f32 %v4499, 0.3275911
        %v4512 = vmul.f32 %v4500, 0.3275911
        %v4513 = vmul.f32 %v4501, 0.3275911
        %v4514 = vmul.f32 %v4502, 0.3275911
        %v4515 = vadd.f32 %v4503, 1.0
        %v4516 = vadd.f32 %v4504, 1.0
        %v4517 = vadd.f32 %v4505, 1.0
        %v4518 = vadd.f32 %v4506, 1.0
        %v4519 = vadd.f32 %v4507, 1.0
        %v4520 = vadd.f32 %v4508, 1.0
        %v4521 = vadd.f32 %v4509, 1.0
        %v4522 = vadd.f32 %v4510, 1.0
        %v4523 = vadd.f32 %v4511, 1.0
        %v4524 = vadd.f32 %v4512, 1.0
        %v4525 = vadd.f32 %v4513, 1.0
        %v4526 = vadd.f32 %v4514, 1.0
        %v4527 = vrcp.pop %v4515
        %v4528 = vmul.f32 1.0, %v4527
        %v4529 = vrcp.pop %v4516
        %v4530 = vmul.f32 1.0, %v4529
        %v4531 = vrcp.pop %v4517
        %v4532 = vmul.f32 1.0, %v4531
        %v4533 = vrcp.pop %v4518
        %v4534 = vmul.f32 1.0, %v4533
        %v4535 = vrcp.pop %v4519
        %v4536 = vmul.f32 1.0, %v4535
        %v4537 = vrcp.pop %v4520
        %v4538 = vmul.f32 1.0, %v4537
        %v4539 = vrcp.pop %v4521
        %v4540 = vmul.f32 1.0, %v4539
        %v4541 = vrcp.pop %v4522
        %v4542 = vmul.f32 1.0, %v4541
        %v4543 = vrcp.pop %v4523
        %v4544 = vmul.f32 1.0, %v4543
        %v4545 = vrcp.pop %v4524
        %v4546 = vmul.f32 1.0, %v4545
        %v4547 = vrcp.pop %v4525
        %v4548 = vmul.f32 1.0, %v4547
        %v4549 = vrcp.pop %v4526
        %v4550 = vmul.f32 1.0, %v4549
        %v4551 = vmul.f32 %v4528, 1.0614054
        %v4552 = vmul.f32 %v4530, 1.0614054
        %v4553 = vmul.f32 %v4532, 1.0614054
        %v4554 = vmul.f32 %v4534, 1.0614054
        %v4555 = vmul.f32 %v4536, 1.0614054
        %v4556 = vmul.f32 %v4538, 1.0614054
        %v4557 = vmul.f32 %v4540, 1.0614054
        %v4558 = vmul.f32 %v4542, 1.0614054
        %v4559 = vmul.f32 %v4544, 1.0614054
        %v4560 = vmul.f32 %v4546, 1.0614054
        %v4561 = vmul.f32 %v4548, 1.0614054
        %v4562 = vmul.f32 %v4550, 1.0614054
        %v4563 = vadd.f32 %v4551, -1.4531521
        %v4564 = vadd.f32 %v4552, -1.4531521
        %v4565 = vadd.f32 %v4553, -1.4531521
        %v4566 = vadd.f32 %v4554, -1.4531521
        %v4567 = vadd.f32 %v4555, -1.4531521
        %v4568 = vadd.f32 %v4556, -1.4531521
        %v4569 = vadd.f32 %v4557, -1.4531521
        %v4570 = vadd.f32 %v4558, -1.4531521
        %v4571 = vadd.f32 %v4559, -1.4531521
        %v4572 = vadd.f32 %v4560, -1.4531521
        %v4573 = vadd.f32 %v4561, -1.4531521
        %v4574 = vadd.f32 %v4562, -1.4531521
        %v4575 = vmul.f32 %v4563, %v4528
        %v4576 = vmul.f32 %v4564, %v4530
        %v4577 = vmul.f32 %v4565, %v4532
        %v4578 = vmul.f32 %v4566, %v4534
        %v4579 = vmul.f32 %v4567, %v4536
        %v4580 = vmul.f32 %v4568, %v4538
        %v4581 = vmul.f32 %v4569, %v4540
        %v4582 = vmul.f32 %v4570, %v4542
        %v4583 = vmul.f32 %v4571, %v4544
        %v4584 = vmul.f32 %v4572, %v4546
        %v4585 = vmul.f32 %v4573, %v4548
        %v4586 = vmul.f32 %v4574, %v4550
        %v4587 = vadd.f32 %v4575, 1.4214138
        %v4588 = vadd.f32 %v4576, 1.4214138
        %v4589 = vadd.f32 %v4577, 1.4214138
        %v4590 = vadd.f32 %v4578, 1.4214138
        %v4591 = vadd.f32 %v4579, 1.4214138
        %v4592 = vadd.f32 %v4580, 1.4214138
        %v4593 = vadd.f32 %v4581, 1.4214138
        %v4594 = vadd.f32 %v4582, 1.4214138
        %v4595 = vadd.f32 %v4583, 1.4214138
        %v4596 = vadd.f32 %v4584, 1.4214138
        %v4597 = vadd.f32 %v4585, 1.4214138
        %v4598 = vadd.f32 %v4586, 1.4214138
        %v4599 = vmul.f32 %v4587, %v4528
        %v4600 = vmul.f32 %v4588, %v4530
        %v4601 = vmul.f32 %v4589, %v4532
        %v4602 = vmul.f32 %v4590, %v4534
        %v4603 = vmul.f32 %v4591, %v4536
        %v4604 = vmul.f32 %v4592, %v4538
        %v4605 = vmul.f32 %v4593, %v4540
        %v4606 = vmul.f32 %v4594, %v4542
        %v4607 = vmul.f32 %v4595, %v4544
        %v4608 = vmul.f32 %v4596, %v4546
        %v4609 = vmul.f32 %v4597, %v4548
        %v4610 = vmul.f32 %v4598, %v4550
        %v4611 = vadd.f32 %v4599, -0.28449672
        %v4612 = vadd.f32 %v4600, -0.28449672
        %v4613 = vadd.f32 %v4601, -0.28449672
        %v4614 = vadd.f32 %v4602, -0.28449672
        %v4615 = vadd.f32 %v4603, -0.28449672
        %v4616 = vadd.f32 %v4604, -0.28449672
        %v4617 = vadd.f32 %v4605, -0.28449672
        %v4618 = vadd.f32 %v4606, -0.28449672
        %v4619 = vadd.f32 %v4607, -0.28449672
        %v4620 = vadd.f32 %v4608, -0.28449672
        %v4621 = vadd.f32 %v4609, -0.28449672
        %v4622 = vadd.f32 %v4610, -0.28449672
        %v4623 = vmul.f32 %v4611, %v4528
        %v4624 = vmul.f32 %v4612, %v4530
        %v4625 = vmul.f32 %v4613, %v4532
        %v4626 = vmul.f32 %v4614, %v4534
        %v4627 = vmul.f32 %v4615, %v4536
        %v4628 = vmul.f32 %v4616, %v4538
        %v4629 = vmul.f32 %v4617, %v4540
        %v4630 = vmul.f32 %v4618, %v4542
        %v4631 = vmul.f32 %v4619, %v4544
        %v4632 = vmul.f32 %v4620, %v4546
        %v4633 = vmul.f32 %v4621, %v4548
        %v4634 = vmul.f32 %v4622, %v4550
        %v4635 = vadd.f32 %v4623, 0.2548296
        %v4636 = vadd.f32 %v4624, 0.2548296
        %v4637 = vadd.f32 %v4625, 0.2548296
        %v4638 = vadd.f32 %v4626, 0.2548296
        %v4639 = vadd.f32 %v4627, 0.2548296
        %v4640 = vadd.f32 %v4628, 0.2548296
        %v4641 = vadd.f32 %v4629, 0.2548296
        %v4642 = vadd.f32 %v4630, 0.2548296
        %v4643 = vadd.f32 %v4631, 0.2548296
        %v4644 = vadd.f32 %v4632, 0.2548296
        %v4645 = vadd.f32 %v4633, 0.2548296
        %v4646 = vadd.f32 %v4634, 0.2548296
        %v4647 = vmul.f32 %v4635, %v4528
        %v4648 = vmul.f32 %v4636, %v4530
        %v4649 = vmul.f32 %v4637, %v4532
        %v4650 = vmul.f32 %v4638, %v4534
        %v4651 = vmul.f32 %v4639, %v4536
        %v4652 = vmul.f32 %v4640, %v4538
        %v4653 = vmul.f32 %v4641, %v4540
        %v4654 = vmul.f32 %v4642, %v4542
        %v4655 = vmul.f32 %v4643, %v4544
        %v4656 = vmul.f32 %v4644, %v4546
        %v4657 = vmul.f32 %v4645, %v4548
        %v4658 = vmul.f32 %v4646, %v4550
        %v4659 = vsub.f32 0.0, %v4491
        %v4660 = vsub.f32 0.0, %v4492
        %v4661 = vsub.f32 0.0, %v4493
        %v4662 = vsub.f32 0.0, %v4494
        %v4663 = vsub.f32 0.0, %v4495
        %v4664 = vsub.f32 0.0, %v4496
        %v4665 = vsub.f32 0.0, %v4497
        %v4666 = vsub.f32 0.0, %v4498
        %v4667 = vsub.f32 0.0, %v4499
        %v4668 = vsub.f32 0.0, %v4500
        %v4669 = vsub.f32 0.0, %v4501
        %v4670 = vsub.f32 0.0, %v4502
        %v4671 = vmul.f32 %v4659, %v4491
        %v4672 = vmul.f32 %v4660, %v4492
        %v4673 = vmul.f32 %v4661, %v4493
        %v4674 = vmul.f32 %v4662, %v4494
        %v4675 = vmul.f32 %v4663, %v4495
        %v4676 = vmul.f32 %v4664, %v4496
        %v4677 = vmul.f32 %v4665, %v4497
        %v4678 = vmul.f32 %v4666, %v4498
        %v4679 = vmul.f32 %v4667, %v4499
        %v4680 = vmul.f32 %v4668, %v4500
        %v4681 = vmul.f32 %v4669, %v4501
        %v4682 = vmul.f32 %v4670, %v4502
        %v4683 = vmul.f32 %v4671, 1.442695
        %v4684 = vpow.pop %v4683
        %v4685 = vmul.f32 %v4672, 1.442695
        %v4686 = vpow.pop %v4685
        %v4687 = vmul.f32 %v4673, 1.442695
        %v4688 = vpow.pop %v4687
        %v4689 = vmul.f32 %v4674, 1.442695
        %v4690 = vpow.pop %v4689
        %v4691 = vmul.f32 %v4675, 1.442695
        %v4692 = vpow.pop %v4691
        %v4693 = vmul.f32 %v4676, 1.442695
        %v4694 = vpow.pop %v4693
        %v4695 = vmul.f32 %v4677, 1.442695
        %v4696 = vpow.pop %v4695
        %v4697 = vmul.f32 %v4678, 1.442695
        %v4698 = vpow.pop %v4697
        %v4699 = vmul.f32 %v4679, 1.442695
        %v4700 = vpow.pop %v4699
        %v4701 = vmul.f32 %v4680, 1.442695
        %v4702 = vpow.pop %v4701
        %v4703 = vmul.f32 %v4681, 1.442695
        %v4704 = vpow.pop %v4703
        %v4705 = vmul.f32 %v4682, 1.442695
        %v4706 = vpow.pop %v4705
        %v4707 = vmul.f32 %v4647, %v4684
        %v4708 = vmul.f32 %v4648, %v4686
        %v4709 = vmul.f32 %v4649, %v4688
        %v4710 = vmul.f32 %v4650, %v4690
        %v4711 = vmul.f32 %v4651, %v4692
        %v4712 = vmul.f32 %v4652, %v4694
        %v4713 = vmul.f32 %v4653, %v4696
        %v4714 = vmul.f32 %v4654, %v4698
        %v4715 = vmul.f32 %v4655, %v4700
        %v4716 = vmul.f32 %v4656, %v4702
        %v4717 = vmul.f32 %v4657, %v4704
        %v4718 = vmul.f32 %v4658, %v4706
        %v4719 = vsub.f32 1.0, %v4707
        %v4720 = vsub.f32 1.0, %v4708
        %v4721 = vsub.f32 1.0, %v4709
        %v4722 = vsub.f32 1.0, %v4710
        %v4723 = vsub.f32 1.0, %v4711
        %v4724 = vsub.f32 1.0, %v4712
        %v4725 = vsub.f32 1.0, %v4713
        %v4726 = vsub.f32 1.0, %v4714
        %v4727 = vsub.f32 1.0, %v4715
        %v4728 = vsub.f32 1.0, %v4716
        %v4729 = vsub.f32 1.0, %v4717
        %v4730 = vsub.f32 1.0, %v4718
        %vm4731 = vcmp.ge.f32.partialorder %v4479, 0.0
        %vm4732 = vcmp.ge.f32.partialorder %v4480, 0.0
        %vm4733 = vcmp.ge.f32.partialorder %v4481, 0.0
        %vm4734 = vcmp.ge.f32.partialorder %v4482, 0.0
        %vm4735 = vcmp.ge.f32.partialorder %v4483, 0.0
        %vm4736 = vcmp.ge.f32.partialorder %v4484, 0.0
        %vm4737 = vcmp.ge.f32.partialorder %v4485, 0.0
        %vm4738 = vcmp.ge.f32.partialorder %v4486, 0.0
        %vm4739 = vcmp.ge.f32.partialorder %v4487, 0.0
        %vm4740 = vcmp.ge.f32.partialorder %v4488, 0.0
        %vm4741 = vcmp.ge.f32.partialorder %v4489, 0.0
        %vm4742 = vcmp.ge.f32.partialorder %v4490, 0.0
        %v4743 = vsub.f32 0.0, %v4719
        %v4744 = vsub.f32 0.0, %v4720
        %v4745 = vsub.f32 0.0, %v4721
        %v4746 = vsub.f32 0.0, %v4722
        %v4747 = vsub.f32 0.0, %v4723
        %v4748 = vsub.f32 0.0, %v4724
        %v4749 = vsub.f32 0.0, %v4725
        %v4750 = vsub.f32 0.0, %v4726
        %v4751 = vsub.f32 0.0, %v4727
        %v4752 = vsub.f32 0.0, %v4728
        %v4753 = vsub.f32 0.0, %v4729
        %v4754 = vsub.f32 0.0, %v4730
        %v4755 = vsel %vm4731, %v4719, %v4743
        %v4756 = vsel %vm4732, %v4720, %v4744
        %v4757 = vsel %vm4733, %v4721, %v4745
        %v4758 = vsel %vm4734, %v4722, %v4746
        %v4759 = vsel %vm4735, %v4723, %v4747
        %v4760 = vsel %vm4736, %v4724, %v4748
        %v4761 = vsel %vm4737, %v4725, %v4749
        %v4762 = vsel %vm4738, %v4726, %v4750
        %v4763 = vsel %vm4739, %v4727, %v4751
        %v4764 = vsel %vm4740, %v4728, %v4752
        %v4765 = vsel %vm4741, %v4729, %v4753
        %v4766 = vsel %vm4742, %v4730, %v4754
        %v4767 = vadd.f32 %v4755, 1.0
        %v4768 = vadd.f32 %v4756, 1.0
        %v4769 = vadd.f32 %v4757, 1.0
        %v4770 = vadd.f32 %v4758, 1.0
        %v4771 = vadd.f32 %v4759, 1.0
        %v4772 = vadd.f32 %v4760, 1.0
        %v4773 = vadd.f32 %v4761, 1.0
        %v4774 = vadd.f32 %v4762, 1.0
        %v4775 = vadd.f32 %v4763, 1.0
        %v4776 = vadd.f32 %v4764, 1.0
        %v4777 = vadd.f32 %v4765, 1.0
        %v4778 = vadd.f32 %v4766, 1.0
        %v4779 = vmul.f32 %v4467, %v4767
        %v4780 = vmul.f32 %v4468, %v4768
        %v4781 = vmul.f32 %v4469, %v4769
        %v4782 = vmul.f32 %v4470, %v4770
        %v4783 = vmul.f32 %v4471, %v4771
        %v4784 = vmul.f32 %v4472, %v4772
        %v4785 = vmul.f32 %v4473, %v4773
        %v4786 = vmul.f32 %v4474, %v4774
        %v4787 = vmul.f32 %v4475, %v4775
        %v4788 = vmul.f32 %v4476, %v4776
        %v4789 = vmul.f32 %v4477, %v4777
        %v4790 = vmul.f32 %v4478, %v4778
        %v4791 = vpack.c.bf16 %v4782, %v4779
        %v4792 = vpack.c.bf16 %v4783, %v4780
        %v4793 = vpack.c.bf16 %v4784, %v4781
        %v4794 = vpack.c.bf16 %v4788, %v4785
        %v4795 = vpack.c.bf16 %v4789, %v4786
        %v4796 = vpack.c.bf16 %v4790, %v4787
        %4798 = vset.pattern.permute.xlu0 0
        %4799 = vperm.xlu0 %4798, %v4316
        %v4800 = vpop.permute.xlu0 %4799
        %v4803 = vsel %vm3125, %v4315, 0
        %4805 = vmatprep.subr.bf16.mxu0 0
        %4806 = vmatpush1.bf16.msra.mxu0 0
        %4807 = vmatprep.subr.bf16.mxu0 0
        %4808 = vmatpush1.bf16.msra.mxu0 0
        %4809 = vmatprep.subr.bf16.mxu0 0
        %4810 = vmatpush1.bf16.msra.mxu0 0
        %4811 = vmatprep.subr.bf16.mxu0 0
        %4812 = vmatpush1.bf16.msra.mxu0 0
        %4813 = vmatprep.subr.bf16.mxu0 0
        %4814 = vmatpush1.bf16.msra.mxu0 0
        %4815 = vmatprep.subr.bf16.mxu0 0
        %4816 = vmatpush1.bf16.msra.mxu0 0
        %4817 = vmatprep.subr.bf16.mxu0 %v4795
        %4818 = vmatpush1.bf16.msra.mxu0 %v4794
        %4819 = vmatprep.subr.bf16.mxu0 %v4792
        %4820 = vmatpush1.bf16.msra.mxu0 %v4791
        %4821 = vmatprep.subr.bf16.mxu0 0
        %4822 = vmatpush2.bf16.msra.mxu0 0
        %4823 = vmatprep.subr.bf16.mxu0 0
        %4824 = vmatpush2.bf16.msra.mxu0 0
        %4825 = vmatprep.subr.bf16.mxu0 0
        %4826 = vmatpush2.bf16.msra.mxu0 0
        %4827 = vmatprep.subr.bf16.mxu0 0
        %4828 = vmatpush2.bf16.msra.mxu0 0
        %4829 = vmatprep.subr.bf16.mxu0 0
        %4830 = vmatpush2.bf16.msra.mxu0 0
        %4831 = vmatprep.subr.bf16.mxu0 0
        %4832 = vmatpush2.bf16.msra.mxu0 0
        %4833 = vmatprep.subr.bf16.mxu0 0
        %4834 = vmatpush2.bf16.msra.mxu0 0
        %4835 = vmatprep.subr.bf16.mxu0 0
        %4836 = vmatpush2.bf16.msra.mxu0 0
        %4837 = vmatprep.mubr.bf16.mxu0 0
        %4838 = vmatmul.mubr.bf16.gmra.mxu0 %v4803
        %v4839 = vpop.f32.mrf.mxu0
        %v4840 = vadd.f32 %v4800, %v4839
        %v4841 = vpop.f32.mrf.mxu0
        %v4842 = vadd.f32 %v4800, %v4841
        %v4843 = vpop.f32.mrf.mxu0
        %v4844 = vpop.f32.mrf.mxu0
        %4845 = vdwg.mxu0
        %4846 = vmatprep.subr.bf16.mxu0 0
        %4847 = vmatpush1.bf16.msra.mxu0 0
        %4848 = vmatprep.subr.bf16.mxu0 0
        %4849 = vmatpush1.bf16.msra.mxu0 0
        %4850 = vmatprep.subr.bf16.mxu0 0
        %4851 = vmatpush1.bf16.msra.mxu0 0
        %4852 = vmatprep.subr.bf16.mxu0 0
        %4853 = vmatpush1.bf16.msra.mxu0 0
        %4854 = vmatprep.subr.bf16.mxu0 0
        %4855 = vmatpush1.bf16.msra.mxu0 0
        %4856 = vmatprep.subr.bf16.mxu0 0
        %4857 = vmatpush1.bf16.msra.mxu0 0
        %4858 = vmatprep.subr.bf16.mxu0 0
        %4859 = vmatpush1.bf16.msra.mxu0 %v4796
        %4860 = vmatprep.subr.bf16.mxu0 0
        %4861 = vmatpush1.bf16.msra.mxu0 %v4793
        %4862 = vmatprep.subr.bf16.mxu0 0
        %4863 = vmatpush2.bf16.msra.mxu0 0
        %4864 = vmatprep.subr.bf16.mxu0 0
        %4865 = vmatpush2.bf16.msra.mxu0 0
        %4866 = vmatprep.subr.bf16.mxu0 0
        %4867 = vmatpush2.bf16.msra.mxu0 0
        %4868 = vmatprep.subr.bf16.mxu0 0
        %4869 = vmatpush2.bf16.msra.mxu0 0
        %4870 = vmatprep.subr.bf16.mxu0 0
        %4871 = vmatpush2.bf16.msra.mxu0 0
        %4872 = vmatprep.subr.bf16.mxu0 0
        %4873 = vmatpush2.bf16.msra.mxu0 0
        %4874 = vmatprep.subr.bf16.mxu0 0
        %4875 = vmatpush2.bf16.msra.mxu0 0
        %4876 = vmatprep.subr.bf16.mxu0 0
        %4877 = vmatpush2.bf16.msra.mxu0 0
        %4878 = vmatprep.mubr.bf16.mxu0 0
        %4879 = vmatmul.mubr.bf16.gmra.mxu0 %v4803
        %v4880 = vpop.f32.mrf.mxu0
        %v4881 = vadd.f32 %v4800, %v4880
        %v4882 = vpop.f32.mrf.mxu0
        %v4883 = vpop.f32.mrf.mxu0
        %v4884 = vpop.f32.mrf.mxu0
        %4885 = vdwg.mxu0
        %v4886 = vadd.f32 %v4840, %v646
        %v4887 = vadd.f32 %v4842, %v647
        %v4888 = vadd.f32 %v4881, %v648
        %4889 = vst [vmem:[%s644] sm:$0xff] %v4886
        %4890 = vst [vmem:[%s644 + $0x8] sm:$0xff] %v4887
        %4891 = vst.msk [vmem:[%s644 + $0x10] sm:$0xff] %vm662, %v4888
        %p4892 = scmp.lt.s32.totalorder %s32, 1
        %s4893 = scalar_select %p4892, %s32, 1
        %s4894 = smul.addr %s4893, 3
        %s4895 = smul.addr %s4894, 8
        %s4896 = scalar_lea.vmem %s20, %s4895
        // Predicated region
        $region105: #{block_forward.1} parent=99 // pred_check
          %p4897 = pneg %p475
        $region106: #{block_forward.1} parent=99 // pred_check_branch
          %4899 = sbr.rel (%p4897) target = $region108
        $region107: #{block_forward.1} parent=99 // pred_region
          _
        $region108: #{block_forward.1} parent=99 // pred_fallthru
          _
      $region100: #{block_forward.1} parent=5 // pred_fallthru
        _
      %p4900 = scmp.le.s32.totalorder 2, %s27
      // Predicated region
      $region109: #{block_forward.1} parent=5 // pred_check
        %p4901 = pneg %p4900
      $region110: #{block_forward.1} parent=5 // pred_check_branch
        %4903 = sbr.rel (%p4901) target = $region112
      $region111: #{block_forward.1} parent=5 // pred_region
        %s4904 = ssub.s32 %s27, 2
        // Predicated region
        $region113: #{block_forward.1} parent=111 // pred_check
          %p4905 = pneg %p481
        $region114: #{block_forward.1} parent=111 // pred_check_branch
          %4907 = sbr.rel (%p4905) target = $region116
        $region115: #{block_forward.1} parent=111 // pred_region
          %p4908 = scmp.lt.s32.totalorder %s33, 1
          %s4909 = scalar_select %p4908, %s33, 1
          %s4910 = smul.addr %s4909, 3
          %s4911 = smul.addr %s4910, 8
          %s4912 = scalar_lea.vmem %s20, %s4911
        $region116: #{block_forward.1} parent=111 // pred_fallthru
          _
      $region112: #{block_forward.1} parent=5 // pred_fallthru
        _
    $region6: #{block_forward.1} parent=1 // loop_footer
      %s31 = sadd.s32 1, %s27
    $region7: #{block_forward.1} parent=1 // loop_footer_branch
      %26 = sbr.rel target = $region3
    $region8: #{block_forward.1} parent=1 // loop_exit
      _
    %4913 = vsyncpa [#allocation3], 1
    %s4914 = scalar_lea.sflag [#allocation3], 1
    %4915 = vsyncpa %s4914, 1

</llo_original>
